<compile_context>
chip_gen: v7x
topology: tpu7x:2x2x1
jax: 0.10.0
libtpu: 0.0.40
codegen_flags: <defaults>
</compile_context>

<pallas_src>
import functools

import jax
import jax.numpy as jnp
from jax.experimental import pallas as pl
from jax.experimental.pallas import tpu as pltpu

BN_EPS = 1e-5
C1, C2, C3 = 1024, 256, 256      # conv1/conv2/conv3 output channels (fixed)
CK = 256                          # chunk width along the C1 hidden dim
N_CHUNKS = C1 // CK               # 4


# ----------------------------------------------------------------------------
# Kernel
# ----------------------------------------------------------------------------
def _rot_green_kernel(x_ref, w1_ref, w2_ref, w3_ref, w4_ref, bias_ref,
                      o_ref, mx_ref, *, bf16_epilogue):
    # grid = (batch b, point-tile t); weights are resident (constant block idx).
    t = pl.program_id(1)

    xb = x_ref[0]                                                  # (TN, F) bf16
    tn = xb.shape[0]

    # conv1 (+ folded BN1) + ReLU, chunked over the 1024-wide hidden dim,
    # fused with conv2's contraction into a single f32 accumulator.
    acc = jnp.zeros((tn, C2), jnp.float32)
    for c in range(N_CHUNKS):                                      # static 4-way
        b1c = bias_ref[0:1, c * CK:(c + 1) * CK]                   # (1, CK) f32
        if bf16_epilogue:
            h1c = jnp.dot(xb, w1_ref[c],
                          preferred_element_type=jnp.bfloat16)     # (TN, CK) bf16
            h1c = jnp.maximum(h1c + b1c.astype(jnp.bfloat16), 0)
        else:
            h1c = jnp.dot(xb, w1_ref[c],
                          preferred_element_type=jnp.float32)      # (TN, CK) f32
            h1c = jnp.maximum(h1c + b1c, 0.0).astype(jnp.bfloat16)
        acc = acc + jnp.dot(h1c, w2_ref[c],
                            preferred_element_type=jnp.float32)    # (TN, C2) f32

    # conv2 (+ folded BN2) + ReLU, then per-tile max over points.
    h2 = jnp.maximum(acc + bias_ref[1:2, :C2], 0.0)                # (TN, 256) f32
    tile_max = jnp.max(h2, axis=0, keepdims=True)                  # (1, 256)

    @pl.when(t == 0)
    def _():
        mx_ref[...] = jnp.full_like(mx_ref, -jnp.inf)

    mx_ref[...] = jnp.maximum(mx_ref[...], tile_max)

    @pl.when(t == pl.num_programs(1) - 1)
    def _():
        pooled = mx_ref[...]                                       # (1, 256) f32
        # conv3 (+ folded BN3) + ReLU
        h3 = jnp.dot(pooled.astype(jnp.bfloat16), w3_ref[...],
                     preferred_element_type=jnp.float32)
        h3 = jnp.maximum(h3 + bias_ref[2:3, :C3], 0.0)             # (1, 256)
        # Dropout(0.2) is identity at inference.
        k = o_ref.shape[-1]
        out = jnp.dot(h3.astype(jnp.bfloat16), w4_ref[...],
                      preferred_element_type=jnp.float32) + bias_ref[3:4, :k]
        o_ref[...] = out.reshape(1, 1, k).astype(o_ref.dtype)


# ----------------------------------------------------------------------------
# Host-side parameter handling
# ----------------------------------------------------------------------------
def init_params(key, feat_c_R, k, dtype=jnp.float32):
    """Deterministic synthetic parameters mirroring the PyTorch module."""
    dims_in = (feat_c_R, C1, C2, C3)
    dims_out = (C1, C2, C3, k)
    params = {}
    for i in range(4):
        fan_in, fan_out = dims_in[i], dims_out[i]
        key, kw, kb = jax.random.split(key, 3)
        bound = 1.0 / float(fan_in) ** 0.5
        params[f"conv{i+1}_w"] = jax.random.uniform(
            kw, (fan_out, fan_in), dtype, -bound, bound)           # PyTorch (out,in)
        params[f"conv{i+1}_b"] = jax.random.uniform(
            kb, (fan_out,), dtype, -bound, bound)
    for i, c in zip((1, 2, 3), (C1, C2, C3)):
        key, kg, kbe, km, kv = jax.random.split(key, 5)
        params[f"bn{i}_gamma"] = jax.random.uniform(kg, (c,), dtype, 0.5, 1.5)
        params[f"bn{i}_beta"] = jax.random.uniform(kbe, (c,), dtype, -0.1, 0.1)
        params[f"bn{i}_mean"] = jax.random.uniform(km, (c,), dtype, -0.1, 0.1)
        params[f"bn{i}_var"] = jax.random.uniform(kv, (c,), dtype, 0.5, 1.5)
    return params


def fold_params(params, k):
    """Fold eval-mode BatchNorm into the 1x1 convs.

    Returns:
      w1c: (N_CHUNKS, F, CK)  bf16  -- conv1 weights, chunked over out-channels
      w2c: (N_CHUNKS, CK, C2) bf16  -- conv2 weights, chunked over in-channels
      w3:  (C2, C3)           bf16
      w4:  (C3, k)            bf16
      slab: (4, C1) f32 bias slab: row0=b1(1024), row1=b2, row2=b3, row3=b4(k)
    """
    ws, bs = [], []
    for i in (1, 2, 3, 4):
        w = params[f"conv{i}_w"].astype(jnp.float32)               # (out, in)
        b = params[f"conv{i}_b"].astype(jnp.float32)               # (out,)
        if i <= 3:
            scale = params[f"bn{i}_gamma"] / jnp.sqrt(params[f"bn{i}_var"] + BN_EPS)
            w = w * scale[:, None]
            b = (b - params[f"bn{i}_mean"]) * scale + params[f"bn{i}_beta"]
        ws.append(w.T)                                             # (in, out)
        bs.append(b)

    F = ws[0].shape[0]
    w1c = ws[0].reshape(F, N_CHUNKS, CK).transpose(1, 0, 2).astype(jnp.bfloat16)
    w2c = ws[1].reshape(N_CHUNKS, CK, C2).astype(jnp.bfloat16)
    w3 = ws[2].astype(jnp.bfloat16)
    w4 = ws[3].astype(jnp.bfloat16)

    slab = jnp.zeros((4, C1), jnp.float32)
    slab = slab.at[0, :C1].set(bs[0])
    slab = slab.at[1, :C2].set(bs[1])
    slab = slab.at[2, :C3].set(bs[2])
    slab = slab.at[3, :k].set(bs[3])
    return (w1c, w2c, w3, w4), slab


# ----------------------------------------------------------------------------
# Per-generation defaults
# ----------------------------------------------------------------------------
def _device_kind():
    try:
        return jax.devices()[0].device_kind.lower()
    except Exception:
        return ""


def default_bf16_epilogue():
    kind = _device_kind()
    return ("v6" in kind) or ("v7" in kind)     # v5e has no bf16 VPU


def default_vmem_limit_bytes():
    kind = _device_kind()
    if "v7" in kind:
        return 48 * 1024 * 1024                  # 64 MiB physical on v7x
    if ("v5" in kind) or ("v6" in kind):
        return 64 * 1024 * 1024                  # 128 MiB physical
    return 32 * 1024 * 1024                      # conservative fallback


# ----------------------------------------------------------------------------
# Pallas wrapper
# ----------------------------------------------------------------------------
def rot_green_forward(x, params, *, tile_n=1024, bf16_epilogue=None,
                      vmem_limit_bytes=None):
    """x: (B, feat_c_R, N) -> (B, k)   (inference forward of Rot_green)."""
    B, F, N = x.shape
    k = params["conv4_w"].shape[0]

    tile_n = min(tile_n, N)
    assert N % tile_n == 0 and tile_n % 8 == 0, (
        "N (number of points) must be a multiple of tile_n, tile_n multiple of 8 "
        "(zero-padding N would require masking padded rows before the max)")

    if bf16_epilogue is None:
        bf16_epilogue = default_bf16_epilogue()
    if vmem_limit_bytes is None:
        vmem_limit_bytes = default_vmem_limit_bytes()

    (w1c, w2c, w3, w4), bias_slab = fold_params(params, k)
    x_bnf = jnp.transpose(x, (0, 2, 1)).astype(jnp.bfloat16)       # (B, N, F)

    grid = (B, N // tile_n)
    const2 = lambda b, t: (0, 0)      # weights / bias slab: resident across grid
    const3 = lambda b, t: (0, 0, 0)

    kernel = functools.partial(_rot_green_kernel, bf16_epilogue=bf16_epilogue)

    out = pl.pallas_call(
        kernel,
        out_shape=jax.ShapeDtypeStruct((B, 1, k), jnp.float32),
        grid_spec=pltpu.PrefetchScalarGridSpec(
            num_scalar_prefetch=0,
            grid=grid,
            in_specs=[
                pl.BlockSpec((1, tile_n, F), lambda b, t: (b, t, 0)),  # x tile
                pl.BlockSpec((N_CHUNKS, F, CK), const3),               # W1 chunks
                pl.BlockSpec((N_CHUNKS, CK, C2), const3),              # W2 chunks
                pl.BlockSpec((C2, C3), const2),                        # W3
                pl.BlockSpec((C3, k), const2),                         # W4
                pl.BlockSpec((4, C1), const2),                         # bias slab
            ],
            out_specs=pl.BlockSpec((1, 1, k), lambda b, t: (b, 0, 0)),
            scratch_shapes=[pltpu.VMEM((1, C2), jnp.float32)],         # running max
        ),
        compiler_params=pltpu.CompilerParams(
            dimension_semantics=("parallel", "arbitrary"),
            vmem_limit_bytes=vmem_limit_bytes,
        ),
    )(x_bnf, w1c, w2c, w3, w4, bias_slab)
    return out.reshape(B, k)


# ----------------------------------------------------------------------------
# References
# ----------------------------------------------------------------------------
def rot_green_reference(x, params):
    """Unfolded fp32 reference with module semantics (eval-mode BN, no dropout)."""
    def conv(h, i):
        w = params[f"conv{i}_w"].astype(jnp.float32)
        b = params[f"conv{i}_b"].astype(jnp.float32)
        return jnp.einsum("oi,bin->bon", w, h) + b[None, :, None]

    def bn(h, i):
        g, be = params[f"bn{i}_gamma"], params[f"bn{i}_beta"]
        m, v = params[f"bn{i}_mean"], params[f"bn{i}_var"]
        return ((h - m[None, :, None]) / jnp.sqrt(v[None, :, None] + BN_EPS)
                * g[None, :, None] + be[None, :, None])

    h = x.astype(jnp.float32)
    h = jax.nn.relu(bn(conv(h, 1), 1))
    h = jax.nn.relu(bn(conv(h, 2), 2))
    h = jnp.max(h, axis=2, keepdims=True)
    h = jax.nn.relu(bn(conv(h, 3), 3))
    h = conv(h, 4)
    return h[:, :, 0]


def rot_green_matched_ref(x, params, *, bf16_epilogue):
    """Same folding / chunking / bf16 precision as the kernel (tight tolerance)."""
    k = params["conv4_w"].shape[0]
    (w1c, w2c, w3, w4), slab = fold_params(params, k)
    h = jnp.transpose(x, (0, 2, 1)).astype(jnp.bfloat16)           # (B, N, F)
    B, N, _ = h.shape

    acc = jnp.zeros((B, N, C2), jnp.float32)
    for c in range(N_CHUNKS):
        b1c = slab[0, c * CK:(c + 1) * CK]
        if bf16_epilogue:
            h1c = jnp.einsum("bnf,fo->bno", h, w1c[c],
                             preferred_element_type=jnp.bfloat16)
            h1c = jnp.maximum(h1c + b1c.astype(jnp.bfloat16), 0)
        else:
            h1c = jnp.einsum("bnf,fo->bno", h, w1c[c],
                             preferred_element_type=jnp.float32)
            h1c = jnp.maximum(h1c + b1c, 0.0).astype(jnp.bfloat16)
        acc = acc + jnp.einsum("bno,oc->bnc", h1c, w2c[c],
                               preferred_element_type=jnp.float32)

    h2 = jnp.maximum(acc + slab[1, :C2], 0.0)
    pooled = jnp.max(h2, axis=1)                                   # (B, 256)
    h3 = jnp.maximum(jnp.dot(pooled.astype(jnp.bfloat16), w3,
                             preferred_element_type=jnp.float32)
                     + slab[2, :C3], 0.0)
    return (jnp.dot(h3.astype(jnp.bfloat16), w4,
                    preferred_element_type=jnp.float32) + slab[3, :k])


# ----------------------------------------------------------------------------
if __name__ == "__main__":
    key = jax.random.PRNGKey(0)
    kx, kp = jax.random.split(key)

    # Small synthetic shapes: B=2 point clouds, feat_c_R=128, N=256 points, R_c=4
    B, F, N, K = 2, 128, 256, 4
    x = jax.random.normal(kx, (B, F, N), jnp.float32)
    params = init_params(kp, F, K)

    bf16_epi = default_bf16_epilogue()

    out = jax.block_until_ready(
        rot_green_forward(x, params, tile_n=1024, bf16_epilogue=bf16_epi))

    ref_exact = rot_green_matched_ref(x, params, bf16_epilogue=bf16_epi)
    ref_module = rot_green_reference(x, params)       # pure fp32 module semantics

    assert out.shape == (B, K), out.shape
    assert jnp.allclose(out, ref_exact, atol=2e-3, rtol=2e-3), float(
        jnp.max(jnp.abs(out - ref_exact)))
    assert jnp.allclose(out, ref_module, atol=1e-1, rtol=1e-1), float(
        jnp.max(jnp.abs(out - ref_module)))
    print("KERNEL_OK")
</pallas_src>

<mosaic_0001>
module attributes {stable_mosaic.version = 11 : i64} {
  func.func @_rot_green_kernel(%arg0: i32, %arg1: i32, %arg2: memref<1x256x128xbf16, #tpu.memory_space<vmem>>, %arg3: memref<4x128x256xbf16, #tpu.memory_space<vmem>>, %arg4: memref<4x256x256xbf16, #tpu.memory_space<vmem>>, %arg5: memref<256x256xbf16, #tpu.memory_space<vmem>>, %arg6: memref<256x4xbf16, #tpu.memory_space<vmem>>, %arg7: memref<4x1024xf32, #tpu.memory_space<vmem>>, %arg8: memref<1x1x4xf32, #tpu.memory_space<vmem>>, %arg9: memref<1x256xf32, #tpu.memory_space<vmem>>) attributes {dimension_semantics = [#tpu.dimension_semantics<parallel>, #tpu.dimension_semantics<arbitrary>], iteration_bounds = array<i64: 2, 1>, scalar_prefetch = 0 : i64, scratch_operands = 1 : i64, tpu.core_type = #tpu.core_type<tc>, window_params = [{transform_indices = @transform_0, window_bounds = array<i64: 1, 256, 128>}, {pipeline_mode = #tpu.pipeline_mode<synchronous>, transform_indices = @transform_1, window_bounds = array<i64: 4, 128, 256>}, {pipeline_mode = #tpu.pipeline_mode<synchronous>, transform_indices = @transform_2, window_bounds = array<i64: 4, 256, 256>}, {pipeline_mode = #tpu.pipeline_mode<synchronous>, transform_indices = @transform_3, window_bounds = array<i64: 256, 256>}, {pipeline_mode = #tpu.pipeline_mode<synchronous>, transform_indices = @transform_4, window_bounds = array<i64: 256, 4>}, {pipeline_mode = #tpu.pipeline_mode<synchronous>, transform_indices = @transform_5, window_bounds = array<i64: 4, 1024>}, {transform_indices = @transform_6, window_bounds = array<i64: 1, 1, 4>}]} {
    %c0 = arith.constant 0 : index
    %c0_0 = arith.constant 0 : index
    %c0_1 = arith.constant 0 : index
    %0 = vector.load %arg2[%c0, %c0_0, %c0_1] : memref<1x256x128xbf16, #tpu.memory_space<vmem>>, vector<1x256x128xbf16>
    %1 = vector.shape_cast %0 : vector<1x256x128xbf16> to vector<256x128xbf16>
    %cst = arith.constant 0.000000e+00 : f32
    %2 = vector.broadcast %cst : f32 to vector<256x256xf32>
    %c0_2 = arith.constant 0 : index
    %c0_3 = arith.constant 0 : index
    %3 = vector.load %arg7[%c0_2, %c0_3] : memref<4x1024xf32, #tpu.memory_space<vmem>>, vector<1x256xf32>
    %c0_4 = arith.constant 0 : index
    %c0_5 = arith.constant 0 : index
    %c0_6 = arith.constant 0 : index
    %4 = vector.load %arg3[%c0_4, %c0_5, %c0_6] : memref<4x128x256xbf16, #tpu.memory_space<vmem>>, vector<1x128x256xbf16>
    %5 = vector.shape_cast %4 : vector<1x128x256xbf16> to vector<128x256xbf16>
    %cst_7 = arith.constant dense<0.000000e+00> : vector<256x256xf32>
    %6 = tpu.matmul %1, %5, %cst_7 {dimension_numbers = #tpu.dot_dimension_numbers<[1], [0], [0], [1], [0, 0, 1, 1], [], []>} : vector<256x128xbf16>, vector<128x256xbf16>, vector<256x256xf32> -> vector<256x256xf32>
    %7 = vector.broadcast %3 : vector<1x256xf32> to vector<256x256xf32>
    %8 = arith.addf %6, %7 : vector<256x256xf32>
    %cst_8 = arith.constant 0.000000e+00 : f32
    %9 = vector.broadcast %cst_8 : f32 to vector<256x256xf32>
    %10 = arith.maximumf %8, %9 : vector<256x256xf32>
    %11 = arith.truncf %10 : vector<256x256xf32> to vector<256x256xbf16>
    %c0_9 = arith.constant 0 : index
    %c0_10 = arith.constant 0 : index
    %c0_11 = arith.constant 0 : index
    %12 = vector.load %arg4[%c0_9, %c0_10, %c0_11] : memref<4x256x256xbf16, #tpu.memory_space<vmem>>, vector<1x256x256xbf16>
    %13 = vector.shape_cast %12 : vector<1x256x256xbf16> to vector<256x256xbf16>
    %cst_12 = arith.constant dense<0.000000e+00> : vector<256x256xf32>
    %14 = tpu.matmul %11, %13, %cst_12 {dimension_numbers = #tpu.dot_dimension_numbers<[1], [0], [0], [1], [0, 0, 1, 1], [], []>} : vector<256x256xbf16>, vector<256x256xbf16>, vector<256x256xf32> -> vector<256x256xf32>
    %15 = arith.addf %2, %14 : vector<256x256xf32>
    %c0_13 = arith.constant 0 : index
    %c256 = arith.constant 256 : index
    %16 = vector.load %arg7[%c0_13, %c256] : memref<4x1024xf32, #tpu.memory_space<vmem>>, vector<1x256xf32>
    %c1 = arith.constant 1 : index
    %c0_14 = arith.constant 0 : index
    %c0_15 = arith.constant 0 : index
    %17 = vector.load %arg3[%c1, %c0_14, %c0_15] : memref<4x128x256xbf16, #tpu.memory_space<vmem>>, vector<1x128x256xbf16>
    %18 = vector.shape_cast %17 : vector<1x128x256xbf16> to vector<128x256xbf16>
    %cst_16 = arith.constant dense<0.000000e+00> : vector<256x256xf32>
    %19 = tpu.matmul %1, %18, %cst_16 {dimension_numbers = #tpu.dot_dimension_numbers<[1], [0], [0], [1], [0, 0, 1, 1], [], []>} : vector<256x128xbf16>, vector<128x256xbf16>, vector<256x256xf32> -> vector<256x256xf32>
    %20 = vector.broadcast %16 : vector<1x256xf32> to vector<256x256xf32>
    %21 = arith.addf %19, %20 : vector<256x256xf32>
    %cst_17 = arith.constant 0.000000e+00 : f32
    %22 = vector.broadcast %cst_17 : f32 to vector<256x256xf32>
    %23 = arith.maximumf %21, %22 : vector<256x256xf32>
    %24 = arith.truncf %23 : vector<256x256xf32> to vector<256x256xbf16>
    %c1_18 = arith.constant 1 : index
    %c0_19 = arith.constant 0 : index
    %c0_20 = arith.constant 0 : index
    %25 = vector.load %arg4[%c1_18, %c0_19, %c0_20] : memref<4x256x256xbf16, #tpu.memory_space<vmem>>, vector<1x256x256xbf16>
    %26 = vector.shape_cast %25 : vector<1x256x256xbf16> to vector<256x256xbf16>
    %cst_21 = arith.constant dense<0.000000e+00> : vector<256x256xf32>
    %27 = tpu.matmul %24, %26, %cst_21 {dimension_numbers = #tpu.dot_dimension_numbers<[1], [0], [0], [1], [0, 0, 1, 1], [], []>} : vector<256x256xbf16>, vector<256x256xbf16>, vector<256x256xf32> -> vector<256x256xf32>
    %28 = arith.addf %15, %27 : vector<256x256xf32>
    %c0_22 = arith.constant 0 : index
    %c512 = arith.constant 512 : index
    %29 = vector.load %arg7[%c0_22, %c512] : memref<4x1024xf32, #tpu.memory_space<vmem>>, vector<1x256xf32>
    %c2 = arith.constant 2 : index
    %c0_23 = arith.constant 0 : index
    %c0_24 = arith.constant 0 : index
    %30 = vector.load %arg3[%c2, %c0_23, %c0_24] : memref<4x128x256xbf16, #tpu.memory_space<vmem>>, vector<1x128x256xbf16>
    %31 = vector.shape_cast %30 : vector<1x128x256xbf16> to vector<128x256xbf16>
    %cst_25 = arith.constant dense<0.000000e+00> : vector<256x256xf32>
    %32 = tpu.matmul %1, %31, %cst_25 {dimension_numbers = #tpu.dot_dimension_numbers<[1], [0], [0], [1], [0, 0, 1, 1], [], []>} : vector<256x128xbf16>, vector<128x256xbf16>, vector<256x256xf32> -> vector<256x256xf32>
    %33 = vector.broadcast %29 : vector<1x256xf32> to vector<256x256xf32>
    %34 = arith.addf %32, %33 : vector<256x256xf32>
    %cst_26 = arith.constant 0.000000e+00 : f32
    %35 = vector.broadcast %cst_26 : f32 to vector<256x256xf32>
    %36 = arith.maximumf %34, %35 : vector<256x256xf32>
    %37 = arith.truncf %36 : vector<256x256xf32> to vector<256x256xbf16>
    %c2_27 = arith.constant 2 : index
    %c0_28 = arith.constant 0 : index
    %c0_29 = arith.constant 0 : index
    %38 = vector.load %arg4[%c2_27, %c0_28, %c0_29] : memref<4x256x256xbf16, #tpu.memory_space<vmem>>, vector<1x256x256xbf16>
    %39 = vector.shape_cast %38 : vector<1x256x256xbf16> to vector<256x256xbf16>
    %cst_30 = arith.constant dense<0.000000e+00> : vector<256x256xf32>
    %40 = tpu.matmul %37, %39, %cst_30 {dimension_numbers = #tpu.dot_dimension_numbers<[1], [0], [0], [1], [0, 0, 1, 1], [], []>} : vector<256x256xbf16>, vector<256x256xbf16>, vector<256x256xf32> -> vector<256x256xf32>
    %41 = arith.addf %28, %40 : vector<256x256xf32>
    %c0_31 = arith.constant 0 : index
    %c768 = arith.constant 768 : index
    %42 = vector.load %arg7[%c0_31, %c768] : memref<4x1024xf32, #tpu.memory_space<vmem>>, vector<1x256xf32>
    %c3 = arith.constant 3 : index
    %c0_32 = arith.constant 0 : index
    %c0_33 = arith.constant 0 : index
    %43 = vector.load %arg3[%c3, %c0_32, %c0_33] : memref<4x128x256xbf16, #tpu.memory_space<vmem>>, vector<1x128x256xbf16>
    %44 = vector.shape_cast %43 : vector<1x128x256xbf16> to vector<128x256xbf16>
    %cst_34 = arith.constant dense<0.000000e+00> : vector<256x256xf32>
    %45 = tpu.matmul %1, %44, %cst_34 {dimension_numbers = #tpu.dot_dimension_numbers<[1], [0], [0], [1], [0, 0, 1, 1], [], []>} : vector<256x128xbf16>, vector<128x256xbf16>, vector<256x256xf32> -> vector<256x256xf32>
    %46 = vector.broadcast %42 : vector<1x256xf32> to vector<256x256xf32>
    %47 = arith.addf %45, %46 : vector<256x256xf32>
    %cst_35 = arith.constant 0.000000e+00 : f32
    %48 = vector.broadcast %cst_35 : f32 to vector<256x256xf32>
    %49 = arith.maximumf %47, %48 : vector<256x256xf32>
    %50 = arith.truncf %49 : vector<256x256xf32> to vector<256x256xbf16>
    %c3_36 = arith.constant 3 : index
    %c0_37 = arith.constant 0 : index
    %c0_38 = arith.constant 0 : index
    %51 = vector.load %arg4[%c3_36, %c0_37, %c0_38] : memref<4x256x256xbf16, #tpu.memory_space<vmem>>, vector<1x256x256xbf16>
    %52 = vector.shape_cast %51 : vector<1x256x256xbf16> to vector<256x256xbf16>
    %cst_39 = arith.constant dense<0.000000e+00> : vector<256x256xf32>
    %53 = tpu.matmul %50, %52, %cst_39 {dimension_numbers = #tpu.dot_dimension_numbers<[1], [0], [0], [1], [0, 0, 1, 1], [], []>} : vector<256x256xbf16>, vector<256x256xbf16>, vector<256x256xf32> -> vector<256x256xf32>
    %54 = arith.addf %41, %53 : vector<256x256xf32>
    %c1_40 = arith.constant 1 : index
    %c0_41 = arith.constant 0 : index
    %55 = vector.load %arg7[%c1_40, %c0_41] : memref<4x1024xf32, #tpu.memory_space<vmem>>, vector<1x256xf32>
    %56 = vector.broadcast %55 : vector<1x256xf32> to vector<256x256xf32>
    %57 = arith.addf %54, %56 : vector<256x256xf32>
    %cst_42 = arith.constant 0.000000e+00 : f32
    %58 = vector.broadcast %cst_42 : f32 to vector<256x256xf32>
    %59 = arith.maximumf %57, %58 : vector<256x256xf32>
    %cst_43 = arith.constant dense<0xFF800000> : vector<256xf32>
    %60 = vector.multi_reduction <maximumf>, %59, %cst_43 [0] : vector<256x256xf32> to vector<256xf32>
    %61 = vector.shape_cast %60 : vector<256xf32> to vector<1x256xf32>
    %c0_i32 = arith.constant 0 : i32
    %62 = arith.cmpi eq, %arg1, %c0_i32 : i32
    %63 = arith.extui %62 : i1 to i32
    %c0_i32_44 = arith.constant 0 : i32
    %64 = arith.cmpi ne, %63, %c0_i32_44 : i32
    scf.if %64 {
      %cst_51 = arith.constant 0xFF800000 : f32
      %71 = vector.broadcast %cst_51 : f32 to vector<1x256xf32>
      %c0_52 = arith.constant 0 : index
      %c0_53 = arith.constant 0 : index
      %72 = vector.load %arg9[%c0_52, %c0_53] : memref<1x256xf32, #tpu.memory_space<vmem>>, vector<1x256xf32>
      tpu.vector_store %arg9[%c0_52, %c0_53], %71 {strides = array<i32>} : memref<1x256xf32, #tpu.memory_space<vmem>>, vector<1x256xf32>,
    } else {
    }
    %c0_45 = arith.constant 0 : index
    %c0_46 = arith.constant 0 : index
    %65 = vector.load %arg9[%c0_45, %c0_46] : memref<1x256xf32, #tpu.memory_space<vmem>>, vector<1x256xf32>
    %66 = arith.maximumf %65, %61 : vector<1x256xf32>
    %c0_47 = arith.constant 0 : index
    %c0_48 = arith.constant 0 : index
    %67 = vector.load %arg9[%c0_47, %c0_48] : memref<1x256xf32, #tpu.memory_space<vmem>>, vector<1x256xf32>
    tpu.vector_store %arg9[%c0_47, %c0_48], %66 {strides = array<i32>} : memref<1x256xf32, #tpu.memory_space<vmem>>, vector<1x256xf32>,
    %c0_i32_49 = arith.constant 0 : i32
    %68 = arith.cmpi eq, %arg1, %c0_i32_49 : i32
    %69 = arith.extui %68 : i1 to i32
    %c0_i32_50 = arith.constant 0 : i32
    %70 = arith.cmpi ne, %69, %c0_i32_50 : i32
    scf.if %70 {
      %c0_51 = arith.constant 0 : index
      %c0_52 = arith.constant 0 : index
      %71 = vector.load %arg9[%c0_51, %c0_52] : memref<1x256xf32, #tpu.memory_space<vmem>>, vector<1x256xf32>
      %72 = arith.truncf %71 : vector<1x256xf32> to vector<1x256xbf16>
      %c0_53 = arith.constant 0 : index
      %c0_54 = arith.constant 0 : index
      %73 = vector.load %arg5[%c0_53, %c0_54] : memref<256x256xbf16, #tpu.memory_space<vmem>>, vector<256x256xbf16>
      %cst_55 = arith.constant dense<0.000000e+00> : vector<1x256xf32>
      %74 = tpu.matmul %72, %73, %cst_55 {dimension_numbers = #tpu.dot_dimension_numbers<[1], [0], [0], [1], [0, 0, 1, 1], [], []>} : vector<1x256xbf16>, vector<256x256xbf16>, vector<1x256xf32> -> vector<1x256xf32>
      %c2_56 = arith.constant 2 : index
      %c0_57 = arith.constant 0 : index
      %75 = vector.load %arg7[%c2_56, %c0_57] : memref<4x1024xf32, #tpu.memory_space<vmem>>, vector<1x256xf32>
      %76 = arith.addf %74, %75 : vector<1x256xf32>
      %cst_58 = arith.constant 0.000000e+00 : f32
      %77 = vector.broadcast %cst_58 : f32 to vector<1x256xf32>
      %78 = arith.maximumf %76, %77 : vector<1x256xf32>
      %79 = arith.truncf %78 : vector<1x256xf32> to vector<1x256xbf16>
      %c0_59 = arith.constant 0 : index
      %c0_60 = arith.constant 0 : index
      %80 = vector.load %arg6[%c0_59, %c0_60] : memref<256x4xbf16, #tpu.memory_space<vmem>>, vector<256x4xbf16>
      %cst_61 = arith.constant dense<0.000000e+00> : vector<1x4xf32>
      %81 = tpu.matmul %79, %80, %cst_61 {dimension_numbers = #tpu.dot_dimension_numbers<[1], [0], [0], [1], [0, 0, 1, 1], [], []>} : vector<1x256xbf16>, vector<256x4xbf16>, vector<1x4xf32> -> vector<1x4xf32>
      %c3_62 = arith.constant 3 : index
      %c0_63 = arith.constant 0 : index
      %82 = vector.load %arg7[%c3_62, %c0_63] : memref<4x1024xf32, #tpu.memory_space<vmem>>, vector<1x4xf32>
      %83 = arith.addf %81, %82 : vector<1x4xf32>
      %84 = vector.shape_cast %83 : vector<1x4xf32> to vector<1x1x4xf32>
      %c0_64 = arith.constant 0 : index
      %c0_65 = arith.constant 0 : index
      %c0_66 = arith.constant 0 : index
      %85 = vector.load %arg8[%c0_64, %c0_65, %c0_66] : memref<1x1x4xf32, #tpu.memory_space<vmem>>, vector<1x1x4xf32>
      tpu.vector_store %arg8[%c0_64, %c0_65, %c0_66], %84 {strides = array<i32>} : memref<1x1x4xf32, #tpu.memory_space<vmem>>, vector<1x1x4xf32>,
    } else {
    }
    return
  }
  func.func @transform_0(%arg0: i32, %arg1: i32) -> (i32, i32, i32) {
    %c0_i32 = arith.constant 0 : i32
    %c0_i32_0 = arith.constant 0 : i32
    return %arg0, %arg1, %c0_i32 : i32, i32, i32
  }
  func.func @transform_1(%arg0: i32, %arg1: i32) -> (i32, i32, i32) {
    %c0_i32 = arith.constant 0 : i32
    %c0_i32_0 = arith.constant 0 : i32
    %c0_i32_1 = arith.constant 0 : i32
    %c0_i32_2 = arith.constant 0 : i32
    return %c0_i32, %c0_i32_0, %c0_i32_1 : i32, i32, i32
  }
  func.func @transform_2(%arg0: i32, %arg1: i32) -> (i32, i32, i32) {
    %c0_i32 = arith.constant 0 : i32
    %c0_i32_0 = arith.constant 0 : i32
    %c0_i32_1 = arith.constant 0 : i32
    %c0_i32_2 = arith.constant 0 : i32
    return %c0_i32, %c0_i32_0, %c0_i32_1 : i32, i32, i32
  }
  func.func @transform_3(%arg0: i32, %arg1: i32) -> (i32, i32) {
    %c0_i32 = arith.constant 0 : i32
    %c0_i32_0 = arith.constant 0 : i32
    %c0_i32_1 = arith.constant 0 : i32
    return %c0_i32, %c0_i32_0 : i32, i32
  }
  func.func @transform_4(%arg0: i32, %arg1: i32) -> (i32, i32) {
    %c0_i32 = arith.constant 0 : i32
    %c0_i32_0 = arith.constant 0 : i32
    %c0_i32_1 = arith.constant 0 : i32
    return %c0_i32, %c0_i32_0 : i32, i32
  }
  func.func @transform_5(%arg0: i32, %arg1: i32) -> (i32, i32) {
    %c0_i32 = arith.constant 0 : i32
    %c0_i32_0 = arith.constant 0 : i32
    %c0_i32_1 = arith.constant 0 : i32
    return %c0_i32, %c0_i32_0 : i32, i32
  }
  func.func @transform_6(%arg0: i32, %arg1: i32) -> (i32, i32, i32) {
    %c0_i32 = arith.constant 0 : i32
    %c0_i32_0 = arith.constant 0 : i32
    %c0_i32_1 = arith.constant 0 : i32
    return %arg0, %c0_i32, %c0_i32_0 : i32, i32, i32
  }
}

</mosaic_0001>

<llo_original>
// kernel: tpu_custom_call.1
$region0: #{tpu_custom_call.1}
  #allocation0 [shape = 'u32[]', space=smem, size = 0x4, offset = 0x4, fixed_abs, tag = 'smem constant byte address 0x4 - core index']
  #allocation1 [shape = 'u32[144,128]{1,0:T(1,128)}', space=vmem, size = 0x12000, scoped, tag = 'internal scratch']
  #allocation2 [shape = 'f32[1,256]{1,0:T(1,128)}', space=vmem, size = 0x400, scoped, tag = 'scratch operand']
  %s0 = inlined_call_operand.hbm [shape: bf16[2,256,128], index: 0, kind: input, shape index: {}]
  %s1 = inlined_call_operand.hbm [shape: bf16[4,128,256], index: 1, kind: input, shape index: {}]
  %s2 = inlined_call_operand.hbm [shape: bf16[4,256,256], index: 2, kind: input, shape index: {}]
  %s3 = inlined_call_operand.hbm [shape: bf16[256,256], index: 3, kind: input, shape index: {}]
  %s4 = inlined_call_operand.vmem [shape: bf16[256,4], index: 4, kind: input, shape index: {}]
  %s5 = inlined_call_operand.vmem [shape: f32[4,1024], index: 5, kind: input, shape index: {}]
  %s6 = inlined_call_operand.hbm [shape: f32[2,1,4], index: 6, kind: output, shape index: {}]
  %s7 = sld [smem:[#allocation0]]
  $region81: #{tpu_custom_call.1} parent=0
    _
  %s9 = ssub.s32 1, %s7
  %s10 = scalar_select 0, %s9, %s7
  $region1: #{tpu_custom_call.1} parent=0
    #allocation3 [shape = 'u8[131072]{0}', space=vmem, size = 0x20000, scoped, tag = 'input window, operand 0']
    #allocation4 [shape = 's32[2]{0}', space=sflag, size = 0x8, scoped, tag = 'scoped memory for tpu_custom_call.1']
    #allocation5 [shape = 's32[2]{0}', space=sflag, size = 0x8, scoped, tag = 'scoped memory for tpu_custom_call.1']
    #allocation6 [shape = 'u8[262144]{0}', space=vmem, size = 0x40000, scoped, tag = 'input window, operand 1, single buffered']
    #allocation7 [shape = 's32[1]{0}', space=sflag, size = 0x4, scoped, tag = 'scoped memory for tpu_custom_call.1']
    #allocation8 [shape = 'u8[524288]{0}', space=vmem, size = 0x80000, scoped, tag = 'input window, operand 2, single buffered']
    #allocation9 [shape = 'u8[131072]{0}', space=vmem, size = 0x20000, scoped, tag = 'input window, operand 3, single buffered']
    #allocation10 [shape = 's32[1]{0}', space=sflag, size = 0x4, scoped, tag = 'scoped memory for tpu_custom_call.1']
    #allocation11 [shape = 'u8[1024]{0}', space=vmem, size = 0x400, scoped, tag = 'output window, operand 0']
    %11 = vsyncpa [#allocation4], 0
    %s12 = scalar_lea.sflag [#allocation4], 1
    %13 = vsyncpa %s12, 0
    %14 = vsyncpa [#allocation7], 0
    %15 = vsyncpa [#allocation10], 0
    %16 = vsyncpa [#allocation5], 0
    %s17 = scalar_lea.sflag [#allocation5], 1
    %18 = vsyncpa %s17, 0
    loop: start=0, step=1, limit=4
    $region2: #{tpu_custom_call.1} parent=1 // loop_pre_header
      _
    $region3: #{tpu_custom_call.1} parent=1 // loop_header
      %s20 = sphi 0, %s24
      %p21 = scmp.ge.s32.totalorder %s20, 4
      %s27 = sphi 0, %s39
      %s28 = sphi 0, %s35
      %s29 = sphi 0, %s27
      %s30 = sphi 0, %s28
      %s31 = sphi 0, %s29
      %s32 = sphi 0, %s30
      %s44 = sphi 0, %s46
      %s47 = sphi 0, %s44
      %s48 = sphi 0, %s47
      %s64 = sphi 0, %s48
      %s68 = sphi 0, %s68
      %s70 = sphi 0, %s68
      %s71 = sphi 0, %s70
      %s85 = sphi 0, %s71
      %s89 = sphi 0, %s89
      %s91 = sphi 0, %s89
      %s92 = sphi 0, %s91
      %s106 = sphi 0, %s92
      %s110 = sphi 0, %s110
      %s112 = sphi 0, %s110
      %s113 = sphi 0, %s112
      %s127 = sphi 0, %s113
      %s131 = sphi 0, %s131
      %s133 = sphi 0, %s131
      %s134 = sphi 0, %s133
      %s148 = sphi 0, %s134
      %s152 = sphi 0, %s152
      %s154 = sphi 0, %s152
      %s155 = sphi 0, %s154
      %s169 = sphi 0, %s155
      %s175 = sphi 0, %s177
      %s178 = sphi 0, %s175
      %s179 = sphi 0, %s178
      %s195 = sphi 0, %s179
    $region4: #{tpu_custom_call.1} parent=1 // loop_header_branch
      %23 = sbr.rel (%p21) target = $region8
    $region5: #{tpu_custom_call.1} parent=1 // loop_body
      %s25 = ssub.s32 %s20, 1
      %s26 = ssub.s32 %s20, 2
      %s33 = sadd.s32 1, %s28
      %p34 = scmp.ge.s32.totalorder %s33, 1
      %s35 = scalar_select %p34, 0, %s33
      %s36 = sadd.s32 1, %s27
      %s37 = scalar_select %p34, %s36, %s27
      %p38 = scmp.ge.s32.totalorder %s37, 2
      %s39 = scalar_select %p38, 0, %s37
      %s40 = ssub.s32 %s27, %s39
      %s41 = ssub.s32 %s28, %s35
      %s42 = sor.u32 %s40, %s41
      %p43 = scmp.eq.s32.totalorder %s42, 0
      %s45 = sadd.s32 %s44, 1
      %s46 = scalar_select %p43, %s44, %s45
      %p49 = pneg %p43
      %p50 = scmp.eq.s32.totalorder %s20, 1
      %p51 = por %p49, %p50
      %p52 = scmp.ne.s32.totalorder %s44, %s47
      %p53 = scmp.eq.s32.totalorder %s20, 0
      %p54 = por %p52, %p53
      %p55 = scmp.ne.s32.totalorder %s44, %s47
      %p56 = scmp.eq.s32.totalorder %s25, 1
      %p57 = por %p55, %p56
      %p58 = scmp.ne.s32.totalorder %s47, %s48
      %p59 = scmp.eq.s32.totalorder %s25, 0
      %p60 = por %p58, %p59
      %p61 = scmp.ne.s32.totalorder %s47, %s48
      %p62 = scmp.eq.s32.totalorder %s26, 1
      %p63 = por %p61, %p62
      %p65 = scmp.ne.s32.totalorder %s48, %s64
      %p66 = scmp.eq.s32.totalorder %s26, 0
      %p67 = por %p65, %p66
      %s69 = sadd.s32 %s68, 1
      %p72 = scmp.eq.s32.totalorder %s20, 1
      %p73 = scmp.ne.s32.totalorder %s68, %s70
      %p74 = scmp.eq.s32.totalorder %s20, 0
      %p75 = por %p73, %p74
      %p76 = scmp.ne.s32.totalorder %s68, %s70
      %p77 = scmp.eq.s32.totalorder %s25, 1
      %p78 = por %p76, %p77
      %p79 = scmp.ne.s32.totalorder %s70, %s71
      %p80 = scmp.eq.s32.totalorder %s25, 0
      %p81 = por %p79, %p80
      %p82 = scmp.ne.s32.totalorder %s70, %s71
      %p83 = scmp.eq.s32.totalorder %s26, 1
      %p84 = por %p82, %p83
      %p86 = scmp.ne.s32.totalorder %s71, %s85
      %p87 = scmp.eq.s32.totalorder %s26, 0
      %p88 = por %p86, %p87
      %s90 = sadd.s32 %s89, 1
      %p93 = scmp.eq.s32.totalorder %s20, 1
      %p94 = scmp.ne.s32.totalorder %s89, %s91
      %p95 = scmp.eq.s32.totalorder %s20, 0
      %p96 = por %p94, %p95
      %p97 = scmp.ne.s32.totalorder %s89, %s91
      %p98 = scmp.eq.s32.totalorder %s25, 1
      %p99 = por %p97, %p98
      %p100 = scmp.ne.s32.totalorder %s91, %s92
      %p101 = scmp.eq.s32.totalorder %s25, 0
      %p102 = por %p100, %p101
      %p103 = scmp.ne.s32.totalorder %s91, %s92
      %p104 = scmp.eq.s32.totalorder %s26, 1
      %p105 = por %p103, %p104
      %p107 = scmp.ne.s32.totalorder %s92, %s106
      %p108 = scmp.eq.s32.totalorder %s26, 0
      %p109 = por %p107, %p108
      %s111 = sadd.s32 %s110, 1
      %p114 = scmp.eq.s32.totalorder %s20, 1
      %p115 = scmp.ne.s32.totalorder %s110, %s112
      %p116 = scmp.eq.s32.totalorder %s20, 0
      %p117 = por %p115, %p116
      %p118 = scmp.ne.s32.totalorder %s110, %s112
      %p119 = scmp.eq.s32.totalorder %s25, 1
      %p120 = por %p118, %p119
      %p121 = scmp.ne.s32.totalorder %s112, %s113
      %p122 = scmp.eq.s32.totalorder %s25, 0
      %p123 = por %p121, %p122
      %p124 = scmp.ne.s32.totalorder %s112, %s113
      %p125 = scmp.eq.s32.totalorder %s26, 1
      %p126 = por %p124, %p125
      %p128 = scmp.ne.s32.totalorder %s113, %s127
      %p129 = scmp.eq.s32.totalorder %s26, 0
      %p130 = por %p128, %p129
      %s132 = sadd.s32 %s131, 1
      %p135 = scmp.eq.s32.totalorder %s20, 1
      %p136 = scmp.ne.s32.totalorder %s131, %s133
      %p137 = scmp.eq.s32.totalorder %s20, 0
      %p138 = por %p136, %p137
      %p139 = scmp.ne.s32.totalorder %s131, %s133
      %p140 = scmp.eq.s32.totalorder %s25, 1
      %p141 = por %p139, %p140
      %p142 = scmp.ne.s32.totalorder %s133, %s134
      %p143 = scmp.eq.s32.totalorder %s25, 0
      %p144 = por %p142, %p143
      %p145 = scmp.ne.s32.totalorder %s133, %s134
      %p146 = scmp.eq.s32.totalorder %s26, 1
      %p147 = por %p145, %p146
      %p149 = scmp.ne.s32.totalorder %s134, %s148
      %p150 = scmp.eq.s32.totalorder %s26, 0
      %p151 = por %p149, %p150
      %s153 = sadd.s32 %s152, 1
      %p156 = scmp.eq.s32.totalorder %s20, 1
      %p157 = scmp.ne.s32.totalorder %s152, %s154
      %p158 = scmp.eq.s32.totalorder %s20, 0
      %p159 = por %p157, %p158
      %p160 = scmp.ne.s32.totalorder %s152, %s154
      %p161 = scmp.eq.s32.totalorder %s25, 1
      %p162 = por %p160, %p161
      %p163 = scmp.ne.s32.totalorder %s154, %s155
      %p164 = scmp.eq.s32.totalorder %s25, 0
      %p165 = por %p163, %p164
      %p166 = scmp.ne.s32.totalorder %s154, %s155
      %p167 = scmp.eq.s32.totalorder %s26, 1
      %p168 = por %p166, %p167
      %p170 = scmp.ne.s32.totalorder %s155, %s169
      %p171 = scmp.eq.s32.totalorder %s26, 0
      %p172 = por %p170, %p171
      %s173 = ssub.s32 %s27, %s39
      %p174 = scmp.eq.s32.totalorder %s173, 0
      %s176 = sadd.s32 %s175, 1
      %s177 = scalar_select %p174, %s175, %s176
      %p180 = pneg %p174
      %p181 = scmp.eq.s32.totalorder %s20, 1
      %p182 = por %p180, %p181
      %p183 = scmp.ne.s32.totalorder %s175, %s178
      %p184 = scmp.eq.s32.totalorder %s20, 0
      %p185 = por %p183, %p184
      %p186 = scmp.ne.s32.totalorder %s175, %s178
      %p187 = scmp.eq.s32.totalorder %s25, 1
      %p188 = por %p186, %p187
      %p189 = scmp.ne.s32.totalorder %s178, %s179
      %p190 = scmp.eq.s32.totalorder %s25, 0
      %p191 = por %p189, %p190
      %p192 = scmp.ne.s32.totalorder %s178, %s179
      %p193 = scmp.eq.s32.totalorder %s26, 1
      %p194 = por %p192, %p193
      %p196 = scmp.ne.s32.totalorder %s179, %s195
      %p197 = scmp.eq.s32.totalorder %s26, 0
      %p198 = por %p196, %p197
      %p199 = scmp.le.s32.totalorder 1, %s20
      %p200 = scmp.lt.s32.totalorder %s20, 3
      %p201 = pnand %p199, %p200
      %p202 = pneg %p201
      // Predicated region
      $region9: #{tpu_custom_call.1} parent=5 // pred_check
        _
      $region10: #{tpu_custom_call.1} parent=5 // pred_check_branch
        %204 = sbr.rel (%p201) target = $region12
      $region11: #{tpu_custom_call.1} parent=5 // pred_region
        %s205 = ssub.s32 %s20, 1
        // Predicated region
        $region13: #{tpu_custom_call.1} parent=11 // pred_check
          %p206 = pneg %p81
        $region14: #{tpu_custom_call.1} parent=11 // pred_check_branch
          %208 = sbr.rel (%p206) target = $region16
        $region15: #{tpu_custom_call.1} parent=11 // pred_region
          %s210 = ssub.s32 8192, 8192
          %211 = vsyncadd [#allocation7], %s210
          %s212 = sshll.u32 [#allocation6], 4
          %s213 = int_to_ptr.vmem [resolvable:$true] %s212
          %218 = dma.hbm_to_vmem [thread:$0]  %s1, 8192, %s213, [#allocation7], 128, 128, 8
        $region16: #{tpu_custom_call.1} parent=11 // pred_fallthru
          _
        // Predicated region
        $region17: #{tpu_custom_call.1} parent=11 // pred_check
          %p219 = pneg %p102
        $region18: #{tpu_custom_call.1} parent=11 // pred_check_branch
          %221 = sbr.rel (%p219) target = $region20
        $region19: #{tpu_custom_call.1} parent=11 // pred_region
          %s223 = ssub.s32 16384, 16384
          %224 = vsyncadd [#allocation7], %s223
          %s225 = sshll.u32 [#allocation8], 4
          %s226 = int_to_ptr.vmem [resolvable:$true] %s225
          %231 = dma.hbm_to_vmem [thread:$0]  %s2, 16384, %s226, [#allocation7], 128, 128, 8
        $region20: #{tpu_custom_call.1} parent=11 // pred_fallthru
          _
        // Predicated region
        $region21: #{tpu_custom_call.1} parent=11 // pred_check
          %p232 = pneg %p123
        $region22: #{tpu_custom_call.1} parent=11 // pred_check_branch
          %234 = sbr.rel (%p232) target = $region24
        $region23: #{tpu_custom_call.1} parent=11 // pred_region
          %s236 = ssub.s32 4096, 4096
          %237 = vsyncadd [#allocation10], %s236
          %s238 = sshll.u32 [#allocation9], 4
          %s239 = int_to_ptr.vmem [resolvable:$true] %s238
          %244 = dma.hbm_to_vmem [thread:$0]  %s3, 4096, %s239, [#allocation10], 128, 128, 8
        $region24: #{tpu_custom_call.1} parent=11 // pred_fallthru
          _
        // Predicated region
        $region25: #{tpu_custom_call.1} parent=11 // pred_check
          %p245 = pneg %p144
        $region26: #{tpu_custom_call.1} parent=11 // pred_check_branch
          %247 = sbr.rel (%p245) target = $region28
        $region27: #{tpu_custom_call.1} parent=11 // pred_region
          _
        $region28: #{tpu_custom_call.1} parent=11 // pred_fallthru
          _
        // Predicated region
        $region29: #{tpu_custom_call.1} parent=11 // pred_check
          %p248 = pneg %p165
        $region30: #{tpu_custom_call.1} parent=11 // pred_check_branch
          %250 = sbr.rel (%p248) target = $region32
        $region31: #{tpu_custom_call.1} parent=11 // pred_region
          _
        $region32: #{tpu_custom_call.1} parent=11 // pred_fallthru
          _
      $region12: #{tpu_custom_call.1} parent=5 // pred_fallthru
        _
      %p251 = scmp.lt.s32.totalorder %s20, 2
      // Predicated region
      $region33: #{tpu_custom_call.1} parent=5 // pred_check
        %p252 = pneg %p251
      $region34: #{tpu_custom_call.1} parent=5 // pred_check_branch
        %254 = sbr.rel (%p252) target = $region36
      $region35: #{tpu_custom_call.1} parent=5 // pred_region
        // Predicated region
        $region37: #{tpu_custom_call.1} parent=35 // pred_check
          %p255 = pneg %p54
        $region38: #{tpu_custom_call.1} parent=35 // pred_check_branch
          %257 = sbr.rel (%p255) target = $region40
        $region39: #{tpu_custom_call.1} parent=35 // pred_region
          %s258 = sand.u32 %s44, 1
          %s259 = scalar_lea.sflag [#allocation4], %s258
          %s260 = sand.u32 %s44, 1
          %s261 = smul.addr %s260, 128
          %s262 = scalar_lea.vmem [#allocation3], %s261
          %s263 = smul.u32 32, %s28
          %s265 = ssub.s32 2048, 2048
          %266 = vsyncadd %s259, %s265
          %s267 = smul.addr %s27, 32
          %s268 = sadd.s32 %s263, %s267
          %s269 = smul.addr %s268, 64
          %s270 = scalar_lea.hbm %s0, %s269
          %s271 = sshll.u32 %s262, 4
          %s272 = int_to_ptr.vmem [resolvable:$true] %s271
          %277 = dma.hbm_to_vmem [thread:$0]  %s270, 2048, %s272, %s259, 64, 64, 4
        $region40: #{tpu_custom_call.1} parent=35 // pred_fallthru
          _
      $region36: #{tpu_custom_call.1} parent=5 // pred_fallthru
        _
      %p278 = scmp.le.s32.totalorder 1, %s20
      %p279 = scmp.lt.s32.totalorder %s20, 3
      %p280 = pnand %p278, %p279
      %p281 = pneg %p280
      // Predicated region
      $region41: #{tpu_custom_call.1} parent=5 // pred_check
        _
      $region42: #{tpu_custom_call.1} parent=5 // pred_check_branch
        %283 = sbr.rel (%p280) target = $region44
      $region43: #{tpu_custom_call.1} parent=5 // pred_region
        %s284 = ssub.s32 %s20, 1
        %s285 = sand.u32 %s47, 1
        %s286 = scalar_lea.sflag [#allocation4], %s285
        %s287 = sand.u32 %s47, 1
        %s288 = smul.addr %s287, 128
        %s289 = scalar_lea.vmem [#allocation3], %s288
        // Predicated region
        $region45: #{tpu_custom_call.1} parent=43 // pred_check
          %p290 = pneg %p60
        $region46: #{tpu_custom_call.1} parent=43 // pred_check_branch
          %292 = sbr.rel (%p290) target = $region48
        $region47: #{tpu_custom_call.1} parent=43 // pred_region
          %293 = dma.done %s286, 2048
        $region48: #{tpu_custom_call.1} parent=43 // pred_fallthru
          _
        // Predicated region
        $region49: #{tpu_custom_call.1} parent=43 // pred_check
          %p294 = pneg %p81
        $region50: #{tpu_custom_call.1} parent=43 // pred_check_branch
          %296 = sbr.rel (%p294) target = $region52
        $region51: #{tpu_custom_call.1} parent=43 // pred_region
          %297 = dma.done [#allocation7], 8192
        $region52: #{tpu_custom_call.1} parent=43 // pred_fallthru
          _
        // Predicated region
        $region53: #{tpu_custom_call.1} parent=43 // pred_check
          %p298 = pneg %p102
        $region54: #{tpu_custom_call.1} parent=43 // pred_check_branch
          %300 = sbr.rel (%p298) target = $region56
        $region55: #{tpu_custom_call.1} parent=43 // pred_region
          %301 = dma.done [#allocation7], 16384
        $region56: #{tpu_custom_call.1} parent=43 // pred_fallthru
          _
        // Predicated region
        $region57: #{tpu_custom_call.1} parent=43 // pred_check
          %p302 = pneg %p123
        $region58: #{tpu_custom_call.1} parent=43 // pred_check_branch
          %304 = sbr.rel (%p302) target = $region60
        $region59: #{tpu_custom_call.1} parent=43 // pred_region
          %305 = dma.done [#allocation10], 4096
        $region60: #{tpu_custom_call.1} parent=43 // pred_fallthru
          _
        %s306 = sand.u32 %s47, 1
        %s307 = scalar_lea.sflag [#allocation4], %s306
        %s308 = sand.u32 %s47, 1
        %s309 = smul.addr %s308, 128
        %s310 = scalar_lea.vmem [#allocation3], %s309
        %p311 = pneg %p60
        %p312 = pneg %p57
        %p313 = pneg %p81
        %p314 = pneg %p78
        %p315 = pneg %p102
        %p316 = pneg %p99
        %p317 = pneg %p123
        %p318 = pneg %p120
        %p319 = pneg %p144
        %p320 = pneg %p141
        %p321 = pneg %p165
        %p322 = pneg %p162
        %p323 = pneg %p191
        %p324 = pneg %p188
        %s325 = sand.u32 %s178, 1
        %s326 = scalar_lea.sflag [#allocation5], %s325
        %s327 = sand.u32 %s178, 1
        %s328 = scalar_lea.vmem [#allocation11], %s327
        %s329 = smul.u32 32, %s30
        %v331 = vld [vmem:[%s289] sm:$0xf]
        %v332 = vld [vmem:[%s289 + $0x4] sm:$0xf]
        %v333 = vld [vmem:[%s289 + $0x8] sm:$0xf]
        %v334 = vld [vmem:[%s289 + $0xc] sm:$0xf]
        %v335 = vld [vmem:[%s289 + $0x10] sm:$0xf]
        %v336 = vld [vmem:[%s289 + $0x14] sm:$0xf]
        %v337 = vld [vmem:[%s289 + $0x18] sm:$0xf]
        %v338 = vld [vmem:[%s289 + $0x1c] sm:$0xf]
        %v339 = vld [vmem:[%s289 + $0x20] sm:$0xf]
        %v340 = vld [vmem:[%s289 + $0x24] sm:$0xf]
        %v341 = vld [vmem:[%s289 + $0x28] sm:$0xf]
        %v342 = vld [vmem:[%s289 + $0x2c] sm:$0xf]
        %v343 = vld [vmem:[%s289 + $0x30] sm:$0xf]
        %v344 = vld [vmem:[%s289 + $0x34] sm:$0xf]
        %v345 = vld [vmem:[%s289 + $0x38] sm:$0xf]
        %v346 = vld [vmem:[%s289 + $0x3c] sm:$0xf]
        %v347 = vld [vmem:[%s289 + $0x40] sm:$0xf]
        %v348 = vld [vmem:[%s289 + $0x44] sm:$0xf]
        %v349 = vld [vmem:[%s289 + $0x48] sm:$0xf]
        %v350 = vld [vmem:[%s289 + $0x4c] sm:$0xf]
        %v351 = vld [vmem:[%s289 + $0x50] sm:$0xf]
        %v352 = vld [vmem:[%s289 + $0x54] sm:$0xf]
        %v353 = vld [vmem:[%s289 + $0x58] sm:$0xf]
        %v354 = vld [vmem:[%s289 + $0x5c] sm:$0xf]
        %v355 = vld [vmem:[%s289 + $0x60] sm:$0xf]
        %v356 = vld [vmem:[%s289 + $0x64] sm:$0xf]
        %v357 = vld [vmem:[%s289 + $0x68] sm:$0xf]
        %v358 = vld [vmem:[%s289 + $0x6c] sm:$0xf]
        %v359 = vld [vmem:[%s289 + $0x70] sm:$0xf]
        %v360 = vld [vmem:[%s289 + $0x74] sm:$0xf]
        %v361 = vld [vmem:[%s289 + $0x78] sm:$0xf]
        %v362 = vld [vmem:[%s289 + $0x7c] sm:$0xf]
        %v363 = vld [vmem:[%s5] ss:$4 sm:$0x3]
        %v364 = vld [vmem:[#allocation6] sm:$0xff]
        %v365 = vld [vmem:[#allocation6 + $0x8] sm:$0xff]
        %v366 = vld [vmem:[#allocation6 + $0x10] sm:$0xff]
        %v367 = vld [vmem:[#allocation6 + $0x18] sm:$0xff]
        %v368 = vld [vmem:[#allocation6 + $0x20] sm:$0xff]
        %v369 = vld [vmem:[#allocation6 + $0x28] sm:$0xff]
        %v370 = vld [vmem:[#allocation6 + $0x30] sm:$0xff]
        %v371 = vld [vmem:[#allocation6 + $0x38] sm:$0xff]
        %v372 = vld [vmem:[#allocation6 + $0x40] sm:$0xff]
        %v373 = vld [vmem:[#allocation6 + $0x48] sm:$0xff]
        %v374 = vld [vmem:[#allocation6 + $0x50] sm:$0xff]
        %v375 = vld [vmem:[#allocation6 + $0x58] sm:$0xff]
        %v376 = vld [vmem:[#allocation6 + $0x60] sm:$0xff]
        %v377 = vld [vmem:[#allocation6 + $0x68] sm:$0xff]
        %v378 = vld [vmem:[#allocation6 + $0x70] sm:$0xff]
        %v379 = vld [vmem:[#allocation6 + $0x78] sm:$0xff]
        %v381 = vlaneseq
        %v382 = vshrl.u32 %v381, 7
        %v383 = vsub.s32 0, %v382
        %v384 = vrot.slane %v363, %v383
        %v385 = vlaneseq
        %v386 = vshrl.u32 %v385, 7
        %v387 = vsub.s32 1, %v386
        %v388 = vrot.slane %v363, %v387
        %v423 = vunpack.c.l.b16 %v331
        %v424 = vunpack.c.l.b16 %v332
        %v425 = vunpack.c.l.b16 %v333
        %v426 = vunpack.c.l.b16 %v334
        %v427 = vunpack.c.l.b16 %v335
        %v428 = vunpack.c.l.b16 %v336
        %v429 = vunpack.c.l.b16 %v337
        %v430 = vunpack.c.l.b16 %v338
        %v431 = vunpack.c.l.b16 %v339
        %v432 = vunpack.c.l.b16 %v340
        %v433 = vunpack.c.l.b16 %v341
        %v434 = vunpack.c.l.b16 %v342
        %v435 = vunpack.c.l.b16 %v343
        %v436 = vunpack.c.l.b16 %v344
        %v437 = vunpack.c.l.b16 %v345
        %v438 = vunpack.c.l.b16 %v346
        %v439 = vunpack.c.l.b16 %v347
        %v440 = vunpack.c.l.b16 %v348
        %v441 = vunpack.c.l.b16 %v349
        %v442 = vunpack.c.l.b16 %v350
        %v443 = vunpack.c.l.b16 %v351
        %v444 = vunpack.c.l.b16 %v352
        %v445 = vunpack.c.l.b16 %v353
        %v446 = vunpack.c.l.b16 %v354
        %v447 = vunpack.c.l.b16 %v355
        %v448 = vunpack.c.l.b16 %v356
        %v449 = vunpack.c.l.b16 %v357
        %v450 = vunpack.c.l.b16 %v358
        %v451 = vunpack.c.l.b16 %v359
        %v452 = vunpack.c.l.b16 %v360
        %v453 = vunpack.c.l.b16 %v361
        %v454 = vunpack.c.l.b16 %v362
        %v455 = vpack.c.b16 %v424, %v423
        %v456 = vpack.c.b16 %v426, %v425
        %v457 = vpack.c.b16 %v428, %v427
        %v458 = vpack.c.b16 %v430, %v429
        %v459 = vpack.c.b16 %v432, %v431
        %v460 = vpack.c.b16 %v434, %v433
        %v461 = vpack.c.b16 %v436, %v435
        %v462 = vpack.c.b16 %v438, %v437
        %v463 = vpack.c.b16 %v440, %v439
        %v464 = vpack.c.b16 %v442, %v441
        %v465 = vpack.c.b16 %v444, %v443
        %v466 = vpack.c.b16 %v446, %v445
        %v467 = vpack.c.b16 %v448, %v447
        %v468 = vpack.c.b16 %v450, %v449
        %v469 = vpack.c.b16 %v452, %v451
        %v470 = vpack.c.b16 %v454, %v453
        %v503 = vunpack.c.l.b16 %v364
        %v504 = vunpack.c.h.b16 %v364
        %v505 = vunpack.c.l.b16 %v365
        %v506 = vunpack.c.h.b16 %v365
        %v507 = vunpack.c.l.b16 %v366
        %v508 = vunpack.c.h.b16 %v366
        %v509 = vunpack.c.l.b16 %v367
        %v510 = vunpack.c.h.b16 %v367
        %v511 = vunpack.c.l.b16 %v368
        %v512 = vunpack.c.h.b16 %v368
        %v513 = vunpack.c.l.b16 %v369
        %v514 = vunpack.c.h.b16 %v369
        %v515 = vunpack.c.l.b16 %v370
        %v516 = vunpack.c.h.b16 %v370
        %v517 = vunpack.c.l.b16 %v371
        %v518 = vunpack.c.h.b16 %v371
        %v519 = vunpack.c.l.b16 %v372
        %v520 = vunpack.c.h.b16 %v372
        %v521 = vunpack.c.l.b16 %v373
        %v522 = vunpack.c.h.b16 %v373
        %v523 = vunpack.c.l.b16 %v374
        %v524 = vunpack.c.h.b16 %v374
        %v525 = vunpack.c.l.b16 %v375
        %v526 = vunpack.c.h.b16 %v375
        %v527 = vunpack.c.l.b16 %v376
        %v528 = vunpack.c.h.b16 %v376
        %v529 = vunpack.c.l.b16 %v377
        %v530 = vunpack.c.h.b16 %v377
        %v531 = vunpack.c.l.b16 %v378
        %v532 = vunpack.c.h.b16 %v378
        %v533 = vunpack.c.l.b16 %v379
        %v534 = vunpack.c.h.b16 %v379
        %v535 = vpack.c.b16 %v505, %v503
        %v536 = vpack.c.b16 %v506, %v504
        %v537 = vpack.c.b16 %v509, %v507
        %v538 = vpack.c.b16 %v510, %v508
        %v539 = vpack.c.b16 %v513, %v511
        %v540 = vpack.c.b16 %v514, %v512
        %v541 = vpack.c.b16 %v517, %v515
        %v542 = vpack.c.b16 %v518, %v516
        %v543 = vpack.c.b16 %v521, %v519
        %v544 = vpack.c.b16 %v522, %v520
        %v545 = vpack.c.b16 %v525, %v523
        %v546 = vpack.c.b16 %v526, %v524
        %v547 = vpack.c.b16 %v529, %v527
        %v548 = vpack.c.b16 %v530, %v528
        %v549 = vpack.c.b16 %v533, %v531
        %v550 = vpack.c.b16 %v534, %v532
        %567 = vmatprep.subr.bf16.mxu0 %v536
        %568 = vmatpush1.bf16.msra.mxu0 %v535
        %569 = vmatprep.subr.bf16.mxu0 %v538
        %570 = vmatpush1.bf16.msra.mxu0 %v537
        %571 = vmatprep.subr.bf16.mxu0 %v540
        %572 = vmatpush1.bf16.msra.mxu0 %v539
        %573 = vmatprep.subr.bf16.mxu0 %v542
        %574 = vmatpush1.bf16.msra.mxu0 %v541
        %575 = vmatprep.subr.bf16.mxu0 %v544
        %576 = vmatpush1.bf16.msra.mxu0 %v543
        %577 = vmatprep.subr.bf16.mxu0 %v546
        %578 = vmatpush1.bf16.msra.mxu0 %v545
        %579 = vmatprep.subr.bf16.mxu0 %v548
        %580 = vmatpush1.bf16.msra.mxu0 %v547
        %581 = vmatprep.subr.bf16.mxu0 %v550
        %582 = vmatpush1.bf16.msra.mxu0 %v549
        %583 = vmatprep.subr.bf16.mxu0 0
        %584 = vmatpush1.bf16.msra.mxu0 0
        %585 = vmatprep.subr.bf16.mxu0 0
        %586 = vmatpush1.bf16.msra.mxu0 0
        %587 = vmatprep.subr.bf16.mxu0 0
        %588 = vmatpush1.bf16.msra.mxu0 0
        %589 = vmatprep.subr.bf16.mxu0 0
        %590 = vmatpush1.bf16.msra.mxu0 0
        %591 = vmatprep.subr.bf16.mxu0 0
        %592 = vmatpush1.bf16.msra.mxu0 0
        %593 = vmatprep.subr.bf16.mxu0 0
        %594 = vmatpush1.bf16.msra.mxu0 0
        %595 = vmatprep.subr.bf16.mxu0 0
        %596 = vmatpush1.bf16.msra.mxu0 0
        %597 = vmatprep.subr.bf16.mxu0 0
        %598 = vmatpush1.bf16.msra.mxu0 0
        %599 = vmatprep.mubr.bf16.mxu0 0
        %600 = vmatmul.mubr.bf16.gmra.mrb[0].mxu0 %v455
        %v601 = vpop.f32.mrb[0].mxu0
        %v602 = vadd.f32 %v384, %v601
        %v603 = vpop.f32.mrb[0].mxu0
        %v604 = vadd.f32 %v388, %v603
        %v605 = vpop.f32.mrb[0].mxu0
        %v606 = vadd.f32 %v384, %v605
        %v607 = vpop.f32.mrb[0].mxu0
        %v608 = vadd.f32 %v388, %v607
        %609 = vmatprep.mubr.bf16.mxu0 0
        %610 = vmatmul.mubr.bf16.gmra.mrb[0].mxu0 %v456
        %v611 = vpop.f32.mrb[0].mxu0
        %v612 = vadd.f32 %v384, %v611
        %v613 = vpop.f32.mrb[0].mxu0
        %v614 = vadd.f32 %v388, %v613
        %v615 = vpop.f32.mrb[0].mxu0
        %v616 = vadd.f32 %v384, %v615
        %v617 = vpop.f32.mrb[0].mxu0
        %v618 = vadd.f32 %v388, %v617
        %619 = vmatprep.mubr.bf16.mxu0 0
        %620 = vmatmul.mubr.bf16.gmra.mrb[0].mxu0 %v457
        %v621 = vpop.f32.mrb[0].mxu0
        %v622 = vadd.f32 %v384, %v621
        %v623 = vpop.f32.mrb[0].mxu0
        %v624 = vadd.f32 %v388, %v623
        %v625 = vpop.f32.mrb[0].mxu0
        %v626 = vadd.f32 %v384, %v625
        %v627 = vpop.f32.mrb[0].mxu0
        %v628 = vadd.f32 %v388, %v627
        %629 = vmatprep.mubr.bf16.mxu0 0
        %630 = vmatmul.mubr.bf16.gmra.mrb[0].mxu0 %v458
        %v631 = vpop.f32.mrb[0].mxu0
        %v632 = vadd.f32 %v384, %v631
        %v633 = vpop.f32.mrb[0].mxu0
        %v634 = vadd.f32 %v388, %v633
        %v635 = vpop.f32.mrb[0].mxu0
        %v636 = vadd.f32 %v384, %v635
        %v637 = vpop.f32.mrb[0].mxu0
        %v638 = vadd.f32 %v388, %v637
        %639 = vmatprep.mubr.bf16.mxu0 0
        %640 = vmatmul.mubr.bf16.gmra.mrb[0].mxu0 %v459
        %v641 = vpop.f32.mrb[0].mxu0
        %v642 = vadd.f32 %v384, %v641
        %v643 = vpop.f32.mrb[0].mxu0
        %v644 = vadd.f32 %v388, %v643
        %v645 = vpop.f32.mrb[0].mxu0
        %v646 = vadd.f32 %v384, %v645
        %v647 = vpop.f32.mrb[0].mxu0
        %v648 = vadd.f32 %v388, %v647
        %649 = vmatprep.mubr.bf16.mxu0 0
        %650 = vmatmul.mubr.bf16.gmra.mrb[0].mxu0 %v460
        %v651 = vpop.f32.mrb[0].mxu0
        %v652 = vadd.f32 %v384, %v651
        %v653 = vpop.f32.mrb[0].mxu0
        %v654 = vadd.f32 %v388, %v653
        %v655 = vpop.f32.mrb[0].mxu0
        %v656 = vadd.f32 %v384, %v655
        %v657 = vpop.f32.mrb[0].mxu0
        %v658 = vadd.f32 %v388, %v657
        %659 = vmatprep.mubr.bf16.mxu0 0
        %660 = vmatmul.mubr.bf16.gmra.mrb[0].mxu0 %v461
        %v661 = vpop.f32.mrb[0].mxu0
        %v662 = vadd.f32 %v384, %v661
        %v663 = vpop.f32.mrb[0].mxu0
        %v664 = vadd.f32 %v388, %v663
        %v665 = vpop.f32.mrb[0].mxu0
        %v666 = vadd.f32 %v384, %v665
        %v667 = vpop.f32.mrb[0].mxu0
        %v668 = vadd.f32 %v388, %v667
        %669 = vmatprep.mubr.bf16.mxu0 0
        %670 = vmatmul.mubr.bf16.gmra.mrb[0].mxu0 %v462
        %v671 = vpop.f32.mrb[0].mxu0
        %v672 = vadd.f32 %v384, %v671
        %v673 = vpop.f32.mrb[0].mxu0
        %v674 = vadd.f32 %v388, %v673
        %v675 = vpop.f32.mrb[0].mxu0
        %v676 = vadd.f32 %v384, %v675
        %v677 = vpop.f32.mrb[0].mxu0
        %v678 = vadd.f32 %v388, %v677
        %679 = vmatprep.mubr.bf16.mxu0 0
        %680 = vmatmul.mubr.bf16.gmra.mrb[0].mxu0 %v463
        %v681 = vpop.f32.mrb[0].mxu0
        %v682 = vadd.f32 %v384, %v681
        %v683 = vpop.f32.mrb[0].mxu0
        %v684 = vadd.f32 %v388, %v683
        %v685 = vpop.f32.mrb[0].mxu0
        %v686 = vadd.f32 %v384, %v685
        %v687 = vpop.f32.mrb[0].mxu0
        %v688 = vadd.f32 %v388, %v687
        %689 = vmatprep.mubr.bf16.mxu0 0
        %690 = vmatmul.mubr.bf16.gmra.mrb[0].mxu0 %v464
        %v691 = vpop.f32.mrb[0].mxu0
        %v692 = vadd.f32 %v384, %v691
        %v693 = vpop.f32.mrb[0].mxu0
        %v694 = vadd.f32 %v388, %v693
        %v695 = vpop.f32.mrb[0].mxu0
        %v696 = vadd.f32 %v384, %v695
        %v697 = vpop.f32.mrb[0].mxu0
        %v698 = vadd.f32 %v388, %v697
        %699 = vmatprep.mubr.bf16.mxu0 0
        %700 = vmatmul.mubr.bf16.gmra.mrb[0].mxu0 %v465
        %v701 = vpop.f32.mrb[0].mxu0
        %v702 = vadd.f32 %v384, %v701
        %v703 = vpop.f32.mrb[0].mxu0
        %v704 = vadd.f32 %v388, %v703
        %v705 = vpop.f32.mrb[0].mxu0
        %v706 = vadd.f32 %v384, %v705
        %v707 = vpop.f32.mrb[0].mxu0
        %v708 = vadd.f32 %v388, %v707
        %709 = vmatprep.mubr.bf16.mxu0 0
        %710 = vmatmul.mubr.bf16.gmra.mrb[0].mxu0 %v466
        %v711 = vpop.f32.mrb[0].mxu0
        %v712 = vadd.f32 %v384, %v711
        %v713 = vpop.f32.mrb[0].mxu0
        %v714 = vadd.f32 %v388, %v713
        %v715 = vpop.f32.mrb[0].mxu0
        %v716 = vadd.f32 %v384, %v715
        %v717 = vpop.f32.mrb[0].mxu0
        %v718 = vadd.f32 %v388, %v717
        %719 = vmatprep.mubr.bf16.mxu0 0
        %720 = vmatmul.mubr.bf16.gmra.mrb[0].mxu0 %v467
        %v721 = vpop.f32.mrb[0].mxu0
        %v722 = vadd.f32 %v384, %v721
        %v723 = vpop.f32.mrb[0].mxu0
        %v724 = vadd.f32 %v388, %v723
        %v725 = vpop.f32.mrb[0].mxu0
        %v726 = vadd.f32 %v384, %v725
        %v727 = vpop.f32.mrb[0].mxu0
        %v728 = vadd.f32 %v388, %v727
        %729 = vmatprep.mubr.bf16.mxu0 0
        %730 = vmatmul.mubr.bf16.gmra.mrb[0].mxu0 %v468
        %v731 = vpop.f32.mrb[0].mxu0
        %v732 = vadd.f32 %v384, %v731
        %v733 = vpop.f32.mrb[0].mxu0
        %v734 = vadd.f32 %v388, %v733
        %v735 = vpop.f32.mrb[0].mxu0
        %v736 = vadd.f32 %v384, %v735
        %v737 = vpop.f32.mrb[0].mxu0
        %v738 = vadd.f32 %v388, %v737
        %739 = vmatprep.mubr.bf16.mxu0 0
        %740 = vmatmul.mubr.bf16.gmra.mrb[0].mxu0 %v469
        %v741 = vpop.f32.mrb[0].mxu0
        %v742 = vadd.f32 %v384, %v741
        %v743 = vpop.f32.mrb[0].mxu0
        %v744 = vadd.f32 %v388, %v743
        %v745 = vpop.f32.mrb[0].mxu0
        %v746 = vadd.f32 %v384, %v745
        %v747 = vpop.f32.mrb[0].mxu0
        %v748 = vadd.f32 %v388, %v747
        %749 = vmatprep.mubr.bf16.mxu0 0
        %750 = vmatmul.mubr.bf16.gmra.mrb[0].mxu0 %v470
        %v751 = vpop.f32.mrb[0].mxu0
        %v752 = vadd.f32 %v384, %v751
        %v753 = vpop.f32.mrb[0].mxu0
        %v754 = vadd.f32 %v388, %v753
        %v755 = vpop.f32.mrb[0].mxu0
        %v756 = vadd.f32 %v384, %v755
        %v757 = vpop.f32.mrb[0].mxu0
        %v758 = vadd.f32 %v388, %v757
        %759 = vdwg.mxu0
        %v760 = vmax.f32 %v602, 0.0
        %v761 = vmax.f32 %v604, 0.0
        %v762 = vmax.f32 %v606, 0.0
        %v763 = vmax.f32 %v608, 0.0
        %v764 = vmax.f32 %v612, 0.0
        %v765 = vmax.f32 %v614, 0.0
        %v766 = vmax.f32 %v616, 0.0
        %v767 = vmax.f32 %v618, 0.0
        %v768 = vmax.f32 %v622, 0.0
        %v769 = vmax.f32 %v624, 0.0
        %v770 = vmax.f32 %v626, 0.0
        %v771 = vmax.f32 %v628, 0.0
        %v772 = vmax.f32 %v632, 0.0
        %v773 = vmax.f32 %v634, 0.0
        %v774 = vmax.f32 %v636, 0.0
        %v775 = vmax.f32 %v638, 0.0
        %v776 = vmax.f32 %v642, 0.0
        %v777 = vmax.f32 %v644, 0.0
        %v778 = vmax.f32 %v646, 0.0
        %v779 = vmax.f32 %v648, 0.0
        %v780 = vmax.f32 %v652, 0.0
        %v781 = vmax.f32 %v654, 0.0
        %v782 = vmax.f32 %v656, 0.0
        %v783 = vmax.f32 %v658, 0.0
        %v784 = vmax.f32 %v662, 0.0
        %v785 = vmax.f32 %v664, 0.0
        %v786 = vmax.f32 %v666, 0.0
        %v787 = vmax.f32 %v668, 0.0
        %v788 = vmax.f32 %v672, 0.0
        %v789 = vmax.f32 %v674, 0.0
        %v790 = vmax.f32 %v676, 0.0
        %v791 = vmax.f32 %v678, 0.0
        %v792 = vmax.f32 %v682, 0.0
        %v793 = vmax.f32 %v684, 0.0
        %v794 = vmax.f32 %v686, 0.0
        %v795 = vmax.f32 %v688, 0.0
        %v796 = vmax.f32 %v692, 0.0
        %v797 = vmax.f32 %v694, 0.0
        %v798 = vmax.f32 %v696, 0.0
        %v799 = vmax.f32 %v698, 0.0
        %v800 = vmax.f32 %v702, 0.0
        %v801 = vmax.f32 %v704, 0.0
        %v802 = vmax.f32 %v706, 0.0
        %v803 = vmax.f32 %v708, 0.0
        %v804 = vmax.f32 %v712, 0.0
        %v805 = vmax.f32 %v714, 0.0
        %v806 = vmax.f32 %v716, 0.0
        %v807 = vmax.f32 %v718, 0.0
        %v808 = vmax.f32 %v722, 0.0
        %v809 = vmax.f32 %v724, 0.0
        %v810 = vmax.f32 %v726, 0.0
        %v811 = vmax.f32 %v728, 0.0
        %v812 = vmax.f32 %v732, 0.0
        %v813 = vmax.f32 %v734, 0.0
        %v814 = vmax.f32 %v736, 0.0
        %v815 = vmax.f32 %v738, 0.0
        %v816 = vmax.f32 %v742, 0.0
        %v817 = vmax.f32 %v744, 0.0
        %v818 = vmax.f32 %v746, 0.0
        %v819 = vmax.f32 %v748, 0.0
        %v820 = vmax.f32 %v752, 0.0
        %v821 = vmax.f32 %v754, 0.0
        %v822 = vmax.f32 %v756, 0.0
        %v823 = vmax.f32 %v758, 0.0
        %v824 = vpack.c.bf16 %v762, %v760
        %v825 = vpack.c.bf16 %v763, %v761
        %v826 = vpack.c.bf16 %v766, %v764
        %v827 = vpack.c.bf16 %v767, %v765
        %v828 = vpack.c.bf16 %v770, %v768
        %v829 = vpack.c.bf16 %v771, %v769
        %v830 = vpack.c.bf16 %v774, %v772
        %v831 = vpack.c.bf16 %v775, %v773
        %v832 = vpack.c.bf16 %v778, %v776
        %v833 = vpack.c.bf16 %v779, %v777
        %v834 = vpack.c.bf16 %v782, %v780
        %v835 = vpack.c.bf16 %v783, %v781
        %v836 = vpack.c.bf16 %v786, %v784
        %v837 = vpack.c.bf16 %v787, %v785
        %v838 = vpack.c.bf16 %v790, %v788
        %v839 = vpack.c.bf16 %v791, %v789
        %v840 = vpack.c.bf16 %v794, %v792
        %v841 = vpack.c.bf16 %v795, %v793
        %v842 = vpack.c.bf16 %v798, %v796
        %v843 = vpack.c.bf16 %v799, %v797
        %v844 = vpack.c.bf16 %v802, %v800
        %v845 = vpack.c.bf16 %v803, %v801
        %v846 = vpack.c.bf16 %v806, %v804
        %v847 = vpack.c.bf16 %v807, %v805
        %v848 = vpack.c.bf16 %v810, %v808
        %v849 = vpack.c.bf16 %v811, %v809
        %v850 = vpack.c.bf16 %v814, %v812
        %v851 = vpack.c.bf16 %v815, %v813
        %v852 = vpack.c.bf16 %v818, %v816
        %v853 = vpack.c.bf16 %v819, %v817
        %v854 = vpack.c.bf16 %v822, %v820
        %v855 = vpack.c.bf16 %v823, %v821
        %v856 = vld [vmem:[#allocation8] sm:$0xff]
        %v857 = vld [vmem:[#allocation8 + $0x8] sm:$0xff]
        %v858 = vld [vmem:[#allocation8 + $0x10] sm:$0xff]
        %v859 = vld [vmem:[#allocation8 + $0x18] sm:$0xff]
        %v860 = vld [vmem:[#allocation8 + $0x20] sm:$0xff]
        %v861 = vld [vmem:[#allocation8 + $0x28] sm:$0xff]
        %v862 = vld [vmem:[#allocation8 + $0x30] sm:$0xff]
        %v863 = vld [vmem:[#allocation8 + $0x38] sm:$0xff]
        %v864 = vld [vmem:[#allocation8 + $0x40] sm:$0xff]
        %v865 = vld [vmem:[#allocation8 + $0x48] sm:$0xff]
        %v866 = vld [vmem:[#allocation8 + $0x50] sm:$0xff]
        %v867 = vld [vmem:[#allocation8 + $0x58] sm:$0xff]
        %v868 = vld [vmem:[#allocation8 + $0x60] sm:$0xff]
        %v869 = vld [vmem:[#allocation8 + $0x68] sm:$0xff]
        %v870 = vld [vmem:[#allocation8 + $0x70] sm:$0xff]
        %v871 = vld [vmem:[#allocation8 + $0x78] sm:$0xff]
        %v872 = vld [vmem:[#allocation8 + $0x80] sm:$0xff]
        %v873 = vld [vmem:[#allocation8 + $0x88] sm:$0xff]
        %v874 = vld [vmem:[#allocation8 + $0x90] sm:$0xff]
        %v875 = vld [vmem:[#allocation8 + $0x98] sm:$0xff]
        %v876 = vld [vmem:[#allocation8 + $0xa0] sm:$0xff]
        %v877 = vld [vmem:[#allocation8 + $0xa8] sm:$0xff]
        %v878 = vld [vmem:[#allocation8 + $0xb0] sm:$0xff]
        %v879 = vld [vmem:[#allocation8 + $0xb8] sm:$0xff]
        %v880 = vld [vmem:[#allocation8 + $0xc0] sm:$0xff]
        %v881 = vld [vmem:[#allocation8 + $0xc8] sm:$0xff]
        %v882 = vld [vmem:[#allocation8 + $0xd0] sm:$0xff]
        %v883 = vld [vmem:[#allocation8 + $0xd8] sm:$0xff]
        %v884 = vld [vmem:[#allocation8 + $0xe0] sm:$0xff]
        %v885 = vld [vmem:[#allocation8 + $0xe8] sm:$0xff]
        %v886 = vld [vmem:[#allocation8 + $0xf0] sm:$0xff]
        %v887 = vld [vmem:[#allocation8 + $0xf8] sm:$0xff]
        %s888 = scalar_lea.vmem %s5, 8
        %v889 = vld [vmem:[%s888] ss:$4 sm:$0x3]
        %s890 = scalar_lea.vmem [#allocation6], 128
        %v891 = vld [vmem:[%s890] sm:$0xff]
        %v892 = vld [vmem:[%s890 + $0x8] sm:$0xff]
        %v893 = vld [vmem:[%s890 + $0x10] sm:$0xff]
        %v894 = vld [vmem:[%s890 + $0x18] sm:$0xff]
        %v895 = vld [vmem:[%s890 + $0x20] sm:$0xff]
        %v896 = vld [vmem:[%s890 + $0x28] sm:$0xff]
        %v897 = vld [vmem:[%s890 + $0x30] sm:$0xff]
        %v898 = vld [vmem:[%s890 + $0x38] sm:$0xff]
        %v899 = vld [vmem:[%s890 + $0x40] sm:$0xff]
        %v900 = vld [vmem:[%s890 + $0x48] sm:$0xff]
        %v901 = vld [vmem:[%s890 + $0x50] sm:$0xff]
        %v902 = vld [vmem:[%s890 + $0x58] sm:$0xff]
        %v903 = vld [vmem:[%s890 + $0x60] sm:$0xff]
        %v904 = vld [vmem:[%s890 + $0x68] sm:$0xff]
        %v905 = vld [vmem:[%s890 + $0x70] sm:$0xff]
        %v906 = vld [vmem:[%s890 + $0x78] sm:$0xff]
        %v908 = vlaneseq
        %v909 = vshrl.u32 %v908, 7
        %v910 = vsub.s32 0, %v909
        %v911 = vrot.slane %v889, %v910
        %v912 = vlaneseq
        %v913 = vshrl.u32 %v912, 7
        %v914 = vsub.s32 1, %v913
        %v915 = vrot.slane %v889, %v914
        %v934 = vunpack.c.l.b16 %v891
        %v935 = vunpack.c.h.b16 %v891
        %v936 = vunpack.c.l.b16 %v892
        %v937 = vunpack.c.h.b16 %v892
        %v938 = vunpack.c.l.b16 %v893
        %v939 = vunpack.c.h.b16 %v893
        %v940 = vunpack.c.l.b16 %v894
        %v941 = vunpack.c.h.b16 %v894
        %v942 = vunpack.c.l.b16 %v895
        %v943 = vunpack.c.h.b16 %v895
        %v944 = vunpack.c.l.b16 %v896
        %v945 = vunpack.c.h.b16 %v896
        %v946 = vunpack.c.l.b16 %v897
        %v947 = vunpack.c.h.b16 %v897
        %v948 = vunpack.c.l.b16 %v898
        %v949 = vunpack.c.h.b16 %v898
        %v950 = vunpack.c.l.b16 %v899
        %v951 = vunpack.c.h.b16 %v899
        %v952 = vunpack.c.l.b16 %v900
        %v953 = vunpack.c.h.b16 %v900
        %v954 = vunpack.c.l.b16 %v901
        %v955 = vunpack.c.h.b16 %v901
        %v956 = vunpack.c.l.b16 %v902
        %v957 = vunpack.c.h.b16 %v902
        %v958 = vunpack.c.l.b16 %v903
        %v959 = vunpack.c.h.b16 %v903
        %v960 = vunpack.c.l.b16 %v904
        %v961 = vunpack.c.h.b16 %v904
        %v962 = vunpack.c.l.b16 %v905
        %v963 = vunpack.c.h.b16 %v905
        %v964 = vunpack.c.l.b16 %v906
        %v965 = vunpack.c.h.b16 %v906
        %v966 = vpack.c.b16 %v936, %v934
        %v967 = vpack.c.b16 %v937, %v935
        %v968 = vpack.c.b16 %v940, %v938
        %v969 = vpack.c.b16 %v941, %v939
        %v970 = vpack.c.b16 %v944, %v942
        %v971 = vpack.c.b16 %v945, %v943
        %v972 = vpack.c.b16 %v948, %v946
        %v973 = vpack.c.b16 %v949, %v947
        %v974 = vpack.c.b16 %v952, %v950
        %v975 = vpack.c.b16 %v953, %v951
        %v976 = vpack.c.b16 %v956, %v954
        %v977 = vpack.c.b16 %v957, %v955
        %v978 = vpack.c.b16 %v960, %v958
        %v979 = vpack.c.b16 %v961, %v959
        %v980 = vpack.c.b16 %v964, %v962
        %v981 = vpack.c.b16 %v965, %v963
        %998 = vmatprep.subr.bf16.mxu0 %v967
        %999 = vmatpush1.bf16.msra.mxu0 %v966
        %1000 = vmatprep.subr.bf16.mxu0 %v969
        %1001 = vmatpush1.bf16.msra.mxu0 %v968
        %1002 = vmatprep.subr.bf16.mxu0 %v971
        %1003 = vmatpush1.bf16.msra.mxu0 %v970
        %1004 = vmatprep.subr.bf16.mxu0 %v973
        %1005 = vmatpush1.bf16.msra.mxu0 %v972
        %1006 = vmatprep.subr.bf16.mxu0 %v975
        %1007 = vmatpush1.bf16.msra.mxu0 %v974
        %1008 = vmatprep.subr.bf16.mxu0 %v977
        %1009 = vmatpush1.bf16.msra.mxu0 %v976
        %1010 = vmatprep.subr.bf16.mxu0 %v979
        %1011 = vmatpush1.bf16.msra.mxu0 %v978
        %1012 = vmatprep.subr.bf16.mxu0 %v981
        %1013 = vmatpush1.bf16.msra.mxu0 %v980
        %1014 = vmatprep.subr.bf16.mxu0 0
        %1015 = vmatpush1.bf16.msra.mxu0 0
        %1016 = vmatprep.subr.bf16.mxu0 0
        %1017 = vmatpush1.bf16.msra.mxu0 0
        %1018 = vmatprep.subr.bf16.mxu0 0
        %1019 = vmatpush1.bf16.msra.mxu0 0
        %1020 = vmatprep.subr.bf16.mxu0 0
        %1021 = vmatpush1.bf16.msra.mxu0 0
        %1022 = vmatprep.subr.bf16.mxu0 0
        %1023 = vmatpush1.bf16.msra.mxu0 0
        %1024 = vmatprep.subr.bf16.mxu0 0
        %1025 = vmatpush1.bf16.msra.mxu0 0
        %1026 = vmatprep.subr.bf16.mxu0 0
        %1027 = vmatpush1.bf16.msra.mxu0 0
        %1028 = vmatprep.subr.bf16.mxu0 0
        %1029 = vmatpush1.bf16.msra.mxu0 0
        %1030 = vmatprep.mubr.bf16.mxu0 0
        %1031 = vmatmul.mubr.bf16.gmra.mrb[0].mxu0 %v455
        %v1032 = vpop.f32.mrb[0].mxu0
        %v1033 = vadd.f32 %v911, %v1032
        %v1034 = vpop.f32.mrb[0].mxu0
        %v1035 = vadd.f32 %v915, %v1034
        %v1036 = vpop.f32.mrb[0].mxu0
        %v1037 = vadd.f32 %v911, %v1036
        %v1038 = vpop.f32.mrb[0].mxu0
        %v1039 = vadd.f32 %v915, %v1038
        %1040 = vmatprep.mubr.bf16.mxu0 0
        %1041 = vmatmul.mubr.bf16.gmra.mrb[0].mxu0 %v456
        %v1042 = vpop.f32.mrb[0].mxu0
        %v1043 = vadd.f32 %v911, %v1042
        %v1044 = vpop.f32.mrb[0].mxu0
        %v1045 = vadd.f32 %v915, %v1044
        %v1046 = vpop.f32.mrb[0].mxu0
        %v1047 = vadd.f32 %v911, %v1046
        %v1048 = vpop.f32.mrb[0].mxu0
        %v1049 = vadd.f32 %v915, %v1048
        %1050 = vmatprep.mubr.bf16.mxu0 0
        %1051 = vmatmul.mubr.bf16.gmra.mrb[0].mxu0 %v457
        %v1052 = vpop.f32.mrb[0].mxu0
        %v1053 = vadd.f32 %v911, %v1052
        %v1054 = vpop.f32.mrb[0].mxu0
        %v1055 = vadd.f32 %v915, %v1054
        %v1056 = vpop.f32.mrb[0].mxu0
        %v1057 = vadd.f32 %v911, %v1056
        %v1058 = vpop.f32.mrb[0].mxu0
        %v1059 = vadd.f32 %v915, %v1058
        %1060 = vmatprep.mubr.bf16.mxu0 0
        %1061 = vmatmul.mubr.bf16.gmra.mrb[0].mxu0 %v458
        %v1062 = vpop.f32.mrb[0].mxu0
        %v1063 = vadd.f32 %v911, %v1062
        %v1064 = vpop.f32.mrb[0].mxu0
        %v1065 = vadd.f32 %v915, %v1064
        %v1066 = vpop.f32.mrb[0].mxu0
        %v1067 = vadd.f32 %v911, %v1066
        %v1068 = vpop.f32.mrb[0].mxu0
        %v1069 = vadd.f32 %v915, %v1068
        %1070 = vmatprep.mubr.bf16.mxu0 0
        %1071 = vmatmul.mubr.bf16.gmra.mrb[0].mxu0 %v459
        %v1072 = vpop.f32.mrb[0].mxu0
        %v1073 = vadd.f32 %v911, %v1072
        %v1074 = vpop.f32.mrb[0].mxu0
        %v1075 = vadd.f32 %v915, %v1074
        %v1076 = vpop.f32.mrb[0].mxu0
        %v1077 = vadd.f32 %v911, %v1076
        %v1078 = vpop.f32.mrb[0].mxu0
        %v1079 = vadd.f32 %v915, %v1078
        %1080 = vmatprep.mubr.bf16.mxu0 0
        %1081 = vmatmul.mubr.bf16.gmra.mrb[0].mxu0 %v460
        %v1082 = vpop.f32.mrb[0].mxu0
        %v1083 = vadd.f32 %v911, %v1082
        %v1084 = vpop.f32.mrb[0].mxu0
        %v1085 = vadd.f32 %v915, %v1084
        %v1086 = vpop.f32.mrb[0].mxu0
        %v1087 = vadd.f32 %v911, %v1086
        %v1088 = vpop.f32.mrb[0].mxu0
        %v1089 = vadd.f32 %v915, %v1088
        %1090 = vmatprep.mubr.bf16.mxu0 0
        %1091 = vmatmul.mubr.bf16.gmra.mrb[0].mxu0 %v461
        %v1092 = vpop.f32.mrb[0].mxu0
        %v1093 = vadd.f32 %v911, %v1092
        %v1094 = vpop.f32.mrb[0].mxu0
        %v1095 = vadd.f32 %v915, %v1094
        %v1096 = vpop.f32.mrb[0].mxu0
        %v1097 = vadd.f32 %v911, %v1096
        %v1098 = vpop.f32.mrb[0].mxu0
        %v1099 = vadd.f32 %v915, %v1098
        %1100 = vmatprep.mubr.bf16.mxu0 0
        %1101 = vmatmul.mubr.bf16.gmra.mrb[0].mxu0 %v462
        %v1102 = vpop.f32.mrb[0].mxu0
        %v1103 = vadd.f32 %v911, %v1102
        %v1104 = vpop.f32.mrb[0].mxu0
        %v1105 = vadd.f32 %v915, %v1104
        %v1106 = vpop.f32.mrb[0].mxu0
        %v1107 = vadd.f32 %v911, %v1106
        %v1108 = vpop.f32.mrb[0].mxu0
        %v1109 = vadd.f32 %v915, %v1108
        %1110 = vmatprep.mubr.bf16.mxu0 0
        %1111 = vmatmul.mubr.bf16.gmra.mrb[0].mxu0 %v463
        %v1112 = vpop.f32.mrb[0].mxu0
        %v1113 = vadd.f32 %v911, %v1112
        %v1114 = vpop.f32.mrb[0].mxu0
        %v1115 = vadd.f32 %v915, %v1114
        %v1116 = vpop.f32.mrb[0].mxu0
        %v1117 = vadd.f32 %v911, %v1116
        %v1118 = vpop.f32.mrb[0].mxu0
        %v1119 = vadd.f32 %v915, %v1118
        %1120 = vmatprep.mubr.bf16.mxu0 0
        %1121 = vmatmul.mubr.bf16.gmra.mrb[0].mxu0 %v464
        %v1122 = vpop.f32.mrb[0].mxu0
        %v1123 = vadd.f32 %v911, %v1122
        %v1124 = vpop.f32.mrb[0].mxu0
        %v1125 = vadd.f32 %v915, %v1124
        %v1126 = vpop.f32.mrb[0].mxu0
        %v1127 = vadd.f32 %v911, %v1126
        %v1128 = vpop.f32.mrb[0].mxu0
        %v1129 = vadd.f32 %v915, %v1128
        %1130 = vmatprep.mubr.bf16.mxu0 0
        %1131 = vmatmul.mubr.bf16.gmra.mrb[0].mxu0 %v465
        %v1132 = vpop.f32.mrb[0].mxu0
        %v1133 = vadd.f32 %v911, %v1132
        %v1134 = vpop.f32.mrb[0].mxu0
        %v1135 = vadd.f32 %v915, %v1134
        %v1136 = vpop.f32.mrb[0].mxu0
        %v1137 = vadd.f32 %v911, %v1136
        %v1138 = vpop.f32.mrb[0].mxu0
        %v1139 = vadd.f32 %v915, %v1138
        %1140 = vmatprep.mubr.bf16.mxu0 0
        %1141 = vmatmul.mubr.bf16.gmra.mrb[0].mxu0 %v466
        %v1142 = vpop.f32.mrb[0].mxu0
        %v1143 = vadd.f32 %v911, %v1142
        %v1144 = vpop.f32.mrb[0].mxu0
        %v1145 = vadd.f32 %v915, %v1144
        %v1146 = vpop.f32.mrb[0].mxu0
        %v1147 = vadd.f32 %v911, %v1146
        %v1148 = vpop.f32.mrb[0].mxu0
        %v1149 = vadd.f32 %v915, %v1148
        %1150 = vmatprep.mubr.bf16.mxu0 0
        %1151 = vmatmul.mubr.bf16.gmra.mrb[0].mxu0 %v467
        %v1152 = vpop.f32.mrb[0].mxu0
        %v1153 = vadd.f32 %v911, %v1152
        %v1154 = vpop.f32.mrb[0].mxu0
        %v1155 = vadd.f32 %v915, %v1154
        %v1156 = vpop.f32.mrb[0].mxu0
        %v1157 = vadd.f32 %v911, %v1156
        %v1158 = vpop.f32.mrb[0].mxu0
        %v1159 = vadd.f32 %v915, %v1158
        %1160 = vmatprep.mubr.bf16.mxu0 0
        %1161 = vmatmul.mubr.bf16.gmra.mrb[0].mxu0 %v468
        %v1162 = vpop.f32.mrb[0].mxu0
        %v1163 = vadd.f32 %v911, %v1162
        %v1164 = vpop.f32.mrb[0].mxu0
        %v1165 = vadd.f32 %v915, %v1164
        %v1166 = vpop.f32.mrb[0].mxu0
        %v1167 = vadd.f32 %v911, %v1166
        %v1168 = vpop.f32.mrb[0].mxu0
        %v1169 = vadd.f32 %v915, %v1168
        %1170 = vmatprep.mubr.bf16.mxu0 0
        %1171 = vmatmul.mubr.bf16.gmra.mrb[0].mxu0 %v469
        %v1172 = vpop.f32.mrb[0].mxu0
        %v1173 = vadd.f32 %v911, %v1172
        %v1174 = vpop.f32.mrb[0].mxu0
        %v1175 = vadd.f32 %v915, %v1174
        %v1176 = vpop.f32.mrb[0].mxu0
        %v1177 = vadd.f32 %v911, %v1176
        %v1178 = vpop.f32.mrb[0].mxu0
        %v1179 = vadd.f32 %v915, %v1178
        %1180 = vmatprep.mubr.bf16.mxu0 0
        %1181 = vmatmul.mubr.bf16.gmra.mrb[0].mxu0 %v470
        %v1182 = vpop.f32.mrb[0].mxu0
        %v1183 = vadd.f32 %v911, %v1182
        %v1184 = vpop.f32.mrb[0].mxu0
        %v1185 = vadd.f32 %v915, %v1184
        %v1186 = vpop.f32.mrb[0].mxu0
        %v1187 = vadd.f32 %v911, %v1186
        %v1188 = vpop.f32.mrb[0].mxu0
        %v1189 = vadd.f32 %v915, %v1188
        %1190 = vdwg.mxu0
        %v1191 = vmax.f32 %v1033, 0.0
        %v1192 = vmax.f32 %v1035, 0.0
        %v1193 = vmax.f32 %v1037, 0.0
        %v1194 = vmax.f32 %v1039, 0.0
        %v1195 = vmax.f32 %v1043, 0.0
        %v1196 = vmax.f32 %v1045, 0.0
        %v1197 = vmax.f32 %v1047, 0.0
        %v1198 = vmax.f32 %v1049, 0.0
        %v1199 = vmax.f32 %v1053, 0.0
        %v1200 = vmax.f32 %v1055, 0.0
        %v1201 = vmax.f32 %v1057, 0.0
        %v1202 = vmax.f32 %v1059, 0.0
        %v1203 = vmax.f32 %v1063, 0.0
        %v1204 = vmax.f32 %v1065, 0.0
        %v1205 = vmax.f32 %v1067, 0.0
        %v1206 = vmax.f32 %v1069, 0.0
        %v1207 = vmax.f32 %v1073, 0.0
        %v1208 = vmax.f32 %v1075, 0.0
        %v1209 = vmax.f32 %v1077, 0.0
        %v1210 = vmax.f32 %v1079, 0.0
        %v1211 = vmax.f32 %v1083, 0.0
        %v1212 = vmax.f32 %v1085, 0.0
        %v1213 = vmax.f32 %v1087, 0.0
        %v1214 = vmax.f32 %v1089, 0.0
        %v1215 = vmax.f32 %v1093, 0.0
        %v1216 = vmax.f32 %v1095, 0.0
        %v1217 = vmax.f32 %v1097, 0.0
        %v1218 = vmax.f32 %v1099, 0.0
        %v1219 = vmax.f32 %v1103, 0.0
        %v1220 = vmax.f32 %v1105, 0.0
        %v1221 = vmax.f32 %v1107, 0.0
        %v1222 = vmax.f32 %v1109, 0.0
        %v1223 = vmax.f32 %v1113, 0.0
        %v1224 = vmax.f32 %v1115, 0.0
        %v1225 = vmax.f32 %v1117, 0.0
        %v1226 = vmax.f32 %v1119, 0.0
        %v1227 = vmax.f32 %v1123, 0.0
        %v1228 = vmax.f32 %v1125, 0.0
        %v1229 = vmax.f32 %v1127, 0.0
        %v1230 = vmax.f32 %v1129, 0.0
        %v1231 = vmax.f32 %v1133, 0.0
        %v1232 = vmax.f32 %v1135, 0.0
        %v1233 = vmax.f32 %v1137, 0.0
        %v1234 = vmax.f32 %v1139, 0.0
        %v1235 = vmax.f32 %v1143, 0.0
        %v1236 = vmax.f32 %v1145, 0.0
        %v1237 = vmax.f32 %v1147, 0.0
        %v1238 = vmax.f32 %v1149, 0.0
        %v1239 = vmax.f32 %v1153, 0.0
        %v1240 = vmax.f32 %v1155, 0.0
        %v1241 = vmax.f32 %v1157, 0.0
        %v1242 = vmax.f32 %v1159, 0.0
        %v1243 = vmax.f32 %v1163, 0.0
        %v1244 = vmax.f32 %v1165, 0.0
        %v1245 = vmax.f32 %v1167, 0.0
        %v1246 = vmax.f32 %v1169, 0.0
        %v1247 = vmax.f32 %v1173, 0.0
        %v1248 = vmax.f32 %v1175, 0.0
        %v1249 = vmax.f32 %v1177, 0.0
        %v1250 = vmax.f32 %v1179, 0.0
        %v1251 = vmax.f32 %v1183, 0.0
        %v1252 = vmax.f32 %v1185, 0.0
        %v1253 = vmax.f32 %v1187, 0.0
        %v1254 = vmax.f32 %v1189, 0.0
        %v1255 = vpack.c.bf16 %v1193, %v1191
        %v1256 = vpack.c.bf16 %v1194, %v1192
        %v1257 = vpack.c.bf16 %v1197, %v1195
        %v1258 = vpack.c.bf16 %v1198, %v1196
        %v1259 = vpack.c.bf16 %v1201, %v1199
        %v1260 = vpack.c.bf16 %v1202, %v1200
        %v1261 = vpack.c.bf16 %v1205, %v1203
        %v1262 = vpack.c.bf16 %v1206, %v1204
        %v1263 = vpack.c.bf16 %v1209, %v1207
        %v1264 = vpack.c.bf16 %v1210, %v1208
        %v1265 = vpack.c.bf16 %v1213, %v1211
        %v1266 = vpack.c.bf16 %v1214, %v1212
        %v1267 = vpack.c.bf16 %v1217, %v1215
        %v1268 = vpack.c.bf16 %v1218, %v1216
        %v1269 = vpack.c.bf16 %v1221, %v1219
        %v1270 = vpack.c.bf16 %v1222, %v1220
        %v1271 = vpack.c.bf16 %v1225, %v1223
        %v1272 = vpack.c.bf16 %v1226, %v1224
        %v1273 = vpack.c.bf16 %v1229, %v1227
        %v1274 = vpack.c.bf16 %v1230, %v1228
        %v1275 = vpack.c.bf16 %v1233, %v1231
        %v1276 = vpack.c.bf16 %v1234, %v1232
        %v1277 = vpack.c.bf16 %v1237, %v1235
        %v1278 = vpack.c.bf16 %v1238, %v1236
        %v1279 = vpack.c.bf16 %v1241, %v1239
        %v1280 = vpack.c.bf16 %v1242, %v1240
        %v1281 = vpack.c.bf16 %v1245, %v1243
        %v1282 = vpack.c.bf16 %v1246, %v1244
        %v1283 = vpack.c.bf16 %v1249, %v1247
        %v1284 = vpack.c.bf16 %v1250, %v1248
        %v1285 = vpack.c.bf16 %v1253, %v1251
        %v1286 = vpack.c.bf16 %v1254, %v1252
        %s1287 = scalar_lea.vmem [#allocation8], 256
        %v1288 = vld [vmem:[%s1287] sm:$0xff]
        %v1289 = vld [vmem:[%s1287 + $0x8] sm:$0xff]
        %v1290 = vld [vmem:[%s1287 + $0x10] sm:$0xff]
        %v1291 = vld [vmem:[%s1287 + $0x18] sm:$0xff]
        %v1292 = vld [vmem:[%s1287 + $0x20] sm:$0xff]
        %v1293 = vld [vmem:[%s1287 + $0x28] sm:$0xff]
        %v1294 = vld [vmem:[%s1287 + $0x30] sm:$0xff]
        %v1295 = vld [vmem:[%s1287 + $0x38] sm:$0xff]
        %v1296 = vld [vmem:[%s1287 + $0x40] sm:$0xff]
        %v1297 = vld [vmem:[%s1287 + $0x48] sm:$0xff]
        %v1298 = vld [vmem:[%s1287 + $0x50] sm:$0xff]
        %v1299 = vld [vmem:[%s1287 + $0x58] sm:$0xff]
        %v1300 = vld [vmem:[%s1287 + $0x60] sm:$0xff]
        %v1301 = vld [vmem:[%s1287 + $0x68] sm:$0xff]
        %v1302 = vld [vmem:[%s1287 + $0x70] sm:$0xff]
        %v1303 = vld [vmem:[%s1287 + $0x78] sm:$0xff]
        %v1304 = vld [vmem:[%s1287 + $0x80] sm:$0xff]
        %v1305 = vld [vmem:[%s1287 + $0x88] sm:$0xff]
        %v1306 = vld [vmem:[%s1287 + $0x90] sm:$0xff]
        %v1307 = vld [vmem:[%s1287 + $0x98] sm:$0xff]
        %v1308 = vld [vmem:[%s1287 + $0xa0] sm:$0xff]
        %v1309 = vld [vmem:[%s1287 + $0xa8] sm:$0xff]
        %v1310 = vld [vmem:[%s1287 + $0xb0] sm:$0xff]
        %v1311 = vld [vmem:[%s1287 + $0xb8] sm:$0xff]
        %v1312 = vld [vmem:[%s1287 + $0xc0] sm:$0xff]
        %v1313 = vld [vmem:[%s1287 + $0xc8] sm:$0xff]
        %v1314 = vld [vmem:[%s1287 + $0xd0] sm:$0xff]
        %v1315 = vld [vmem:[%s1287 + $0xd8] sm:$0xff]
        %v1316 = vld [vmem:[%s1287 + $0xe0] sm:$0xff]
        %v1317 = vld [vmem:[%s1287 + $0xe8] sm:$0xff]
        %v1318 = vld [vmem:[%s1287 + $0xf0] sm:$0xff]
        %v1319 = vld [vmem:[%s1287 + $0xf8] sm:$0xff]
        %v1352 = vunpack.c.l.b16 %v1288
        %v1353 = vunpack.c.h.b16 %v1288
        %v1354 = vunpack.c.l.b16 %v1289
        %v1355 = vunpack.c.h.b16 %v1289
        %v1356 = vunpack.c.l.b16 %v1290
        %v1357 = vunpack.c.h.b16 %v1290
        %v1358 = vunpack.c.l.b16 %v1291
        %v1359 = vunpack.c.h.b16 %v1291
        %v1360 = vunpack.c.l.b16 %v1292
        %v1361 = vunpack.c.h.b16 %v1292
        %v1362 = vunpack.c.l.b16 %v1293
        %v1363 = vunpack.c.h.b16 %v1293
        %v1364 = vunpack.c.l.b16 %v1294
        %v1365 = vunpack.c.h.b16 %v1294
        %v1366 = vunpack.c.l.b16 %v1295
        %v1367 = vunpack.c.h.b16 %v1295
        %v1368 = vunpack.c.l.b16 %v1296
        %v1369 = vunpack.c.h.b16 %v1296
        %v1370 = vunpack.c.l.b16 %v1297
        %v1371 = vunpack.c.h.b16 %v1297
        %v1372 = vunpack.c.l.b16 %v1298
        %v1373 = vunpack.c.h.b16 %v1298
        %v1374 = vunpack.c.l.b16 %v1299
        %v1375 = vunpack.c.h.b16 %v1299
        %v1376 = vunpack.c.l.b16 %v1300
        %v1377 = vunpack.c.h.b16 %v1300
        %v1378 = vunpack.c.l.b16 %v1301
        %v1379 = vunpack.c.h.b16 %v1301
        %v1380 = vunpack.c.l.b16 %v1302
        %v1381 = vunpack.c.h.b16 %v1302
        %v1382 = vunpack.c.l.b16 %v1303
        %v1383 = vunpack.c.h.b16 %v1303
        %v1384 = vunpack.c.l.b16 %v1304
        %v1385 = vunpack.c.h.b16 %v1304
        %v1386 = vunpack.c.l.b16 %v1305
        %v1387 = vunpack.c.h.b16 %v1305
        %v1388 = vunpack.c.l.b16 %v1306
        %v1389 = vunpack.c.h.b16 %v1306
        %v1390 = vunpack.c.l.b16 %v1307
        %v1391 = vunpack.c.h.b16 %v1307
        %v1392 = vunpack.c.l.b16 %v1308
        %v1393 = vunpack.c.h.b16 %v1308
        %v1394 = vunpack.c.l.b16 %v1309
        %v1395 = vunpack.c.h.b16 %v1309
        %v1396 = vunpack.c.l.b16 %v1310
        %v1397 = vunpack.c.h.b16 %v1310
        %v1398 = vunpack.c.l.b16 %v1311
        %v1399 = vunpack.c.h.b16 %v1311
        %v1400 = vunpack.c.l.b16 %v1312
        %v1401 = vunpack.c.h.b16 %v1312
        %v1402 = vunpack.c.l.b16 %v1313
        %v1403 = vunpack.c.h.b16 %v1313
        %v1404 = vunpack.c.l.b16 %v1314
        %v1405 = vunpack.c.h.b16 %v1314
        %v1406 = vunpack.c.l.b16 %v1315
        %v1407 = vunpack.c.h.b16 %v1315
        %v1408 = vunpack.c.l.b16 %v1316
        %v1409 = vunpack.c.h.b16 %v1316
        %v1410 = vunpack.c.l.b16 %v1317
        %v1411 = vunpack.c.h.b16 %v1317
        %v1412 = vunpack.c.l.b16 %v1318
        %v1413 = vunpack.c.h.b16 %v1318
        %v1414 = vunpack.c.l.b16 %v1319
        %v1415 = vunpack.c.h.b16 %v1319
        %v1416 = vpack.c.b16 %v1354, %v1352
        %v1417 = vpack.c.b16 %v1355, %v1353
        %v1418 = vpack.c.b16 %v1358, %v1356
        %v1419 = vpack.c.b16 %v1359, %v1357
        %v1420 = vpack.c.b16 %v1362, %v1360
        %v1421 = vpack.c.b16 %v1363, %v1361
        %v1422 = vpack.c.b16 %v1366, %v1364
        %v1423 = vpack.c.b16 %v1367, %v1365
        %v1424 = vpack.c.b16 %v1370, %v1368
        %v1425 = vpack.c.b16 %v1371, %v1369
        %v1426 = vpack.c.b16 %v1374, %v1372
        %v1427 = vpack.c.b16 %v1375, %v1373
        %v1428 = vpack.c.b16 %v1378, %v1376
        %v1429 = vpack.c.b16 %v1379, %v1377
        %v1430 = vpack.c.b16 %v1382, %v1380
        %v1431 = vpack.c.b16 %v1383, %v1381
        %v1432 = vpack.c.b16 %v1386, %v1384
        %v1433 = vpack.c.b16 %v1387, %v1385
        %v1434 = vpack.c.b16 %v1390, %v1388
        %v1435 = vpack.c.b16 %v1391, %v1389
        %v1436 = vpack.c.b16 %v1394, %v1392
        %v1437 = vpack.c.b16 %v1395, %v1393
        %v1438 = vpack.c.b16 %v1398, %v1396
        %v1439 = vpack.c.b16 %v1399, %v1397
        %v1440 = vpack.c.b16 %v1402, %v1400
        %v1441 = vpack.c.b16 %v1403, %v1401
        %v1442 = vpack.c.b16 %v1406, %v1404
        %v1443 = vpack.c.b16 %v1407, %v1405
        %v1444 = vpack.c.b16 %v1410, %v1408
        %v1445 = vpack.c.b16 %v1411, %v1409
        %v1446 = vpack.c.b16 %v1414, %v1412
        %v1447 = vpack.c.b16 %v1415, %v1413
        %1480 = vmatprep.subr.bf16.mxu0 %v1417
        %1481 = vmatpush1.bf16.msra.mxu0 %v1416
        %1482 = vmatprep.subr.bf16.mxu0 %v1419
        %1483 = vmatpush1.bf16.msra.mxu0 %v1418
        %1484 = vmatprep.subr.bf16.mxu0 %v1421
        %1485 = vmatpush1.bf16.msra.mxu0 %v1420
        %1486 = vmatprep.subr.bf16.mxu0 %v1423
        %1487 = vmatpush1.bf16.msra.mxu0 %v1422
        %1488 = vmatprep.subr.bf16.mxu0 %v1425
        %1489 = vmatpush1.bf16.msra.mxu0 %v1424
        %1490 = vmatprep.subr.bf16.mxu0 %v1427
        %1491 = vmatpush1.bf16.msra.mxu0 %v1426
        %1492 = vmatprep.subr.bf16.mxu0 %v1429
        %1493 = vmatpush1.bf16.msra.mxu0 %v1428
        %1494 = vmatprep.subr.bf16.mxu0 %v1431
        %1495 = vmatpush1.bf16.msra.mxu0 %v1430
        %1496 = vmatprep.subr.bf16.mxu0 %v1433
        %1497 = vmatpush1.bf16.msra.mxu0 %v1432
        %1498 = vmatprep.subr.bf16.mxu0 %v1435
        %1499 = vmatpush1.bf16.msra.mxu0 %v1434
        %1500 = vmatprep.subr.bf16.mxu0 %v1437
        %1501 = vmatpush1.bf16.msra.mxu0 %v1436
        %1502 = vmatprep.subr.bf16.mxu0 %v1439
        %1503 = vmatpush1.bf16.msra.mxu0 %v1438
        %1504 = vmatprep.subr.bf16.mxu0 %v1441
        %1505 = vmatpush1.bf16.msra.mxu0 %v1440
        %1506 = vmatprep.subr.bf16.mxu0 %v1443
        %1507 = vmatpush1.bf16.msra.mxu0 %v1442
        %1508 = vmatprep.subr.bf16.mxu0 %v1445
        %1509 = vmatpush1.bf16.msra.mxu0 %v1444
        %1510 = vmatprep.subr.bf16.mxu0 %v1447
        %1511 = vmatpush1.bf16.msra.mxu0 %v1446
        %1512 = vmatprep.mubr.bf16.mxu0 %v1256
        %1513 = vmatmul.mubr.bf16.gmra.mrb[0].mxu0 %v1255
        %v1514 = vpop.f32.mrb[0].mxu0
        %v1515 = vadd.f32 0.0, %v1514
        %v1516 = vpop.f32.mrb[0].mxu0
        %v1517 = vadd.f32 0.0, %v1516
        %v1518 = vpop.f32.mrb[0].mxu0
        %v1519 = vadd.f32 0.0, %v1518
        %v1520 = vpop.f32.mrb[0].mxu0
        %v1521 = vadd.f32 0.0, %v1520
        %1522 = vmatprep.mubr.bf16.mxu0 %v1258
        %1523 = vmatmul.mubr.bf16.gmra.mrb[0].mxu0 %v1257
        %v1524 = vpop.f32.mrb[0].mxu0
        %v1525 = vadd.f32 0.0, %v1524
        %v1526 = vpop.f32.mrb[0].mxu0
        %v1527 = vadd.f32 0.0, %v1526
        %v1528 = vpop.f32.mrb[0].mxu0
        %v1529 = vadd.f32 0.0, %v1528
        %v1530 = vpop.f32.mrb[0].mxu0
        %v1531 = vadd.f32 0.0, %v1530
        %1532 = vmatprep.mubr.bf16.mxu0 %v1260
        %1533 = vmatmul.mubr.bf16.gmra.mrb[0].mxu0 %v1259
        %v1534 = vpop.f32.mrb[0].mxu0
        %v1535 = vadd.f32 0.0, %v1534
        %v1536 = vpop.f32.mrb[0].mxu0
        %v1537 = vadd.f32 0.0, %v1536
        %v1538 = vpop.f32.mrb[0].mxu0
        %v1539 = vadd.f32 0.0, %v1538
        %v1540 = vpop.f32.mrb[0].mxu0
        %v1541 = vadd.f32 0.0, %v1540
        %1542 = vmatprep.mubr.bf16.mxu0 %v1262
        %1543 = vmatmul.mubr.bf16.gmra.mrb[0].mxu0 %v1261
        %v1544 = vpop.f32.mrb[0].mxu0
        %v1545 = vadd.f32 0.0, %v1544
        %v1546 = vpop.f32.mrb[0].mxu0
        %v1547 = vadd.f32 0.0, %v1546
        %v1548 = vpop.f32.mrb[0].mxu0
        %v1549 = vadd.f32 0.0, %v1548
        %v1550 = vpop.f32.mrb[0].mxu0
        %v1551 = vadd.f32 0.0, %v1550
        %1552 = vmatprep.mubr.bf16.mxu0 %v1264
        %1553 = vmatmul.mubr.bf16.gmra.mrb[0].mxu0 %v1263
        %v1554 = vpop.f32.mrb[0].mxu0
        %v1555 = vadd.f32 0.0, %v1554
        %v1556 = vpop.f32.mrb[0].mxu0
        %v1557 = vadd.f32 0.0, %v1556
        %v1558 = vpop.f32.mrb[0].mxu0
        %v1559 = vadd.f32 0.0, %v1558
        %v1560 = vpop.f32.mrb[0].mxu0
        %v1561 = vadd.f32 0.0, %v1560
        %1562 = vmatprep.mubr.bf16.mxu0 %v1266
        %1563 = vmatmul.mubr.bf16.gmra.mrb[0].mxu0 %v1265
        %v1564 = vpop.f32.mrb[0].mxu0
        %v1565 = vadd.f32 0.0, %v1564
        %v1566 = vpop.f32.mrb[0].mxu0
        %v1567 = vadd.f32 0.0, %v1566
        %v1568 = vpop.f32.mrb[0].mxu0
        %v1569 = vadd.f32 0.0, %v1568
        %v1570 = vpop.f32.mrb[0].mxu0
        %v1571 = vadd.f32 0.0, %v1570
        %1572 = vmatprep.mubr.bf16.mxu0 %v1268
        %1573 = vmatmul.mubr.bf16.gmra.mrb[0].mxu0 %v1267
        %v1574 = vpop.f32.mrb[0].mxu0
        %v1575 = vadd.f32 0.0, %v1574
        %v1576 = vpop.f32.mrb[0].mxu0
        %v1577 = vadd.f32 0.0, %v1576
        %v1578 = vpop.f32.mrb[0].mxu0
        %v1579 = vadd.f32 0.0, %v1578
        %v1580 = vpop.f32.mrb[0].mxu0
        %v1581 = vadd.f32 0.0, %v1580
        %1582 = vmatprep.mubr.bf16.mxu0 %v1270
        %1583 = vmatmul.mubr.bf16.gmra.mrb[0].mxu0 %v1269
        %v1584 = vpop.f32.mrb[0].mxu0
        %v1585 = vadd.f32 0.0, %v1584
        %v1586 = vpop.f32.mrb[0].mxu0
        %v1587 = vadd.f32 0.0, %v1586
        %v1588 = vpop.f32.mrb[0].mxu0
        %v1589 = vadd.f32 0.0, %v1588
        %v1590 = vpop.f32.mrb[0].mxu0
        %v1591 = vadd.f32 0.0, %v1590
        %1592 = vmatprep.mubr.bf16.mxu0 %v1272
        %1593 = vmatmul.mubr.bf16.gmra.mrb[0].mxu0 %v1271
        %v1594 = vpop.f32.mrb[0].mxu0
        %v1595 = vadd.f32 0.0, %v1594
        %v1596 = vpop.f32.mrb[0].mxu0
        %v1597 = vadd.f32 0.0, %v1596
        %v1598 = vpop.f32.mrb[0].mxu0
        %v1599 = vadd.f32 0.0, %v1598
        %v1600 = vpop.f32.mrb[0].mxu0
        %v1601 = vadd.f32 0.0, %v1600
        %1602 = vmatprep.mubr.bf16.mxu0 %v1274
        %1603 = vmatmul.mubr.bf16.gmra.mrb[0].mxu0 %v1273
        %v1604 = vpop.f32.mrb[0].mxu0
        %v1605 = vadd.f32 0.0, %v1604
        %v1606 = vpop.f32.mrb[0].mxu0
        %v1607 = vadd.f32 0.0, %v1606
        %v1608 = vpop.f32.mrb[0].mxu0
        %v1609 = vadd.f32 0.0, %v1608
        %v1610 = vpop.f32.mrb[0].mxu0
        %v1611 = vadd.f32 0.0, %v1610
        %1612 = vmatprep.mubr.bf16.mxu0 %v1276
        %1613 = vmatmul.mubr.bf16.gmra.mrb[0].mxu0 %v1275
        %v1614 = vpop.f32.mrb[0].mxu0
        %v1615 = vadd.f32 0.0, %v1614
        %v1616 = vpop.f32.mrb[0].mxu0
        %v1617 = vadd.f32 0.0, %v1616
        %v1618 = vpop.f32.mrb[0].mxu0
        %v1619 = vadd.f32 0.0, %v1618
        %v1620 = vpop.f32.mrb[0].mxu0
        %v1621 = vadd.f32 0.0, %v1620
        %1622 = vmatprep.mubr.bf16.mxu0 %v1278
        %1623 = vmatmul.mubr.bf16.gmra.mrb[0].mxu0 %v1277
        %v1624 = vpop.f32.mrb[0].mxu0
        %v1625 = vadd.f32 0.0, %v1624
        %v1626 = vpop.f32.mrb[0].mxu0
        %v1627 = vadd.f32 0.0, %v1626
        %v1628 = vpop.f32.mrb[0].mxu0
        %v1629 = vadd.f32 0.0, %v1628
        %v1630 = vpop.f32.mrb[0].mxu0
        %v1631 = vadd.f32 0.0, %v1630
        %1632 = vmatprep.mubr.bf16.mxu0 %v1280
        %1633 = vmatmul.mubr.bf16.gmra.mrb[0].mxu0 %v1279
        %v1634 = vpop.f32.mrb[0].mxu0
        %v1635 = vadd.f32 0.0, %v1634
        %v1636 = vpop.f32.mrb[0].mxu0
        %v1637 = vadd.f32 0.0, %v1636
        %v1638 = vpop.f32.mrb[0].mxu0
        %v1639 = vadd.f32 0.0, %v1638
        %v1640 = vpop.f32.mrb[0].mxu0
        %v1641 = vadd.f32 0.0, %v1640
        %1642 = vmatprep.mubr.bf16.mxu0 %v1282
        %1643 = vmatmul.mubr.bf16.gmra.mrb[0].mxu0 %v1281
        %v1644 = vpop.f32.mrb[0].mxu0
        %v1645 = vadd.f32 0.0, %v1644
        %v1646 = vpop.f32.mrb[0].mxu0
        %v1647 = vadd.f32 0.0, %v1646
        %v1648 = vpop.f32.mrb[0].mxu0
        %v1649 = vadd.f32 0.0, %v1648
        %v1650 = vpop.f32.mrb[0].mxu0
        %v1651 = vadd.f32 0.0, %v1650
        %1652 = vmatprep.mubr.bf16.mxu0 %v1284
        %1653 = vmatmul.mubr.bf16.gmra.mrb[0].mxu0 %v1283
        %v1654 = vpop.f32.mrb[0].mxu0
        %v1655 = vadd.f32 0.0, %v1654
        %v1656 = vpop.f32.mrb[0].mxu0
        %v1657 = vadd.f32 0.0, %v1656
        %v1658 = vpop.f32.mrb[0].mxu0
        %v1659 = vadd.f32 0.0, %v1658
        %v1660 = vpop.f32.mrb[0].mxu0
        %v1661 = vadd.f32 0.0, %v1660
        %1662 = vmatprep.mubr.bf16.mxu0 %v1286
        %1663 = vmatmul.mubr.bf16.gmra.mrb[0].mxu0 %v1285
        %v1664 = vpop.f32.mrb[0].mxu0
        %v1665 = vadd.f32 0.0, %v1664
        %v1666 = vpop.f32.mrb[0].mxu0
        %v1667 = vadd.f32 0.0, %v1666
        %v1668 = vpop.f32.mrb[0].mxu0
        %v1669 = vadd.f32 0.0, %v1668
        %v1670 = vpop.f32.mrb[0].mxu0
        %v1671 = vadd.f32 0.0, %v1670
        %1672 = vdwg.mxu0
        %v1705 = vunpack.c.l.b16 %v856
        %v1706 = vunpack.c.h.b16 %v856
        %v1707 = vunpack.c.l.b16 %v857
        %v1708 = vunpack.c.h.b16 %v857
        %v1709 = vunpack.c.l.b16 %v858
        %v1710 = vunpack.c.h.b16 %v858
        %v1711 = vunpack.c.l.b16 %v859
        %v1712 = vunpack.c.h.b16 %v859
        %v1713 = vunpack.c.l.b16 %v860
        %v1714 = vunpack.c.h.b16 %v860
        %v1715 = vunpack.c.l.b16 %v861
        %v1716 = vunpack.c.h.b16 %v861
        %v1717 = vunpack.c.l.b16 %v862
        %v1718 = vunpack.c.h.b16 %v862
        %v1719 = vunpack.c.l.b16 %v863
        %v1720 = vunpack.c.h.b16 %v863
        %v1721 = vunpack.c.l.b16 %v864
        %v1722 = vunpack.c.h.b16 %v864
        %v1723 = vunpack.c.l.b16 %v865
        %v1724 = vunpack.c.h.b16 %v865
        %v1725 = vunpack.c.l.b16 %v866
        %v1726 = vunpack.c.h.b16 %v866
        %v1727 = vunpack.c.l.b16 %v867
        %v1728 = vunpack.c.h.b16 %v867
        %v1729 = vunpack.c.l.b16 %v868
        %v1730 = vunpack.c.h.b16 %v868
        %v1731 = vunpack.c.l.b16 %v869
        %v1732 = vunpack.c.h.b16 %v869
        %v1733 = vunpack.c.l.b16 %v870
        %v1734 = vunpack.c.h.b16 %v870
        %v1735 = vunpack.c.l.b16 %v871
        %v1736 = vunpack.c.h.b16 %v871
        %v1737 = vunpack.c.l.b16 %v872
        %v1738 = vunpack.c.h.b16 %v872
        %v1739 = vunpack.c.l.b16 %v873
        %v1740 = vunpack.c.h.b16 %v873
        %v1741 = vunpack.c.l.b16 %v874
        %v1742 = vunpack.c.h.b16 %v874
        %v1743 = vunpack.c.l.b16 %v875
        %v1744 = vunpack.c.h.b16 %v875
        %v1745 = vunpack.c.l.b16 %v876
        %v1746 = vunpack.c.h.b16 %v876
        %v1747 = vunpack.c.l.b16 %v877
        %v1748 = vunpack.c.h.b16 %v877
        %v1749 = vunpack.c.l.b16 %v878
        %v1750 = vunpack.c.h.b16 %v878
        %v1751 = vunpack.c.l.b16 %v879
        %v1752 = vunpack.c.h.b16 %v879
        %v1753 = vunpack.c.l.b16 %v880
        %v1754 = vunpack.c.h.b16 %v880
        %v1755 = vunpack.c.l.b16 %v881
        %v1756 = vunpack.c.h.b16 %v881
        %v1757 = vunpack.c.l.b16 %v882
        %v1758 = vunpack.c.h.b16 %v882
        %v1759 = vunpack.c.l.b16 %v883
        %v1760 = vunpack.c.h.b16 %v883
        %v1761 = vunpack.c.l.b16 %v884
        %v1762 = vunpack.c.h.b16 %v884
        %v1763 = vunpack.c.l.b16 %v885
        %v1764 = vunpack.c.h.b16 %v885
        %v1765 = vunpack.c.l.b16 %v886
        %v1766 = vunpack.c.h.b16 %v886
        %v1767 = vunpack.c.l.b16 %v887
        %v1768 = vunpack.c.h.b16 %v887
        %v1769 = vpack.c.b16 %v1707, %v1705
        %v1770 = vpack.c.b16 %v1708, %v1706
        %v1771 = vpack.c.b16 %v1711, %v1709
        %v1772 = vpack.c.b16 %v1712, %v1710
        %v1773 = vpack.c.b16 %v1715, %v1713
        %v1774 = vpack.c.b16 %v1716, %v1714
        %v1775 = vpack.c.b16 %v1719, %v1717
        %v1776 = vpack.c.b16 %v1720, %v1718
        %v1777 = vpack.c.b16 %v1723, %v1721
        %v1778 = vpack.c.b16 %v1724, %v1722
        %v1779 = vpack.c.b16 %v1727, %v1725
        %v1780 = vpack.c.b16 %v1728, %v1726
        %v1781 = vpack.c.b16 %v1731, %v1729
        %v1782 = vpack.c.b16 %v1732, %v1730
        %v1783 = vpack.c.b16 %v1735, %v1733
        %v1784 = vpack.c.b16 %v1736, %v1734
        %v1785 = vpack.c.b16 %v1739, %v1737
        %v1786 = vpack.c.b16 %v1740, %v1738
        %v1787 = vpack.c.b16 %v1743, %v1741
        %v1788 = vpack.c.b16 %v1744, %v1742
        %v1789 = vpack.c.b16 %v1747, %v1745
        %v1790 = vpack.c.b16 %v1748, %v1746
        %v1791 = vpack.c.b16 %v1751, %v1749
        %v1792 = vpack.c.b16 %v1752, %v1750
        %v1793 = vpack.c.b16 %v1755, %v1753
        %v1794 = vpack.c.b16 %v1756, %v1754
        %v1795 = vpack.c.b16 %v1759, %v1757
        %v1796 = vpack.c.b16 %v1760, %v1758
        %v1797 = vpack.c.b16 %v1763, %v1761
        %v1798 = vpack.c.b16 %v1764, %v1762
        %v1799 = vpack.c.b16 %v1767, %v1765
        %v1800 = vpack.c.b16 %v1768, %v1766
        %1833 = vmatprep.subr.bf16.mxu0 %v1770
        %1834 = vmatpush1.bf16.msra.mxu0 %v1769
        %1835 = vmatprep.subr.bf16.mxu0 %v1772
        %1836 = vmatpush1.bf16.msra.mxu0 %v1771
        %1837 = vmatprep.subr.bf16.mxu0 %v1774
        %1838 = vmatpush1.bf16.msra.mxu0 %v1773
        %1839 = vmatprep.subr.bf16.mxu0 %v1776
        %1840 = vmatpush1.bf16.msra.mxu0 %v1775
        %1841 = vmatprep.subr.bf16.mxu0 %v1778
        %1842 = vmatpush1.bf16.msra.mxu0 %v1777
        %1843 = vmatprep.subr.bf16.mxu0 %v1780
        %1844 = vmatpush1.bf16.msra.mxu0 %v1779
        %1845 = vmatprep.subr.bf16.mxu0 %v1782
        %1846 = vmatpush1.bf16.msra.mxu0 %v1781
        %1847 = vmatprep.subr.bf16.mxu0 %v1784
        %1848 = vmatpush1.bf16.msra.mxu0 %v1783
        %1849 = vmatprep.subr.bf16.mxu0 %v1786
        %1850 = vmatpush1.bf16.msra.mxu0 %v1785
        %1851 = vmatprep.subr.bf16.mxu0 %v1788
        %1852 = vmatpush1.bf16.msra.mxu0 %v1787
        %1853 = vmatprep.subr.bf16.mxu0 %v1790
        %1854 = vmatpush1.bf16.msra.mxu0 %v1789
        %1855 = vmatprep.subr.bf16.mxu0 %v1792
        %1856 = vmatpush1.bf16.msra.mxu0 %v1791
        %1857 = vmatprep.subr.bf16.mxu0 %v1794
        %1858 = vmatpush1.bf16.msra.mxu0 %v1793
        %1859 = vmatprep.subr.bf16.mxu0 %v1796
        %1860 = vmatpush1.bf16.msra.mxu0 %v1795
        %1861 = vmatprep.subr.bf16.mxu0 %v1798
        %1862 = vmatpush1.bf16.msra.mxu0 %v1797
        %1863 = vmatprep.subr.bf16.mxu0 %v1800
        %1864 = vmatpush1.bf16.msra.mxu0 %v1799
        %1865 = vmatprep.mubr.bf16.mxu0 %v825
        %1866 = vmatmul.mubr.bf16.gmra.mrb[0].mxu0 %v824
        %v1867 = vpop.f32.mrb[0].mxu0
        %v1868 = vadd.f32 %v1515, %v1867
        %v1869 = vpop.f32.mrb[0].mxu0
        %v1870 = vadd.f32 %v1517, %v1869
        %v1871 = vpop.f32.mrb[0].mxu0
        %v1872 = vadd.f32 %v1519, %v1871
        %v1873 = vpop.f32.mrb[0].mxu0
        %v1874 = vadd.f32 %v1521, %v1873
        %1875 = vmatprep.mubr.bf16.mxu0 %v827
        %1876 = vmatmul.mubr.bf16.gmra.mrb[0].mxu0 %v826
        %v1877 = vpop.f32.mrb[0].mxu0
        %v1878 = vadd.f32 %v1525, %v1877
        %v1879 = vpop.f32.mrb[0].mxu0
        %v1880 = vadd.f32 %v1527, %v1879
        %v1881 = vpop.f32.mrb[0].mxu0
        %v1882 = vadd.f32 %v1529, %v1881
        %v1883 = vpop.f32.mrb[0].mxu0
        %v1884 = vadd.f32 %v1531, %v1883
        %1885 = vmatprep.mubr.bf16.mxu0 %v829
        %1886 = vmatmul.mubr.bf16.gmra.mrb[0].mxu0 %v828
        %v1887 = vpop.f32.mrb[0].mxu0
        %v1888 = vadd.f32 %v1535, %v1887
        %v1889 = vpop.f32.mrb[0].mxu0
        %v1890 = vadd.f32 %v1537, %v1889
        %v1891 = vpop.f32.mrb[0].mxu0
        %v1892 = vadd.f32 %v1539, %v1891
        %v1893 = vpop.f32.mrb[0].mxu0
        %v1894 = vadd.f32 %v1541, %v1893
        %1895 = vmatprep.mubr.bf16.mxu0 %v831
        %1896 = vmatmul.mubr.bf16.gmra.mrb[0].mxu0 %v830
        %v1897 = vpop.f32.mrb[0].mxu0
        %v1898 = vadd.f32 %v1545, %v1897
        %v1899 = vpop.f32.mrb[0].mxu0
        %v1900 = vadd.f32 %v1547, %v1899
        %v1901 = vpop.f32.mrb[0].mxu0
        %v1902 = vadd.f32 %v1549, %v1901
        %v1903 = vpop.f32.mrb[0].mxu0
        %v1904 = vadd.f32 %v1551, %v1903
        %1905 = vmatprep.mubr.bf16.mxu0 %v833
        %1906 = vmatmul.mubr.bf16.gmra.mrb[0].mxu0 %v832
        %v1907 = vpop.f32.mrb[0].mxu0
        %v1908 = vadd.f32 %v1555, %v1907
        %v1909 = vpop.f32.mrb[0].mxu0
        %v1910 = vadd.f32 %v1557, %v1909
        %v1911 = vpop.f32.mrb[0].mxu0
        %v1912 = vadd.f32 %v1559, %v1911
        %v1913 = vpop.f32.mrb[0].mxu0
        %v1914 = vadd.f32 %v1561, %v1913
        %1915 = vmatprep.mubr.bf16.mxu0 %v835
        %1916 = vmatmul.mubr.bf16.gmra.mrb[0].mxu0 %v834
        %v1917 = vpop.f32.mrb[0].mxu0
        %v1918 = vadd.f32 %v1565, %v1917
        %v1919 = vpop.f32.mrb[0].mxu0
        %v1920 = vadd.f32 %v1567, %v1919
        %v1921 = vpop.f32.mrb[0].mxu0
        %v1922 = vadd.f32 %v1569, %v1921
        %v1923 = vpop.f32.mrb[0].mxu0
        %v1924 = vadd.f32 %v1571, %v1923
        %1925 = vmatprep.mubr.bf16.mxu0 %v837
        %1926 = vmatmul.mubr.bf16.gmra.mrb[0].mxu0 %v836
        %v1927 = vpop.f32.mrb[0].mxu0
        %v1928 = vadd.f32 %v1575, %v1927
        %v1929 = vpop.f32.mrb[0].mxu0
        %v1930 = vadd.f32 %v1577, %v1929
        %v1931 = vpop.f32.mrb[0].mxu0
        %v1932 = vadd.f32 %v1579, %v1931
        %v1933 = vpop.f32.mrb[0].mxu0
        %v1934 = vadd.f32 %v1581, %v1933
        %1935 = vmatprep.mubr.bf16.mxu0 %v839
        %1936 = vmatmul.mubr.bf16.gmra.mrb[0].mxu0 %v838
        %v1937 = vpop.f32.mrb[0].mxu0
        %v1938 = vadd.f32 %v1585, %v1937
        %v1939 = vpop.f32.mrb[0].mxu0
        %v1940 = vadd.f32 %v1587, %v1939
        %v1941 = vpop.f32.mrb[0].mxu0
        %v1942 = vadd.f32 %v1589, %v1941
        %v1943 = vpop.f32.mrb[0].mxu0
        %v1944 = vadd.f32 %v1591, %v1943
        %1945 = vmatprep.mubr.bf16.mxu0 %v841
        %1946 = vmatmul.mubr.bf16.gmra.mrb[0].mxu0 %v840
        %v1947 = vpop.f32.mrb[0].mxu0
        %v1948 = vadd.f32 %v1595, %v1947
        %v1949 = vpop.f32.mrb[0].mxu0
        %v1950 = vadd.f32 %v1597, %v1949
        %v1951 = vpop.f32.mrb[0].mxu0
        %v1952 = vadd.f32 %v1599, %v1951
        %v1953 = vpop.f32.mrb[0].mxu0
        %v1954 = vadd.f32 %v1601, %v1953
        %1955 = vmatprep.mubr.bf16.mxu0 %v843
        %1956 = vmatmul.mubr.bf16.gmra.mrb[0].mxu0 %v842
        %v1957 = vpop.f32.mrb[0].mxu0
        %v1958 = vadd.f32 %v1605, %v1957
        %v1959 = vpop.f32.mrb[0].mxu0
        %v1960 = vadd.f32 %v1607, %v1959
        %v1961 = vpop.f32.mrb[0].mxu0
        %v1962 = vadd.f32 %v1609, %v1961
        %v1963 = vpop.f32.mrb[0].mxu0
        %v1964 = vadd.f32 %v1611, %v1963
        %1965 = vmatprep.mubr.bf16.mxu0 %v845
        %1966 = vmatmul.mubr.bf16.gmra.mrb[0].mxu0 %v844
        %v1967 = vpop.f32.mrb[0].mxu0
        %v1968 = vadd.f32 %v1615, %v1967
        %v1969 = vpop.f32.mrb[0].mxu0
        %v1970 = vadd.f32 %v1617, %v1969
        %v1971 = vpop.f32.mrb[0].mxu0
        %v1972 = vadd.f32 %v1619, %v1971
        %v1973 = vpop.f32.mrb[0].mxu0
        %v1974 = vadd.f32 %v1621, %v1973
        %1975 = vmatprep.mubr.bf16.mxu0 %v847
        %1976 = vmatmul.mubr.bf16.gmra.mrb[0].mxu0 %v846
        %v1977 = vpop.f32.mrb[0].mxu0
        %v1978 = vadd.f32 %v1625, %v1977
        %v1979 = vpop.f32.mrb[0].mxu0
        %v1980 = vadd.f32 %v1627, %v1979
        %v1981 = vpop.f32.mrb[0].mxu0
        %v1982 = vadd.f32 %v1629, %v1981
        %v1983 = vpop.f32.mrb[0].mxu0
        %v1984 = vadd.f32 %v1631, %v1983
        %1985 = vmatprep.mubr.bf16.mxu0 %v849
        %1986 = vmatmul.mubr.bf16.gmra.mrb[0].mxu0 %v848
        %v1987 = vpop.f32.mrb[0].mxu0
        %v1988 = vadd.f32 %v1635, %v1987
        %v1989 = vpop.f32.mrb[0].mxu0
        %v1990 = vadd.f32 %v1637, %v1989
        %v1991 = vpop.f32.mrb[0].mxu0
        %v1992 = vadd.f32 %v1639, %v1991
        %v1993 = vpop.f32.mrb[0].mxu0
        %v1994 = vadd.f32 %v1641, %v1993
        %1995 = vmatprep.mubr.bf16.mxu0 %v851
        %1996 = vmatmul.mubr.bf16.gmra.mrb[0].mxu0 %v850
        %v1997 = vpop.f32.mrb[0].mxu0
        %v1998 = vadd.f32 %v1645, %v1997
        %v1999 = vpop.f32.mrb[0].mxu0
        %v2000 = vadd.f32 %v1647, %v1999
        %v2001 = vpop.f32.mrb[0].mxu0
        %v2002 = vadd.f32 %v1649, %v2001
        %v2003 = vpop.f32.mrb[0].mxu0
        %v2004 = vadd.f32 %v1651, %v2003
        %2005 = vmatprep.mubr.bf16.mxu0 %v853
        %2006 = vmatmul.mubr.bf16.gmra.mrb[0].mxu0 %v852
        %v2007 = vpop.f32.mrb[0].mxu0
        %v2008 = vadd.f32 %v1655, %v2007
        %v2009 = vpop.f32.mrb[0].mxu0
        %v2010 = vadd.f32 %v1657, %v2009
        %v2011 = vpop.f32.mrb[0].mxu0
        %v2012 = vadd.f32 %v1659, %v2011
        %v2013 = vpop.f32.mrb[0].mxu0
        %v2014 = vadd.f32 %v1661, %v2013
        %2015 = vmatprep.mubr.bf16.mxu0 %v855
        %2016 = vmatmul.mubr.bf16.gmra.mrb[0].mxu0 %v854
        %v2017 = vpop.f32.mrb[0].mxu0
        %v2018 = vadd.f32 %v1665, %v2017
        %v2019 = vpop.f32.mrb[0].mxu0
        %v2020 = vadd.f32 %v1667, %v2019
        %v2021 = vpop.f32.mrb[0].mxu0
        %v2022 = vadd.f32 %v1669, %v2021
        %v2023 = vpop.f32.mrb[0].mxu0
        %v2024 = vadd.f32 %v1671, %v2023
        %2025 = vdwg.mxu0
        %s2026 = scalar_lea.vmem %s5, 16
        %v2027 = vld [vmem:[%s2026] ss:$4 sm:$0x3]
        %s2028 = scalar_lea.vmem [#allocation6], 256
        %v2029 = vld [vmem:[%s2028] sm:$0xff]
        %v2030 = vld [vmem:[%s2028 + $0x8] sm:$0xff]
        %v2031 = vld [vmem:[%s2028 + $0x10] sm:$0xff]
        %v2032 = vld [vmem:[%s2028 + $0x18] sm:$0xff]
        %v2033 = vld [vmem:[%s2028 + $0x20] sm:$0xff]
        %v2034 = vld [vmem:[%s2028 + $0x28] sm:$0xff]
        %v2035 = vld [vmem:[%s2028 + $0x30] sm:$0xff]
        %v2036 = vld [vmem:[%s2028 + $0x38] sm:$0xff]
        %v2037 = vld [vmem:[%s2028 + $0x40] sm:$0xff]
        %v2038 = vld [vmem:[%s2028 + $0x48] sm:$0xff]
        %v2039 = vld [vmem:[%s2028 + $0x50] sm:$0xff]
        %v2040 = vld [vmem:[%s2028 + $0x58] sm:$0xff]
        %v2041 = vld [vmem:[%s2028 + $0x60] sm:$0xff]
        %v2042 = vld [vmem:[%s2028 + $0x68] sm:$0xff]
        %v2043 = vld [vmem:[%s2028 + $0x70] sm:$0xff]
        %v2044 = vld [vmem:[%s2028 + $0x78] sm:$0xff]
        %v2046 = vlaneseq
        %v2047 = vshrl.u32 %v2046, 7
        %v2048 = vsub.s32 0, %v2047
        %v2049 = vrot.slane %v2027, %v2048
        %v2050 = vlaneseq
        %v2051 = vshrl.u32 %v2050, 7
        %v2052 = vsub.s32 1, %v2051
        %v2053 = vrot.slane %v2027, %v2052
        %v2072 = vunpack.c.l.b16 %v2029
        %v2073 = vunpack.c.h.b16 %v2029
        %v2074 = vunpack.c.l.b16 %v2030
        %v2075 = vunpack.c.h.b16 %v2030
        %v2076 = vunpack.c.l.b16 %v2031
        %v2077 = vunpack.c.h.b16 %v2031
        %v2078 = vunpack.c.l.b16 %v2032
        %v2079 = vunpack.c.h.b16 %v2032
        %v2080 = vunpack.c.l.b16 %v2033
        %v2081 = vunpack.c.h.b16 %v2033
        %v2082 = vunpack.c.l.b16 %v2034
        %v2083 = vunpack.c.h.b16 %v2034
        %v2084 = vunpack.c.l.b16 %v2035
        %v2085 = vunpack.c.h.b16 %v2035
        %v2086 = vunpack.c.l.b16 %v2036
        %v2087 = vunpack.c.h.b16 %v2036
        %v2088 = vunpack.c.l.b16 %v2037
        %v2089 = vunpack.c.h.b16 %v2037
        %v2090 = vunpack.c.l.b16 %v2038
        %v2091 = vunpack.c.h.b16 %v2038
        %v2092 = vunpack.c.l.b16 %v2039
        %v2093 = vunpack.c.h.b16 %v2039
        %v2094 = vunpack.c.l.b16 %v2040
        %v2095 = vunpack.c.h.b16 %v2040
        %v2096 = vunpack.c.l.b16 %v2041
        %v2097 = vunpack.c.h.b16 %v2041
        %v2098 = vunpack.c.l.b16 %v2042
        %v2099 = vunpack.c.h.b16 %v2042
        %v2100 = vunpack.c.l.b16 %v2043
        %v2101 = vunpack.c.h.b16 %v2043
        %v2102 = vunpack.c.l.b16 %v2044
        %v2103 = vunpack.c.h.b16 %v2044
        %v2104 = vpack.c.b16 %v2074, %v2072
        %v2105 = vpack.c.b16 %v2075, %v2073
        %v2106 = vpack.c.b16 %v2078, %v2076
        %v2107 = vpack.c.b16 %v2079, %v2077
        %v2108 = vpack.c.b16 %v2082, %v2080
        %v2109 = vpack.c.b16 %v2083, %v2081
        %v2110 = vpack.c.b16 %v2086, %v2084
        %v2111 = vpack.c.b16 %v2087, %v2085
        %v2112 = vpack.c.b16 %v2090, %v2088
        %v2113 = vpack.c.b16 %v2091, %v2089
        %v2114 = vpack.c.b16 %v2094, %v2092
        %v2115 = vpack.c.b16 %v2095, %v2093
        %v2116 = vpack.c.b16 %v2098, %v2096
        %v2117 = vpack.c.b16 %v2099, %v2097
        %v2118 = vpack.c.b16 %v2102, %v2100
        %v2119 = vpack.c.b16 %v2103, %v2101
        %2136 = vmatprep.subr.bf16.mxu0 %v2105
        %2137 = vmatpush1.bf16.msra.mxu0 %v2104
        %2138 = vmatprep.subr.bf16.mxu0 %v2107
        %2139 = vmatpush1.bf16.msra.mxu0 %v2106
        %2140 = vmatprep.subr.bf16.mxu0 %v2109
        %2141 = vmatpush1.bf16.msra.mxu0 %v2108
        %2142 = vmatprep.subr.bf16.mxu0 %v2111
        %2143 = vmatpush1.bf16.msra.mxu0 %v2110
        %2144 = vmatprep.subr.bf16.mxu0 %v2113
        %2145 = vmatpush1.bf16.msra.mxu0 %v2112
        %2146 = vmatprep.subr.bf16.mxu0 %v2115
        %2147 = vmatpush1.bf16.msra.mxu0 %v2114
        %2148 = vmatprep.subr.bf16.mxu0 %v2117
        %2149 = vmatpush1.bf16.msra.mxu0 %v2116
        %2150 = vmatprep.subr.bf16.mxu0 %v2119
        %2151 = vmatpush1.bf16.msra.mxu0 %v2118
        %2152 = vmatprep.subr.bf16.mxu0 0
        %2153 = vmatpush1.bf16.msra.mxu0 0
        %2154 = vmatprep.subr.bf16.mxu0 0
        %2155 = vmatpush1.bf16.msra.mxu0 0
        %2156 = vmatprep.subr.bf16.mxu0 0
        %2157 = vmatpush1.bf16.msra.mxu0 0
        %2158 = vmatprep.subr.bf16.mxu0 0
        %2159 = vmatpush1.bf16.msra.mxu0 0
        %2160 = vmatprep.subr.bf16.mxu0 0
        %2161 = vmatpush1.bf16.msra.mxu0 0
        %2162 = vmatprep.subr.bf16.mxu0 0
        %2163 = vmatpush1.bf16.msra.mxu0 0
        %2164 = vmatprep.subr.bf16.mxu0 0
        %2165 = vmatpush1.bf16.msra.mxu0 0
        %2166 = vmatprep.subr.bf16.mxu0 0
        %2167 = vmatpush1.bf16.msra.mxu0 0
        %2168 = vmatprep.mubr.bf16.mxu0 0
        %2169 = vmatmul.mubr.bf16.gmra.mrb[0].mxu0 %v455
        %v2170 = vpop.f32.mrb[0].mxu0
        %v2171 = vadd.f32 %v2049, %v2170
        %v2172 = vpop.f32.mrb[0].mxu0
        %v2173 = vadd.f32 %v2053, %v2172
        %v2174 = vpop.f32.mrb[0].mxu0
        %v2175 = vadd.f32 %v2049, %v2174
        %v2176 = vpop.f32.mrb[0].mxu0
        %v2177 = vadd.f32 %v2053, %v2176
        %2178 = vmatprep.mubr.bf16.mxu0 0
        %2179 = vmatmul.mubr.bf16.gmra.mrb[0].mxu0 %v456
        %v2180 = vpop.f32.mrb[0].mxu0
        %v2181 = vadd.f32 %v2049, %v2180
        %v2182 = vpop.f32.mrb[0].mxu0
        %v2183 = vadd.f32 %v2053, %v2182
        %v2184 = vpop.f32.mrb[0].mxu0
        %v2185 = vadd.f32 %v2049, %v2184
        %v2186 = vpop.f32.mrb[0].mxu0
        %v2187 = vadd.f32 %v2053, %v2186
        %2188 = vmatprep.mubr.bf16.mxu0 0
        %2189 = vmatmul.mubr.bf16.gmra.mrb[0].mxu0 %v457
        %v2190 = vpop.f32.mrb[0].mxu0
        %v2191 = vadd.f32 %v2049, %v2190
        %v2192 = vpop.f32.mrb[0].mxu0
        %v2193 = vadd.f32 %v2053, %v2192
        %v2194 = vpop.f32.mrb[0].mxu0
        %v2195 = vadd.f32 %v2049, %v2194
        %v2196 = vpop.f32.mrb[0].mxu0
        %v2197 = vadd.f32 %v2053, %v2196
        %2198 = vmatprep.mubr.bf16.mxu0 0
        %2199 = vmatmul.mubr.bf16.gmra.mrb[0].mxu0 %v458
        %v2200 = vpop.f32.mrb[0].mxu0
        %v2201 = vadd.f32 %v2049, %v2200
        %v2202 = vpop.f32.mrb[0].mxu0
        %v2203 = vadd.f32 %v2053, %v2202
        %v2204 = vpop.f32.mrb[0].mxu0
        %v2205 = vadd.f32 %v2049, %v2204
        %v2206 = vpop.f32.mrb[0].mxu0
        %v2207 = vadd.f32 %v2053, %v2206
        %2208 = vmatprep.mubr.bf16.mxu0 0
        %2209 = vmatmul.mubr.bf16.gmra.mrb[0].mxu0 %v459
        %v2210 = vpop.f32.mrb[0].mxu0
        %v2211 = vadd.f32 %v2049, %v2210
        %v2212 = vpop.f32.mrb[0].mxu0
        %v2213 = vadd.f32 %v2053, %v2212
        %v2214 = vpop.f32.mrb[0].mxu0
        %v2215 = vadd.f32 %v2049, %v2214
        %v2216 = vpop.f32.mrb[0].mxu0
        %v2217 = vadd.f32 %v2053, %v2216
        %2218 = vmatprep.mubr.bf16.mxu0 0
        %2219 = vmatmul.mubr.bf16.gmra.mrb[0].mxu0 %v460
        %v2220 = vpop.f32.mrb[0].mxu0
        %v2221 = vadd.f32 %v2049, %v2220
        %v2222 = vpop.f32.mrb[0].mxu0
        %v2223 = vadd.f32 %v2053, %v2222
        %v2224 = vpop.f32.mrb[0].mxu0
        %v2225 = vadd.f32 %v2049, %v2224
        %v2226 = vpop.f32.mrb[0].mxu0
        %v2227 = vadd.f32 %v2053, %v2226
        %2228 = vmatprep.mubr.bf16.mxu0 0
        %2229 = vmatmul.mubr.bf16.gmra.mrb[0].mxu0 %v461
        %v2230 = vpop.f32.mrb[0].mxu0
        %v2231 = vadd.f32 %v2049, %v2230
        %v2232 = vpop.f32.mrb[0].mxu0
        %v2233 = vadd.f32 %v2053, %v2232
        %v2234 = vpop.f32.mrb[0].mxu0
        %v2235 = vadd.f32 %v2049, %v2234
        %v2236 = vpop.f32.mrb[0].mxu0
        %v2237 = vadd.f32 %v2053, %v2236
        %2238 = vmatprep.mubr.bf16.mxu0 0
        %2239 = vmatmul.mubr.bf16.gmra.mrb[0].mxu0 %v462
        %v2240 = vpop.f32.mrb[0].mxu0
        %v2241 = vadd.f32 %v2049, %v2240
        %v2242 = vpop.f32.mrb[0].mxu0
        %v2243 = vadd.f32 %v2053, %v2242
        %v2244 = vpop.f32.mrb[0].mxu0
        %v2245 = vadd.f32 %v2049, %v2244
        %v2246 = vpop.f32.mrb[0].mxu0
        %v2247 = vadd.f32 %v2053, %v2246
        %2248 = vmatprep.mubr.bf16.mxu0 0
        %2249 = vmatmul.mubr.bf16.gmra.mrb[0].mxu0 %v463
        %v2250 = vpop.f32.mrb[0].mxu0
        %v2251 = vadd.f32 %v2049, %v2250
        %v2252 = vpop.f32.mrb[0].mxu0
        %v2253 = vadd.f32 %v2053, %v2252
        %v2254 = vpop.f32.mrb[0].mxu0
        %v2255 = vadd.f32 %v2049, %v2254
        %v2256 = vpop.f32.mrb[0].mxu0
        %v2257 = vadd.f32 %v2053, %v2256
        %2258 = vmatprep.mubr.bf16.mxu0 0
        %2259 = vmatmul.mubr.bf16.gmra.mrb[0].mxu0 %v464
        %v2260 = vpop.f32.mrb[0].mxu0
        %v2261 = vadd.f32 %v2049, %v2260
        %v2262 = vpop.f32.mrb[0].mxu0
        %v2263 = vadd.f32 %v2053, %v2262
        %v2264 = vpop.f32.mrb[0].mxu0
        %v2265 = vadd.f32 %v2049, %v2264
        %v2266 = vpop.f32.mrb[0].mxu0
        %v2267 = vadd.f32 %v2053, %v2266
        %2268 = vmatprep.mubr.bf16.mxu0 0
        %2269 = vmatmul.mubr.bf16.gmra.mrb[0].mxu0 %v465
        %v2270 = vpop.f32.mrb[0].mxu0
        %v2271 = vadd.f32 %v2049, %v2270
        %v2272 = vpop.f32.mrb[0].mxu0
        %v2273 = vadd.f32 %v2053, %v2272
        %v2274 = vpop.f32.mrb[0].mxu0
        %v2275 = vadd.f32 %v2049, %v2274
        %v2276 = vpop.f32.mrb[0].mxu0
        %v2277 = vadd.f32 %v2053, %v2276
        %2278 = vmatprep.mubr.bf16.mxu0 0
        %2279 = vmatmul.mubr.bf16.gmra.mrb[0].mxu0 %v466
        %v2280 = vpop.f32.mrb[0].mxu0
        %v2281 = vadd.f32 %v2049, %v2280
        %v2282 = vpop.f32.mrb[0].mxu0
        %v2283 = vadd.f32 %v2053, %v2282
        %v2284 = vpop.f32.mrb[0].mxu0
        %v2285 = vadd.f32 %v2049, %v2284
        %v2286 = vpop.f32.mrb[0].mxu0
        %v2287 = vadd.f32 %v2053, %v2286
        %2288 = vmatprep.mubr.bf16.mxu0 0
        %2289 = vmatmul.mubr.bf16.gmra.mrb[0].mxu0 %v467
        %v2290 = vpop.f32.mrb[0].mxu0
        %v2291 = vadd.f32 %v2049, %v2290
        %v2292 = vpop.f32.mrb[0].mxu0
        %v2293 = vadd.f32 %v2053, %v2292
        %v2294 = vpop.f32.mrb[0].mxu0
        %v2295 = vadd.f32 %v2049, %v2294
        %v2296 = vpop.f32.mrb[0].mxu0
        %v2297 = vadd.f32 %v2053, %v2296
        %2298 = vmatprep.mubr.bf16.mxu0 0
        %2299 = vmatmul.mubr.bf16.gmra.mrb[0].mxu0 %v468
        %v2300 = vpop.f32.mrb[0].mxu0
        %v2301 = vadd.f32 %v2049, %v2300
        %v2302 = vpop.f32.mrb[0].mxu0
        %v2303 = vadd.f32 %v2053, %v2302
        %v2304 = vpop.f32.mrb[0].mxu0
        %v2305 = vadd.f32 %v2049, %v2304
        %v2306 = vpop.f32.mrb[0].mxu0
        %v2307 = vadd.f32 %v2053, %v2306
        %2308 = vmatprep.mubr.bf16.mxu0 0
        %2309 = vmatmul.mubr.bf16.gmra.mrb[0].mxu0 %v469
        %v2310 = vpop.f32.mrb[0].mxu0
        %v2311 = vadd.f32 %v2049, %v2310
        %v2312 = vpop.f32.mrb[0].mxu0
        %v2313 = vadd.f32 %v2053, %v2312
        %v2314 = vpop.f32.mrb[0].mxu0
        %v2315 = vadd.f32 %v2049, %v2314
        %v2316 = vpop.f32.mrb[0].mxu0
        %v2317 = vadd.f32 %v2053, %v2316
        %2318 = vmatprep.mubr.bf16.mxu0 0
        %2319 = vmatmul.mubr.bf16.gmra.mrb[0].mxu0 %v470
        %v2320 = vpop.f32.mrb[0].mxu0
        %v2321 = vadd.f32 %v2049, %v2320
        %v2322 = vpop.f32.mrb[0].mxu0
        %v2323 = vadd.f32 %v2053, %v2322
        %v2324 = vpop.f32.mrb[0].mxu0
        %v2325 = vadd.f32 %v2049, %v2324
        %v2326 = vpop.f32.mrb[0].mxu0
        %v2327 = vadd.f32 %v2053, %v2326
        %2328 = vdwg.mxu0
        %v2329 = vmax.f32 %v2171, 0.0
        %v2330 = vmax.f32 %v2173, 0.0
        %v2331 = vmax.f32 %v2175, 0.0
        %v2332 = vmax.f32 %v2177, 0.0
        %v2333 = vmax.f32 %v2181, 0.0
        %v2334 = vmax.f32 %v2183, 0.0
        %v2335 = vmax.f32 %v2185, 0.0
        %v2336 = vmax.f32 %v2187, 0.0
        %v2337 = vmax.f32 %v2191, 0.0
        %v2338 = vmax.f32 %v2193, 0.0
        %v2339 = vmax.f32 %v2195, 0.0
        %v2340 = vmax.f32 %v2197, 0.0
        %v2341 = vmax.f32 %v2201, 0.0
        %v2342 = vmax.f32 %v2203, 0.0
        %v2343 = vmax.f32 %v2205, 0.0
        %v2344 = vmax.f32 %v2207, 0.0
        %v2345 = vmax.f32 %v2211, 0.0
        %v2346 = vmax.f32 %v2213, 0.0
        %v2347 = vmax.f32 %v2215, 0.0
        %v2348 = vmax.f32 %v2217, 0.0
        %v2349 = vmax.f32 %v2221, 0.0
        %v2350 = vmax.f32 %v2223, 0.0
        %v2351 = vmax.f32 %v2225, 0.0
        %v2352 = vmax.f32 %v2227, 0.0
        %v2353 = vmax.f32 %v2231, 0.0
        %v2354 = vmax.f32 %v2233, 0.0
        %v2355 = vmax.f32 %v2235, 0.0
        %v2356 = vmax.f32 %v2237, 0.0
        %v2357 = vmax.f32 %v2241, 0.0
        %v2358 = vmax.f32 %v2243, 0.0
        %v2359 = vmax.f32 %v2245, 0.0
        %v2360 = vmax.f32 %v2247, 0.0
        %v2361 = vmax.f32 %v2251, 0.0
        %v2362 = vmax.f32 %v2253, 0.0
        %v2363 = vmax.f32 %v2255, 0.0
        %v2364 = vmax.f32 %v2257, 0.0
        %v2365 = vmax.f32 %v2261, 0.0
        %v2366 = vmax.f32 %v2263, 0.0
        %v2367 = vmax.f32 %v2265, 0.0
        %v2368 = vmax.f32 %v2267, 0.0
        %v2369 = vmax.f32 %v2271, 0.0
        %v2370 = vmax.f32 %v2273, 0.0
        %v2371 = vmax.f32 %v2275, 0.0
        %v2372 = vmax.f32 %v2277, 0.0
        %v2373 = vmax.f32 %v2281, 0.0
        %v2374 = vmax.f32 %v2283, 0.0
        %v2375 = vmax.f32 %v2285, 0.0
        %v2376 = vmax.f32 %v2287, 0.0
        %v2377 = vmax.f32 %v2291, 0.0
        %v2378 = vmax.f32 %v2293, 0.0
        %v2379 = vmax.f32 %v2295, 0.0
        %v2380 = vmax.f32 %v2297, 0.0
        %v2381 = vmax.f32 %v2301, 0.0
        %v2382 = vmax.f32 %v2303, 0.0
        %v2383 = vmax.f32 %v2305, 0.0
        %v2384 = vmax.f32 %v2307, 0.0
        %v2385 = vmax.f32 %v2311, 0.0
        %v2386 = vmax.f32 %v2313, 0.0
        %v2387 = vmax.f32 %v2315, 0.0
        %v2388 = vmax.f32 %v2317, 0.0
        %v2389 = vmax.f32 %v2321, 0.0
        %v2390 = vmax.f32 %v2323, 0.0
        %v2391 = vmax.f32 %v2325, 0.0
        %v2392 = vmax.f32 %v2327, 0.0
        %v2393 = vpack.c.bf16 %v2331, %v2329
        %v2394 = vpack.c.bf16 %v2332, %v2330
        %v2395 = vpack.c.bf16 %v2335, %v2333
        %v2396 = vpack.c.bf16 %v2336, %v2334
        %v2397 = vpack.c.bf16 %v2339, %v2337
        %v2398 = vpack.c.bf16 %v2340, %v2338
        %v2399 = vpack.c.bf16 %v2343, %v2341
        %v2400 = vpack.c.bf16 %v2344, %v2342
        %v2401 = vpack.c.bf16 %v2347, %v2345
        %v2402 = vpack.c.bf16 %v2348, %v2346
        %v2403 = vpack.c.bf16 %v2351, %v2349
        %v2404 = vpack.c.bf16 %v2352, %v2350
        %v2405 = vpack.c.bf16 %v2355, %v2353
        %v2406 = vpack.c.bf16 %v2356, %v2354
        %v2407 = vpack.c.bf16 %v2359, %v2357
        %v2408 = vpack.c.bf16 %v2360, %v2358
        %v2409 = vpack.c.bf16 %v2363, %v2361
        %v2410 = vpack.c.bf16 %v2364, %v2362
        %v2411 = vpack.c.bf16 %v2367, %v2365
        %v2412 = vpack.c.bf16 %v2368, %v2366
        %v2413 = vpack.c.bf16 %v2371, %v2369
        %v2414 = vpack.c.bf16 %v2372, %v2370
        %v2415 = vpack.c.bf16 %v2375, %v2373
        %v2416 = vpack.c.bf16 %v2376, %v2374
        %v2417 = vpack.c.bf16 %v2379, %v2377
        %v2418 = vpack.c.bf16 %v2380, %v2378
        %v2419 = vpack.c.bf16 %v2383, %v2381
        %v2420 = vpack.c.bf16 %v2384, %v2382
        %v2421 = vpack.c.bf16 %v2387, %v2385
        %v2422 = vpack.c.bf16 %v2388, %v2386
        %v2423 = vpack.c.bf16 %v2391, %v2389
        %v2424 = vpack.c.bf16 %v2392, %v2390
        %s2425 = scalar_lea.vmem [#allocation8], 512
        %v2426 = vld [vmem:[%s2425] sm:$0xff]
        %v2427 = vld [vmem:[%s2425 + $0x8] sm:$0xff]
        %v2428 = vld [vmem:[%s2425 + $0x10] sm:$0xff]
        %v2429 = vld [vmem:[%s2425 + $0x18] sm:$0xff]
        %v2430 = vld [vmem:[%s2425 + $0x20] sm:$0xff]
        %v2431 = vld [vmem:[%s2425 + $0x28] sm:$0xff]
        %v2432 = vld [vmem:[%s2425 + $0x30] sm:$0xff]
        %v2433 = vld [vmem:[%s2425 + $0x38] sm:$0xff]
        %v2434 = vld [vmem:[%s2425 + $0x40] sm:$0xff]
        %v2435 = vld [vmem:[%s2425 + $0x48] sm:$0xff]
        %v2436 = vld [vmem:[%s2425 + $0x50] sm:$0xff]
        %v2437 = vld [vmem:[%s2425 + $0x58] sm:$0xff]
        %v2438 = vld [vmem:[%s2425 + $0x60] sm:$0xff]
        %v2439 = vld [vmem:[%s2425 + $0x68] sm:$0xff]
        %v2440 = vld [vmem:[%s2425 + $0x70] sm:$0xff]
        %v2441 = vld [vmem:[%s2425 + $0x78] sm:$0xff]
        %v2442 = vld [vmem:[%s2425 + $0x80] sm:$0xff]
        %v2443 = vld [vmem:[%s2425 + $0x88] sm:$0xff]
        %v2444 = vld [vmem:[%s2425 + $0x90] sm:$0xff]
        %v2445 = vld [vmem:[%s2425 + $0x98] sm:$0xff]
        %v2446 = vld [vmem:[%s2425 + $0xa0] sm:$0xff]
        %v2447 = vld [vmem:[%s2425 + $0xa8] sm:$0xff]
        %v2448 = vld [vmem:[%s2425 + $0xb0] sm:$0xff]
        %v2449 = vld [vmem:[%s2425 + $0xb8] sm:$0xff]
        %v2450 = vld [vmem:[%s2425 + $0xc0] sm:$0xff]
        %v2451 = vld [vmem:[%s2425 + $0xc8] sm:$0xff]
        %v2452 = vld [vmem:[%s2425 + $0xd0] sm:$0xff]
        %v2453 = vld [vmem:[%s2425 + $0xd8] sm:$0xff]
        %v2454 = vld [vmem:[%s2425 + $0xe0] sm:$0xff]
        %v2455 = vld [vmem:[%s2425 + $0xe8] sm:$0xff]
        %v2456 = vld [vmem:[%s2425 + $0xf0] sm:$0xff]
        %v2457 = vld [vmem:[%s2425 + $0xf8] sm:$0xff]
        %v2490 = vunpack.c.l.b16 %v2426
        %v2491 = vunpack.c.h.b16 %v2426
        %v2492 = vunpack.c.l.b16 %v2427
        %v2493 = vunpack.c.h.b16 %v2427
        %v2494 = vunpack.c.l.b16 %v2428
        %v2495 = vunpack.c.h.b16 %v2428
        %v2496 = vunpack.c.l.b16 %v2429
        %v2497 = vunpack.c.h.b16 %v2429
        %v2498 = vunpack.c.l.b16 %v2430
        %v2499 = vunpack.c.h.b16 %v2430
        %v2500 = vunpack.c.l.b16 %v2431
        %v2501 = vunpack.c.h.b16 %v2431
        %v2502 = vunpack.c.l.b16 %v2432
        %v2503 = vunpack.c.h.b16 %v2432
        %v2504 = vunpack.c.l.b16 %v2433
        %v2505 = vunpack.c.h.b16 %v2433
        %v2506 = vunpack.c.l.b16 %v2434
        %v2507 = vunpack.c.h.b16 %v2434
        %v2508 = vunpack.c.l.b16 %v2435
        %v2509 = vunpack.c.h.b16 %v2435
        %v2510 = vunpack.c.l.b16 %v2436
        %v2511 = vunpack.c.h.b16 %v2436
        %v2512 = vunpack.c.l.b16 %v2437
        %v2513 = vunpack.c.h.b16 %v2437
        %v2514 = vunpack.c.l.b16 %v2438
        %v2515 = vunpack.c.h.b16 %v2438
        %v2516 = vunpack.c.l.b16 %v2439
        %v2517 = vunpack.c.h.b16 %v2439
        %v2518 = vunpack.c.l.b16 %v2440
        %v2519 = vunpack.c.h.b16 %v2440
        %v2520 = vunpack.c.l.b16 %v2441
        %v2521 = vunpack.c.h.b16 %v2441
        %v2522 = vunpack.c.l.b16 %v2442
        %v2523 = vunpack.c.h.b16 %v2442
        %v2524 = vunpack.c.l.b16 %v2443
        %v2525 = vunpack.c.h.b16 %v2443
        %v2526 = vunpack.c.l.b16 %v2444
        %v2527 = vunpack.c.h.b16 %v2444
        %v2528 = vunpack.c.l.b16 %v2445
        %v2529 = vunpack.c.h.b16 %v2445
        %v2530 = vunpack.c.l.b16 %v2446
        %v2531 = vunpack.c.h.b16 %v2446
        %v2532 = vunpack.c.l.b16 %v2447
        %v2533 = vunpack.c.h.b16 %v2447
        %v2534 = vunpack.c.l.b16 %v2448
        %v2535 = vunpack.c.h.b16 %v2448
        %v2536 = vunpack.c.l.b16 %v2449
        %v2537 = vunpack.c.h.b16 %v2449
        %v2538 = vunpack.c.l.b16 %v2450
        %v2539 = vunpack.c.h.b16 %v2450
        %v2540 = vunpack.c.l.b16 %v2451
        %v2541 = vunpack.c.h.b16 %v2451
        %v2542 = vunpack.c.l.b16 %v2452
        %v2543 = vunpack.c.h.b16 %v2452
        %v2544 = vunpack.c.l.b16 %v2453
        %v2545 = vunpack.c.h.b16 %v2453
        %v2546 = vunpack.c.l.b16 %v2454
        %v2547 = vunpack.c.h.b16 %v2454
        %v2548 = vunpack.c.l.b16 %v2455
        %v2549 = vunpack.c.h.b16 %v2455
        %v2550 = vunpack.c.l.b16 %v2456
        %v2551 = vunpack.c.h.b16 %v2456
        %v2552 = vunpack.c.l.b16 %v2457
        %v2553 = vunpack.c.h.b16 %v2457
        %v2554 = vpack.c.b16 %v2492, %v2490
        %v2555 = vpack.c.b16 %v2493, %v2491
        %v2556 = vpack.c.b16 %v2496, %v2494
        %v2557 = vpack.c.b16 %v2497, %v2495
        %v2558 = vpack.c.b16 %v2500, %v2498
        %v2559 = vpack.c.b16 %v2501, %v2499
        %v2560 = vpack.c.b16 %v2504, %v2502
        %v2561 = vpack.c.b16 %v2505, %v2503
        %v2562 = vpack.c.b16 %v2508, %v2506
        %v2563 = vpack.c.b16 %v2509, %v2507
        %v2564 = vpack.c.b16 %v2512, %v2510
        %v2565 = vpack.c.b16 %v2513, %v2511
        %v2566 = vpack.c.b16 %v2516, %v2514
        %v2567 = vpack.c.b16 %v2517, %v2515
        %v2568 = vpack.c.b16 %v2520, %v2518
        %v2569 = vpack.c.b16 %v2521, %v2519
        %v2570 = vpack.c.b16 %v2524, %v2522
        %v2571 = vpack.c.b16 %v2525, %v2523
        %v2572 = vpack.c.b16 %v2528, %v2526
        %v2573 = vpack.c.b16 %v2529, %v2527
        %v2574 = vpack.c.b16 %v2532, %v2530
        %v2575 = vpack.c.b16 %v2533, %v2531
        %v2576 = vpack.c.b16 %v2536, %v2534
        %v2577 = vpack.c.b16 %v2537, %v2535
        %v2578 = vpack.c.b16 %v2540, %v2538
        %v2579 = vpack.c.b16 %v2541, %v2539
        %v2580 = vpack.c.b16 %v2544, %v2542
        %v2581 = vpack.c.b16 %v2545, %v2543
        %v2582 = vpack.c.b16 %v2548, %v2546
        %v2583 = vpack.c.b16 %v2549, %v2547
        %v2584 = vpack.c.b16 %v2552, %v2550
        %v2585 = vpack.c.b16 %v2553, %v2551
        %2618 = vmatprep.subr.bf16.mxu0 %v2555
        %2619 = vmatpush1.bf16.msra.mxu0 %v2554
        %2620 = vmatprep.subr.bf16.mxu0 %v2557
        %2621 = vmatpush1.bf16.msra.mxu0 %v2556
        %2622 = vmatprep.subr.bf16.mxu0 %v2559
        %2623 = vmatpush1.bf16.msra.mxu0 %v2558
        %2624 = vmatprep.subr.bf16.mxu0 %v2561
        %2625 = vmatpush1.bf16.msra.mxu0 %v2560
        %2626 = vmatprep.subr.bf16.mxu0 %v2563
        %2627 = vmatpush1.bf16.msra.mxu0 %v2562
        %2628 = vmatprep.subr.bf16.mxu0 %v2565
        %2629 = vmatpush1.bf16.msra.mxu0 %v2564
        %2630 = vmatprep.subr.bf16.mxu0 %v2567
        %2631 = vmatpush1.bf16.msra.mxu0 %v2566
        %2632 = vmatprep.subr.bf16.mxu0 %v2569
        %2633 = vmatpush1.bf16.msra.mxu0 %v2568
        %2634 = vmatprep.subr.bf16.mxu0 %v2571
        %2635 = vmatpush1.bf16.msra.mxu0 %v2570
        %2636 = vmatprep.subr.bf16.mxu0 %v2573
        %2637 = vmatpush1.bf16.msra.mxu0 %v2572
        %2638 = vmatprep.subr.bf16.mxu0 %v2575
        %2639 = vmatpush1.bf16.msra.mxu0 %v2574
        %2640 = vmatprep.subr.bf16.mxu0 %v2577
        %2641 = vmatpush1.bf16.msra.mxu0 %v2576
        %2642 = vmatprep.subr.bf16.mxu0 %v2579
        %2643 = vmatpush1.bf16.msra.mxu0 %v2578
        %2644 = vmatprep.subr.bf16.mxu0 %v2581
        %2645 = vmatpush1.bf16.msra.mxu0 %v2580
        %2646 = vmatprep.subr.bf16.mxu0 %v2583
        %2647 = vmatpush1.bf16.msra.mxu0 %v2582
        %2648 = vmatprep.subr.bf16.mxu0 %v2585
        %2649 = vmatpush1.bf16.msra.mxu0 %v2584
        %2650 = vmatprep.mubr.bf16.mxu0 %v2394
        %2651 = vmatmul.mubr.bf16.gmra.mrb[0].mxu0 %v2393
        %v2652 = vpop.f32.mrb[0].mxu0
        %v2653 = vadd.f32 0.0, %v2652
        %v2654 = vpop.f32.mrb[0].mxu0
        %v2655 = vadd.f32 0.0, %v2654
        %v2656 = vpop.f32.mrb[0].mxu0
        %v2657 = vadd.f32 0.0, %v2656
        %v2658 = vpop.f32.mrb[0].mxu0
        %v2659 = vadd.f32 0.0, %v2658
        %2660 = vmatprep.mubr.bf16.mxu0 %v2396
        %2661 = vmatmul.mubr.bf16.gmra.mrb[0].mxu0 %v2395
        %v2662 = vpop.f32.mrb[0].mxu0
        %v2663 = vadd.f32 0.0, %v2662
        %v2664 = vpop.f32.mrb[0].mxu0
        %v2665 = vadd.f32 0.0, %v2664
        %v2666 = vpop.f32.mrb[0].mxu0
        %v2667 = vadd.f32 0.0, %v2666
        %v2668 = vpop.f32.mrb[0].mxu0
        %v2669 = vadd.f32 0.0, %v2668
        %2670 = vmatprep.mubr.bf16.mxu0 %v2398
        %2671 = vmatmul.mubr.bf16.gmra.mrb[0].mxu0 %v2397
        %v2672 = vpop.f32.mrb[0].mxu0
        %v2673 = vadd.f32 0.0, %v2672
        %v2674 = vpop.f32.mrb[0].mxu0
        %v2675 = vadd.f32 0.0, %v2674
        %v2676 = vpop.f32.mrb[0].mxu0
        %v2677 = vadd.f32 0.0, %v2676
        %v2678 = vpop.f32.mrb[0].mxu0
        %v2679 = vadd.f32 0.0, %v2678
        %2680 = vmatprep.mubr.bf16.mxu0 %v2400
        %2681 = vmatmul.mubr.bf16.gmra.mrb[0].mxu0 %v2399
        %v2682 = vpop.f32.mrb[0].mxu0
        %v2683 = vadd.f32 0.0, %v2682
        %v2684 = vpop.f32.mrb[0].mxu0
        %v2685 = vadd.f32 0.0, %v2684
        %v2686 = vpop.f32.mrb[0].mxu0
        %v2687 = vadd.f32 0.0, %v2686
        %v2688 = vpop.f32.mrb[0].mxu0
        %v2689 = vadd.f32 0.0, %v2688
        %2690 = vmatprep.mubr.bf16.mxu0 %v2402
        %2691 = vmatmul.mubr.bf16.gmra.mrb[0].mxu0 %v2401
        %v2692 = vpop.f32.mrb[0].mxu0
        %v2693 = vadd.f32 0.0, %v2692
        %v2694 = vpop.f32.mrb[0].mxu0
        %v2695 = vadd.f32 0.0, %v2694
        %v2696 = vpop.f32.mrb[0].mxu0
        %v2697 = vadd.f32 0.0, %v2696
        %v2698 = vpop.f32.mrb[0].mxu0
        %v2699 = vadd.f32 0.0, %v2698
        %2700 = vmatprep.mubr.bf16.mxu0 %v2404
        %2701 = vmatmul.mubr.bf16.gmra.mrb[0].mxu0 %v2403
        %v2702 = vpop.f32.mrb[0].mxu0
        %v2703 = vadd.f32 0.0, %v2702
        %v2704 = vpop.f32.mrb[0].mxu0
        %v2705 = vadd.f32 0.0, %v2704
        %v2706 = vpop.f32.mrb[0].mxu0
        %v2707 = vadd.f32 0.0, %v2706
        %v2708 = vpop.f32.mrb[0].mxu0
        %v2709 = vadd.f32 0.0, %v2708
        %2710 = vmatprep.mubr.bf16.mxu0 %v2406
        %2711 = vmatmul.mubr.bf16.gmra.mrb[0].mxu0 %v2405
        %v2712 = vpop.f32.mrb[0].mxu0
        %v2713 = vadd.f32 0.0, %v2712
        %v2714 = vpop.f32.mrb[0].mxu0
        %v2715 = vadd.f32 0.0, %v2714
        %v2716 = vpop.f32.mrb[0].mxu0
        %v2717 = vadd.f32 0.0, %v2716
        %v2718 = vpop.f32.mrb[0].mxu0
        %v2719 = vadd.f32 0.0, %v2718
        %2720 = vmatprep.mubr.bf16.mxu0 %v2408
        %2721 = vmatmul.mubr.bf16.gmra.mrb[0].mxu0 %v2407
        %v2722 = vpop.f32.mrb[0].mxu0
        %v2723 = vadd.f32 0.0, %v2722
        %v2724 = vpop.f32.mrb[0].mxu0
        %v2725 = vadd.f32 0.0, %v2724
        %v2726 = vpop.f32.mrb[0].mxu0
        %v2727 = vadd.f32 0.0, %v2726
        %v2728 = vpop.f32.mrb[0].mxu0
        %v2729 = vadd.f32 0.0, %v2728
        %2730 = vmatprep.mubr.bf16.mxu0 %v2410
        %2731 = vmatmul.mubr.bf16.gmra.mrb[0].mxu0 %v2409
        %v2732 = vpop.f32.mrb[0].mxu0
        %v2733 = vadd.f32 0.0, %v2732
        %v2734 = vpop.f32.mrb[0].mxu0
        %v2735 = vadd.f32 0.0, %v2734
        %v2736 = vpop.f32.mrb[0].mxu0
        %v2737 = vadd.f32 0.0, %v2736
        %v2738 = vpop.f32.mrb[0].mxu0
        %v2739 = vadd.f32 0.0, %v2738
        %2740 = vmatprep.mubr.bf16.mxu0 %v2412
        %2741 = vmatmul.mubr.bf16.gmra.mrb[0].mxu0 %v2411
        %v2742 = vpop.f32.mrb[0].mxu0
        %v2743 = vadd.f32 0.0, %v2742
        %v2744 = vpop.f32.mrb[0].mxu0
        %v2745 = vadd.f32 0.0, %v2744
        %v2746 = vpop.f32.mrb[0].mxu0
        %v2747 = vadd.f32 0.0, %v2746
        %v2748 = vpop.f32.mrb[0].mxu0
        %v2749 = vadd.f32 0.0, %v2748
        %2750 = vmatprep.mubr.bf16.mxu0 %v2414
        %2751 = vmatmul.mubr.bf16.gmra.mrb[0].mxu0 %v2413
        %v2752 = vpop.f32.mrb[0].mxu0
        %v2753 = vadd.f32 0.0, %v2752
        %v2754 = vpop.f32.mrb[0].mxu0
        %v2755 = vadd.f32 0.0, %v2754
        %v2756 = vpop.f32.mrb[0].mxu0
        %v2757 = vadd.f32 0.0, %v2756
        %v2758 = vpop.f32.mrb[0].mxu0
        %v2759 = vadd.f32 0.0, %v2758
        %2760 = vmatprep.mubr.bf16.mxu0 %v2416
        %2761 = vmatmul.mubr.bf16.gmra.mrb[0].mxu0 %v2415
        %v2762 = vpop.f32.mrb[0].mxu0
        %v2763 = vadd.f32 0.0, %v2762
        %v2764 = vpop.f32.mrb[0].mxu0
        %v2765 = vadd.f32 0.0, %v2764
        %v2766 = vpop.f32.mrb[0].mxu0
        %v2767 = vadd.f32 0.0, %v2766
        %v2768 = vpop.f32.mrb[0].mxu0
        %v2769 = vadd.f32 0.0, %v2768
        %2770 = vmatprep.mubr.bf16.mxu0 %v2418
        %2771 = vmatmul.mubr.bf16.gmra.mrb[0].mxu0 %v2417
        %v2772 = vpop.f32.mrb[0].mxu0
        %v2773 = vadd.f32 0.0, %v2772
        %v2774 = vpop.f32.mrb[0].mxu0
        %v2775 = vadd.f32 0.0, %v2774
        %v2776 = vpop.f32.mrb[0].mxu0
        %v2777 = vadd.f32 0.0, %v2776
        %v2778 = vpop.f32.mrb[0].mxu0
        %v2779 = vadd.f32 0.0, %v2778
        %2780 = vmatprep.mubr.bf16.mxu0 %v2420
        %2781 = vmatmul.mubr.bf16.gmra.mrb[0].mxu0 %v2419
        %v2782 = vpop.f32.mrb[0].mxu0
        %v2783 = vadd.f32 0.0, %v2782
        %v2784 = vpop.f32.mrb[0].mxu0
        %v2785 = vadd.f32 0.0, %v2784
        %v2786 = vpop.f32.mrb[0].mxu0
        %v2787 = vadd.f32 0.0, %v2786
        %v2788 = vpop.f32.mrb[0].mxu0
        %v2789 = vadd.f32 0.0, %v2788
        %2790 = vmatprep.mubr.bf16.mxu0 %v2422
        %2791 = vmatmul.mubr.bf16.gmra.mrb[0].mxu0 %v2421
        %v2792 = vpop.f32.mrb[0].mxu0
        %v2793 = vadd.f32 0.0, %v2792
        %v2794 = vpop.f32.mrb[0].mxu0
        %v2795 = vadd.f32 0.0, %v2794
        %v2796 = vpop.f32.mrb[0].mxu0
        %v2797 = vadd.f32 0.0, %v2796
        %v2798 = vpop.f32.mrb[0].mxu0
        %v2799 = vadd.f32 0.0, %v2798
        %2800 = vmatprep.mubr.bf16.mxu0 %v2424
        %2801 = vmatmul.mubr.bf16.gmra.mrb[0].mxu0 %v2423
        %v2802 = vpop.f32.mrb[0].mxu0
        %v2803 = vadd.f32 0.0, %v2802
        %v2804 = vpop.f32.mrb[0].mxu0
        %v2805 = vadd.f32 0.0, %v2804
        %v2806 = vpop.f32.mrb[0].mxu0
        %v2807 = vadd.f32 0.0, %v2806
        %v2808 = vpop.f32.mrb[0].mxu0
        %v2809 = vadd.f32 0.0, %v2808
        %2810 = vdwg.mxu0
        %v2811 = vadd.f32 %v1868, %v2653
        %v2812 = vadd.f32 %v1870, %v2655
        %v2813 = vadd.f32 %v1872, %v2657
        %v2814 = vadd.f32 %v1874, %v2659
        %v2815 = vadd.f32 %v1878, %v2663
        %v2816 = vadd.f32 %v1880, %v2665
        %v2817 = vadd.f32 %v1882, %v2667
        %v2818 = vadd.f32 %v1884, %v2669
        %v2819 = vadd.f32 %v1888, %v2673
        %v2820 = vadd.f32 %v1890, %v2675
        %v2821 = vadd.f32 %v1892, %v2677
        %v2822 = vadd.f32 %v1894, %v2679
        %v2823 = vadd.f32 %v1898, %v2683
        %v2824 = vadd.f32 %v1900, %v2685
        %v2825 = vadd.f32 %v1902, %v2687
        %v2826 = vadd.f32 %v1904, %v2689
        %v2827 = vadd.f32 %v1908, %v2693
        %v2828 = vadd.f32 %v1910, %v2695
        %v2829 = vadd.f32 %v1912, %v2697
        %v2830 = vadd.f32 %v1914, %v2699
        %v2831 = vadd.f32 %v1918, %v2703
        %v2832 = vadd.f32 %v1920, %v2705
        %v2833 = vadd.f32 %v1922, %v2707
        %v2834 = vadd.f32 %v1924, %v2709
        %v2835 = vadd.f32 %v1928, %v2713
        %v2836 = vadd.f32 %v1930, %v2715
        %v2837 = vadd.f32 %v1932, %v2717
        %v2838 = vadd.f32 %v1934, %v2719
        %v2839 = vadd.f32 %v1938, %v2723
        %v2840 = vadd.f32 %v1940, %v2725
        %v2841 = vadd.f32 %v1942, %v2727
        %v2842 = vadd.f32 %v1944, %v2729
        %v2843 = vadd.f32 %v1948, %v2733
        %v2844 = vadd.f32 %v1950, %v2735
        %v2845 = vadd.f32 %v1952, %v2737
        %v2846 = vadd.f32 %v1954, %v2739
        %v2847 = vadd.f32 %v1958, %v2743
        %v2848 = vadd.f32 %v1960, %v2745
        %v2849 = vadd.f32 %v1962, %v2747
        %v2850 = vadd.f32 %v1964, %v2749
        %v2851 = vadd.f32 %v1968, %v2753
        %v2852 = vadd.f32 %v1970, %v2755
        %v2853 = vadd.f32 %v1972, %v2757
        %v2854 = vadd.f32 %v1974, %v2759
        %v2855 = vadd.f32 %v1978, %v2763
        %v2856 = vadd.f32 %v1980, %v2765
        %v2857 = vadd.f32 %v1982, %v2767
        %v2858 = vadd.f32 %v1984, %v2769
        %v2859 = vadd.f32 %v1988, %v2773
        %v2860 = vadd.f32 %v1990, %v2775
        %v2861 = vadd.f32 %v1992, %v2777
        %v2862 = vadd.f32 %v1994, %v2779
        %v2863 = vadd.f32 %v1998, %v2783
        %v2864 = vadd.f32 %v2000, %v2785
        %v2865 = vadd.f32 %v2002, %v2787
        %v2866 = vadd.f32 %v2004, %v2789
        %v2867 = vadd.f32 %v2008, %v2793
        %v2868 = vadd.f32 %v2010, %v2795
        %v2869 = vadd.f32 %v2012, %v2797
        %v2870 = vadd.f32 %v2014, %v2799
        %v2871 = vadd.f32 %v2018, %v2803
        %v2872 = vadd.f32 %v2020, %v2805
        %v2873 = vadd.f32 %v2022, %v2807
        %v2874 = vadd.f32 %v2024, %v2809
        %s2875 = scalar_lea.vmem %s5, 24
        %v2876 = vld [vmem:[%s2875] ss:$4 sm:$0x3]
        %s2877 = scalar_lea.vmem [#allocation6], 384
        %v2878 = vld [vmem:[%s2877] sm:$0xff]
        %v2879 = vld [vmem:[%s2877 + $0x8] sm:$0xff]
        %v2880 = vld [vmem:[%s2877 + $0x10] sm:$0xff]
        %v2881 = vld [vmem:[%s2877 + $0x18] sm:$0xff]
        %v2882 = vld [vmem:[%s2877 + $0x20] sm:$0xff]
        %v2883 = vld [vmem:[%s2877 + $0x28] sm:$0xff]
        %v2884 = vld [vmem:[%s2877 + $0x30] sm:$0xff]
        %v2885 = vld [vmem:[%s2877 + $0x38] sm:$0xff]
        %v2886 = vld [vmem:[%s2877 + $0x40] sm:$0xff]
        %v2887 = vld [vmem:[%s2877 + $0x48] sm:$0xff]
        %v2888 = vld [vmem:[%s2877 + $0x50] sm:$0xff]
        %v2889 = vld [vmem:[%s2877 + $0x58] sm:$0xff]
        %v2890 = vld [vmem:[%s2877 + $0x60] sm:$0xff]
        %v2891 = vld [vmem:[%s2877 + $0x68] sm:$0xff]
        %v2892 = vld [vmem:[%s2877 + $0x70] sm:$0xff]
        %v2893 = vld [vmem:[%s2877 + $0x78] sm:$0xff]
        %v2895 = vlaneseq
        %v2896 = vshrl.u32 %v2895, 7
        %v2897 = vsub.s32 0, %v2896
        %v2898 = vrot.slane %v2876, %v2897
        %v2899 = vlaneseq
        %v2900 = vshrl.u32 %v2899, 7
        %v2901 = vsub.s32 1, %v2900
        %v2902 = vrot.slane %v2876, %v2901
        %v2921 = vunpack.c.l.b16 %v2878
        %v2922 = vunpack.c.h.b16 %v2878
        %v2923 = vunpack.c.l.b16 %v2879
        %v2924 = vunpack.c.h.b16 %v2879
        %v2925 = vunpack.c.l.b16 %v2880
        %v2926 = vunpack.c.h.b16 %v2880
        %v2927 = vunpack.c.l.b16 %v2881
        %v2928 = vunpack.c.h.b16 %v2881
        %v2929 = vunpack.c.l.b16 %v2882
        %v2930 = vunpack.c.h.b16 %v2882
        %v2931 = vunpack.c.l.b16 %v2883
        %v2932 = vunpack.c.h.b16 %v2883
        %v2933 = vunpack.c.l.b16 %v2884
        %v2934 = vunpack.c.h.b16 %v2884
        %v2935 = vunpack.c.l.b16 %v2885
        %v2936 = vunpack.c.h.b16 %v2885
        %v2937 = vunpack.c.l.b16 %v2886
        %v2938 = vunpack.c.h.b16 %v2886
        %v2939 = vunpack.c.l.b16 %v2887
        %v2940 = vunpack.c.h.b16 %v2887
        %v2941 = vunpack.c.l.b16 %v2888
        %v2942 = vunpack.c.h.b16 %v2888
        %v2943 = vunpack.c.l.b16 %v2889
        %v2944 = vunpack.c.h.b16 %v2889
        %v2945 = vunpack.c.l.b16 %v2890
        %v2946 = vunpack.c.h.b16 %v2890
        %v2947 = vunpack.c.l.b16 %v2891
        %v2948 = vunpack.c.h.b16 %v2891
        %v2949 = vunpack.c.l.b16 %v2892
        %v2950 = vunpack.c.h.b16 %v2892
        %v2951 = vunpack.c.l.b16 %v2893
        %v2952 = vunpack.c.h.b16 %v2893
        %v2953 = vpack.c.b16 %v2923, %v2921
        %v2954 = vpack.c.b16 %v2924, %v2922
        %v2955 = vpack.c.b16 %v2927, %v2925
        %v2956 = vpack.c.b16 %v2928, %v2926
        %v2957 = vpack.c.b16 %v2931, %v2929
        %v2958 = vpack.c.b16 %v2932, %v2930
        %v2959 = vpack.c.b16 %v2935, %v2933
        %v2960 = vpack.c.b16 %v2936, %v2934
        %v2961 = vpack.c.b16 %v2939, %v2937
        %v2962 = vpack.c.b16 %v2940, %v2938
        %v2963 = vpack.c.b16 %v2943, %v2941
        %v2964 = vpack.c.b16 %v2944, %v2942
        %v2965 = vpack.c.b16 %v2947, %v2945
        %v2966 = vpack.c.b16 %v2948, %v2946
        %v2967 = vpack.c.b16 %v2951, %v2949
        %v2968 = vpack.c.b16 %v2952, %v2950
        %2985 = vmatprep.subr.bf16.mxu0 %v2954
        %2986 = vmatpush1.bf16.msra.mxu0 %v2953
        %2987 = vmatprep.subr.bf16.mxu0 %v2956
        %2988 = vmatpush1.bf16.msra.mxu0 %v2955
        %2989 = vmatprep.subr.bf16.mxu0 %v2958
        %2990 = vmatpush1.bf16.msra.mxu0 %v2957
        %2991 = vmatprep.subr.bf16.mxu0 %v2960
        %2992 = vmatpush1.bf16.msra.mxu0 %v2959
        %2993 = vmatprep.subr.bf16.mxu0 %v2962
        %2994 = vmatpush1.bf16.msra.mxu0 %v2961
        %2995 = vmatprep.subr.bf16.mxu0 %v2964
        %2996 = vmatpush1.bf16.msra.mxu0 %v2963
        %2997 = vmatprep.subr.bf16.mxu0 %v2966
        %2998 = vmatpush1.bf16.msra.mxu0 %v2965
        %2999 = vmatprep.subr.bf16.mxu0 %v2968
        %3000 = vmatpush1.bf16.msra.mxu0 %v2967
        %3001 = vmatprep.subr.bf16.mxu0 0
        %3002 = vmatpush1.bf16.msra.mxu0 0
        %3003 = vmatprep.subr.bf16.mxu0 0
        %3004 = vmatpush1.bf16.msra.mxu0 0
        %3005 = vmatprep.subr.bf16.mxu0 0
        %3006 = vmatpush1.bf16.msra.mxu0 0
        %3007 = vmatprep.subr.bf16.mxu0 0
        %3008 = vmatpush1.bf16.msra.mxu0 0
        %3009 = vmatprep.subr.bf16.mxu0 0
        %3010 = vmatpush1.bf16.msra.mxu0 0
        %3011 = vmatprep.subr.bf16.mxu0 0
        %3012 = vmatpush1.bf16.msra.mxu0 0
        %3013 = vmatprep.subr.bf16.mxu0 0
        %3014 = vmatpush1.bf16.msra.mxu0 0
        %3015 = vmatprep.subr.bf16.mxu0 0
        %3016 = vmatpush1.bf16.msra.mxu0 0
        %3017 = vmatprep.mubr.bf16.mxu0 0
        %3018 = vmatmul.mubr.bf16.gmra.mrb[0].mxu0 %v455
        %v3019 = vpop.f32.mrb[0].mxu0
        %v3020 = vadd.f32 %v2898, %v3019
        %v3021 = vpop.f32.mrb[0].mxu0
        %v3022 = vadd.f32 %v2902, %v3021
        %v3023 = vpop.f32.mrb[0].mxu0
        %v3024 = vadd.f32 %v2898, %v3023
        %v3025 = vpop.f32.mrb[0].mxu0
        %v3026 = vadd.f32 %v2902, %v3025
        %3027 = vmatprep.mubr.bf16.mxu0 0
        %3028 = vmatmul.mubr.bf16.gmra.mrb[0].mxu0 %v456
        %v3029 = vpop.f32.mrb[0].mxu0
        %v3030 = vadd.f32 %v2898, %v3029
        %v3031 = vpop.f32.mrb[0].mxu0
        %v3032 = vadd.f32 %v2902, %v3031
        %v3033 = vpop.f32.mrb[0].mxu0
        %v3034 = vadd.f32 %v2898, %v3033
        %v3035 = vpop.f32.mrb[0].mxu0
        %v3036 = vadd.f32 %v2902, %v3035
        %3037 = vmatprep.mubr.bf16.mxu0 0
        %3038 = vmatmul.mubr.bf16.gmra.mrb[0].mxu0 %v457
        %v3039 = vpop.f32.mrb[0].mxu0
        %v3040 = vadd.f32 %v2898, %v3039
        %v3041 = vpop.f32.mrb[0].mxu0
        %v3042 = vadd.f32 %v2902, %v3041
        %v3043 = vpop.f32.mrb[0].mxu0
        %v3044 = vadd.f32 %v2898, %v3043
        %v3045 = vpop.f32.mrb[0].mxu0
        %v3046 = vadd.f32 %v2902, %v3045
        %3047 = vmatprep.mubr.bf16.mxu0 0
        %3048 = vmatmul.mubr.bf16.gmra.mrb[0].mxu0 %v458
        %v3049 = vpop.f32.mrb[0].mxu0
        %v3050 = vadd.f32 %v2898, %v3049
        %v3051 = vpop.f32.mrb[0].mxu0
        %v3052 = vadd.f32 %v2902, %v3051
        %v3053 = vpop.f32.mrb[0].mxu0
        %v3054 = vadd.f32 %v2898, %v3053
        %v3055 = vpop.f32.mrb[0].mxu0
        %v3056 = vadd.f32 %v2902, %v3055
        %3057 = vmatprep.mubr.bf16.mxu0 0
        %3058 = vmatmul.mubr.bf16.gmra.mrb[0].mxu0 %v459
        %v3059 = vpop.f32.mrb[0].mxu0
        %v3060 = vadd.f32 %v2898, %v3059
        %v3061 = vpop.f32.mrb[0].mxu0
        %v3062 = vadd.f32 %v2902, %v3061
        %v3063 = vpop.f32.mrb[0].mxu0
        %v3064 = vadd.f32 %v2898, %v3063
        %v3065 = vpop.f32.mrb[0].mxu0
        %v3066 = vadd.f32 %v2902, %v3065
        %3067 = vmatprep.mubr.bf16.mxu0 0
        %3068 = vmatmul.mubr.bf16.gmra.mrb[0].mxu0 %v460
        %v3069 = vpop.f32.mrb[0].mxu0
        %v3070 = vadd.f32 %v2898, %v3069
        %v3071 = vpop.f32.mrb[0].mxu0
        %v3072 = vadd.f32 %v2902, %v3071
        %v3073 = vpop.f32.mrb[0].mxu0
        %v3074 = vadd.f32 %v2898, %v3073
        %v3075 = vpop.f32.mrb[0].mxu0
        %v3076 = vadd.f32 %v2902, %v3075
        %3077 = vmatprep.mubr.bf16.mxu0 0
        %3078 = vmatmul.mubr.bf16.gmra.mrb[0].mxu0 %v461
        %v3079 = vpop.f32.mrb[0].mxu0
        %v3080 = vadd.f32 %v2898, %v3079
        %v3081 = vpop.f32.mrb[0].mxu0
        %v3082 = vadd.f32 %v2902, %v3081
        %v3083 = vpop.f32.mrb[0].mxu0
        %v3084 = vadd.f32 %v2898, %v3083
        %v3085 = vpop.f32.mrb[0].mxu0
        %v3086 = vadd.f32 %v2902, %v3085
        %3087 = vmatprep.mubr.bf16.mxu0 0
        %3088 = vmatmul.mubr.bf16.gmra.mrb[0].mxu0 %v462
        %v3089 = vpop.f32.mrb[0].mxu0
        %v3090 = vadd.f32 %v2898, %v3089
        %v3091 = vpop.f32.mrb[0].mxu0
        %v3092 = vadd.f32 %v2902, %v3091
        %v3093 = vpop.f32.mrb[0].mxu0
        %v3094 = vadd.f32 %v2898, %v3093
        %v3095 = vpop.f32.mrb[0].mxu0
        %v3096 = vadd.f32 %v2902, %v3095
        %3097 = vmatprep.mubr.bf16.mxu0 0
        %3098 = vmatmul.mubr.bf16.gmra.mrb[0].mxu0 %v463
        %v3099 = vpop.f32.mrb[0].mxu0
        %v3100 = vadd.f32 %v2898, %v3099
        %v3101 = vpop.f32.mrb[0].mxu0
        %v3102 = vadd.f32 %v2902, %v3101
        %v3103 = vpop.f32.mrb[0].mxu0
        %v3104 = vadd.f32 %v2898, %v3103
        %v3105 = vpop.f32.mrb[0].mxu0
        %v3106 = vadd.f32 %v2902, %v3105
        %3107 = vmatprep.mubr.bf16.mxu0 0
        %3108 = vmatmul.mubr.bf16.gmra.mrb[0].mxu0 %v464
        %v3109 = vpop.f32.mrb[0].mxu0
        %v3110 = vadd.f32 %v2898, %v3109
        %v3111 = vpop.f32.mrb[0].mxu0
        %v3112 = vadd.f32 %v2902, %v3111
        %v3113 = vpop.f32.mrb[0].mxu0
        %v3114 = vadd.f32 %v2898, %v3113
        %v3115 = vpop.f32.mrb[0].mxu0
        %v3116 = vadd.f32 %v2902, %v3115
        %3117 = vmatprep.mubr.bf16.mxu0 0
        %3118 = vmatmul.mubr.bf16.gmra.mrb[0].mxu0 %v465
        %v3119 = vpop.f32.mrb[0].mxu0
        %v3120 = vadd.f32 %v2898, %v3119
        %v3121 = vpop.f32.mrb[0].mxu0
        %v3122 = vadd.f32 %v2902, %v3121
        %v3123 = vpop.f32.mrb[0].mxu0
        %v3124 = vadd.f32 %v2898, %v3123
        %v3125 = vpop.f32.mrb[0].mxu0
        %v3126 = vadd.f32 %v2902, %v3125
        %3127 = vmatprep.mubr.bf16.mxu0 0
        %3128 = vmatmul.mubr.bf16.gmra.mrb[0].mxu0 %v466
        %v3129 = vpop.f32.mrb[0].mxu0
        %v3130 = vadd.f32 %v2898, %v3129
        %v3131 = vpop.f32.mrb[0].mxu0
        %v3132 = vadd.f32 %v2902, %v3131
        %v3133 = vpop.f32.mrb[0].mxu0
        %v3134 = vadd.f32 %v2898, %v3133
        %v3135 = vpop.f32.mrb[0].mxu0
        %v3136 = vadd.f32 %v2902, %v3135
        %3137 = vmatprep.mubr.bf16.mxu0 0
        %3138 = vmatmul.mubr.bf16.gmra.mrb[0].mxu0 %v467
        %v3139 = vpop.f32.mrb[0].mxu0
        %v3140 = vadd.f32 %v2898, %v3139
        %v3141 = vpop.f32.mrb[0].mxu0
        %v3142 = vadd.f32 %v2902, %v3141
        %v3143 = vpop.f32.mrb[0].mxu0
        %v3144 = vadd.f32 %v2898, %v3143
        %v3145 = vpop.f32.mrb[0].mxu0
        %v3146 = vadd.f32 %v2902, %v3145
        %3147 = vmatprep.mubr.bf16.mxu0 0
        %3148 = vmatmul.mubr.bf16.gmra.mrb[0].mxu0 %v468
        %v3149 = vpop.f32.mrb[0].mxu0
        %v3150 = vadd.f32 %v2898, %v3149
        %v3151 = vpop.f32.mrb[0].mxu0
        %v3152 = vadd.f32 %v2902, %v3151
        %v3153 = vpop.f32.mrb[0].mxu0
        %v3154 = vadd.f32 %v2898, %v3153
        %v3155 = vpop.f32.mrb[0].mxu0
        %v3156 = vadd.f32 %v2902, %v3155
        %3157 = vmatprep.mubr.bf16.mxu0 0
        %3158 = vmatmul.mubr.bf16.gmra.mrb[0].mxu0 %v469
        %v3159 = vpop.f32.mrb[0].mxu0
        %v3160 = vadd.f32 %v2898, %v3159
        %v3161 = vpop.f32.mrb[0].mxu0
        %v3162 = vadd.f32 %v2902, %v3161
        %v3163 = vpop.f32.mrb[0].mxu0
        %v3164 = vadd.f32 %v2898, %v3163
        %v3165 = vpop.f32.mrb[0].mxu0
        %v3166 = vadd.f32 %v2902, %v3165
        %3167 = vmatprep.mubr.bf16.mxu0 0
        %3168 = vmatmul.mubr.bf16.gmra.mrb[0].mxu0 %v470
        %v3169 = vpop.f32.mrb[0].mxu0
        %v3170 = vadd.f32 %v2898, %v3169
        %v3171 = vpop.f32.mrb[0].mxu0
        %v3172 = vadd.f32 %v2902, %v3171
        %v3173 = vpop.f32.mrb[0].mxu0
        %v3174 = vadd.f32 %v2898, %v3173
        %v3175 = vpop.f32.mrb[0].mxu0
        %v3176 = vadd.f32 %v2902, %v3175
        %3177 = vdwg.mxu0
        %v3178 = vmax.f32 %v3020, 0.0
        %v3179 = vmax.f32 %v3022, 0.0
        %v3180 = vmax.f32 %v3024, 0.0
        %v3181 = vmax.f32 %v3026, 0.0
        %v3182 = vmax.f32 %v3030, 0.0
        %v3183 = vmax.f32 %v3032, 0.0
        %v3184 = vmax.f32 %v3034, 0.0
        %v3185 = vmax.f32 %v3036, 0.0
        %v3186 = vmax.f32 %v3040, 0.0
        %v3187 = vmax.f32 %v3042, 0.0
        %v3188 = vmax.f32 %v3044, 0.0
        %v3189 = vmax.f32 %v3046, 0.0
        %v3190 = vmax.f32 %v3050, 0.0
        %v3191 = vmax.f32 %v3052, 0.0
        %v3192 = vmax.f32 %v3054, 0.0
        %v3193 = vmax.f32 %v3056, 0.0
        %v3194 = vmax.f32 %v3060, 0.0
        %v3195 = vmax.f32 %v3062, 0.0
        %v3196 = vmax.f32 %v3064, 0.0
        %v3197 = vmax.f32 %v3066, 0.0
        %v3198 = vmax.f32 %v3070, 0.0
        %v3199 = vmax.f32 %v3072, 0.0
        %v3200 = vmax.f32 %v3074, 0.0
        %v3201 = vmax.f32 %v3076, 0.0
        %v3202 = vmax.f32 %v3080, 0.0
        %v3203 = vmax.f32 %v3082, 0.0
        %v3204 = vmax.f32 %v3084, 0.0
        %v3205 = vmax.f32 %v3086, 0.0
        %v3206 = vmax.f32 %v3090, 0.0
        %v3207 = vmax.f32 %v3092, 0.0
        %v3208 = vmax.f32 %v3094, 0.0
        %v3209 = vmax.f32 %v3096, 0.0
        %v3210 = vmax.f32 %v3100, 0.0
        %v3211 = vmax.f32 %v3102, 0.0
        %v3212 = vmax.f32 %v3104, 0.0
        %v3213 = vmax.f32 %v3106, 0.0
        %v3214 = vmax.f32 %v3110, 0.0
        %v3215 = vmax.f32 %v3112, 0.0
        %v3216 = vmax.f32 %v3114, 0.0
        %v3217 = vmax.f32 %v3116, 0.0
        %v3218 = vmax.f32 %v3120, 0.0
        %v3219 = vmax.f32 %v3122, 0.0
        %v3220 = vmax.f32 %v3124, 0.0
        %v3221 = vmax.f32 %v3126, 0.0
        %v3222 = vmax.f32 %v3130, 0.0
        %v3223 = vmax.f32 %v3132, 0.0
        %v3224 = vmax.f32 %v3134, 0.0
        %v3225 = vmax.f32 %v3136, 0.0
        %v3226 = vmax.f32 %v3140, 0.0
        %v3227 = vmax.f32 %v3142, 0.0
        %v3228 = vmax.f32 %v3144, 0.0
        %v3229 = vmax.f32 %v3146, 0.0
        %v3230 = vmax.f32 %v3150, 0.0
        %v3231 = vmax.f32 %v3152, 0.0
        %v3232 = vmax.f32 %v3154, 0.0
        %v3233 = vmax.f32 %v3156, 0.0
        %v3234 = vmax.f32 %v3160, 0.0
        %v3235 = vmax.f32 %v3162, 0.0
        %v3236 = vmax.f32 %v3164, 0.0
        %v3237 = vmax.f32 %v3166, 0.0
        %v3238 = vmax.f32 %v3170, 0.0
        %v3239 = vmax.f32 %v3172, 0.0
        %v3240 = vmax.f32 %v3174, 0.0
        %v3241 = vmax.f32 %v3176, 0.0
        %v3242 = vpack.c.bf16 %v3180, %v3178
        %v3243 = vpack.c.bf16 %v3181, %v3179
        %v3244 = vpack.c.bf16 %v3184, %v3182
        %v3245 = vpack.c.bf16 %v3185, %v3183
        %v3246 = vpack.c.bf16 %v3188, %v3186
        %v3247 = vpack.c.bf16 %v3189, %v3187
        %v3248 = vpack.c.bf16 %v3192, %v3190
        %v3249 = vpack.c.bf16 %v3193, %v3191
        %v3250 = vpack.c.bf16 %v3196, %v3194
        %v3251 = vpack.c.bf16 %v3197, %v3195
        %v3252 = vpack.c.bf16 %v3200, %v3198
        %v3253 = vpack.c.bf16 %v3201, %v3199
        %v3254 = vpack.c.bf16 %v3204, %v3202
        %v3255 = vpack.c.bf16 %v3205, %v3203
        %v3256 = vpack.c.bf16 %v3208, %v3206
        %v3257 = vpack.c.bf16 %v3209, %v3207
        %v3258 = vpack.c.bf16 %v3212, %v3210
        %v3259 = vpack.c.bf16 %v3213, %v3211
        %v3260 = vpack.c.bf16 %v3216, %v3214
        %v3261 = vpack.c.bf16 %v3217, %v3215
        %v3262 = vpack.c.bf16 %v3220, %v3218
        %v3263 = vpack.c.bf16 %v3221, %v3219
        %v3264 = vpack.c.bf16 %v3224, %v3222
        %v3265 = vpack.c.bf16 %v3225, %v3223
        %v3266 = vpack.c.bf16 %v3228, %v3226
        %v3267 = vpack.c.bf16 %v3229, %v3227
        %v3268 = vpack.c.bf16 %v3232, %v3230
        %v3269 = vpack.c.bf16 %v3233, %v3231
        %v3270 = vpack.c.bf16 %v3236, %v3234
        %v3271 = vpack.c.bf16 %v3237, %v3235
        %v3272 = vpack.c.bf16 %v3240, %v3238
        %v3273 = vpack.c.bf16 %v3241, %v3239
        %s3274 = scalar_lea.vmem [#allocation8], 768
        %v3275 = vld [vmem:[%s3274] sm:$0xff]
        %v3276 = vld [vmem:[%s3274 + $0x8] sm:$0xff]
        %v3277 = vld [vmem:[%s3274 + $0x10] sm:$0xff]
        %v3278 = vld [vmem:[%s3274 + $0x18] sm:$0xff]
        %v3279 = vld [vmem:[%s3274 + $0x20] sm:$0xff]
        %v3280 = vld [vmem:[%s3274 + $0x28] sm:$0xff]
        %v3281 = vld [vmem:[%s3274 + $0x30] sm:$0xff]
        %v3282 = vld [vmem:[%s3274 + $0x38] sm:$0xff]
        %v3283 = vld [vmem:[%s3274 + $0x40] sm:$0xff]
        %v3284 = vld [vmem:[%s3274 + $0x48] sm:$0xff]
        %v3285 = vld [vmem:[%s3274 + $0x50] sm:$0xff]
        %v3286 = vld [vmem:[%s3274 + $0x58] sm:$0xff]
        %v3287 = vld [vmem:[%s3274 + $0x60] sm:$0xff]
        %v3288 = vld [vmem:[%s3274 + $0x68] sm:$0xff]
        %v3289 = vld [vmem:[%s3274 + $0x70] sm:$0xff]
        %v3290 = vld [vmem:[%s3274 + $0x78] sm:$0xff]
        %v3291 = vld [vmem:[%s3274 + $0x80] sm:$0xff]
        %v3292 = vld [vmem:[%s3274 + $0x88] sm:$0xff]
        %v3293 = vld [vmem:[%s3274 + $0x90] sm:$0xff]
        %v3294 = vld [vmem:[%s3274 + $0x98] sm:$0xff]
        %v3295 = vld [vmem:[%s3274 + $0xa0] sm:$0xff]
        %v3296 = vld [vmem:[%s3274 + $0xa8] sm:$0xff]
        %v3297 = vld [vmem:[%s3274 + $0xb0] sm:$0xff]
        %v3298 = vld [vmem:[%s3274 + $0xb8] sm:$0xff]
        %v3299 = vld [vmem:[%s3274 + $0xc0] sm:$0xff]
        %v3300 = vld [vmem:[%s3274 + $0xc8] sm:$0xff]
        %v3301 = vld [vmem:[%s3274 + $0xd0] sm:$0xff]
        %v3302 = vld [vmem:[%s3274 + $0xd8] sm:$0xff]
        %v3303 = vld [vmem:[%s3274 + $0xe0] sm:$0xff]
        %v3304 = vld [vmem:[%s3274 + $0xe8] sm:$0xff]
        %v3305 = vld [vmem:[%s3274 + $0xf0] sm:$0xff]
        %v3306 = vld [vmem:[%s3274 + $0xf8] sm:$0xff]
        %v3339 = vunpack.c.l.b16 %v3275
        %v3340 = vunpack.c.h.b16 %v3275
        %v3341 = vunpack.c.l.b16 %v3276
        %v3342 = vunpack.c.h.b16 %v3276
        %v3343 = vunpack.c.l.b16 %v3277
        %v3344 = vunpack.c.h.b16 %v3277
        %v3345 = vunpack.c.l.b16 %v3278
        %v3346 = vunpack.c.h.b16 %v3278
        %v3347 = vunpack.c.l.b16 %v3279
        %v3348 = vunpack.c.h.b16 %v3279
        %v3349 = vunpack.c.l.b16 %v3280
        %v3350 = vunpack.c.h.b16 %v3280
        %v3351 = vunpack.c.l.b16 %v3281
        %v3352 = vunpack.c.h.b16 %v3281
        %v3353 = vunpack.c.l.b16 %v3282
        %v3354 = vunpack.c.h.b16 %v3282
        %v3355 = vunpack.c.l.b16 %v3283
        %v3356 = vunpack.c.h.b16 %v3283
        %v3357 = vunpack.c.l.b16 %v3284
        %v3358 = vunpack.c.h.b16 %v3284
        %v3359 = vunpack.c.l.b16 %v3285
        %v3360 = vunpack.c.h.b16 %v3285
        %v3361 = vunpack.c.l.b16 %v3286
        %v3362 = vunpack.c.h.b16 %v3286
        %v3363 = vunpack.c.l.b16 %v3287
        %v3364 = vunpack.c.h.b16 %v3287
        %v3365 = vunpack.c.l.b16 %v3288
        %v3366 = vunpack.c.h.b16 %v3288
        %v3367 = vunpack.c.l.b16 %v3289
        %v3368 = vunpack.c.h.b16 %v3289
        %v3369 = vunpack.c.l.b16 %v3290
        %v3370 = vunpack.c.h.b16 %v3290
        %v3371 = vunpack.c.l.b16 %v3291
        %v3372 = vunpack.c.h.b16 %v3291
        %v3373 = vunpack.c.l.b16 %v3292
        %v3374 = vunpack.c.h.b16 %v3292
        %v3375 = vunpack.c.l.b16 %v3293
        %v3376 = vunpack.c.h.b16 %v3293
        %v3377 = vunpack.c.l.b16 %v3294
        %v3378 = vunpack.c.h.b16 %v3294
        %v3379 = vunpack.c.l.b16 %v3295
        %v3380 = vunpack.c.h.b16 %v3295
        %v3381 = vunpack.c.l.b16 %v3296
        %v3382 = vunpack.c.h.b16 %v3296
        %v3383 = vunpack.c.l.b16 %v3297
        %v3384 = vunpack.c.h.b16 %v3297
        %v3385 = vunpack.c.l.b16 %v3298
        %v3386 = vunpack.c.h.b16 %v3298
        %v3387 = vunpack.c.l.b16 %v3299
        %v3388 = vunpack.c.h.b16 %v3299
        %v3389 = vunpack.c.l.b16 %v3300
        %v3390 = vunpack.c.h.b16 %v3300
        %v3391 = vunpack.c.l.b16 %v3301
        %v3392 = vunpack.c.h.b16 %v3301
        %v3393 = vunpack.c.l.b16 %v3302
        %v3394 = vunpack.c.h.b16 %v3302
        %v3395 = vunpack.c.l.b16 %v3303
        %v3396 = vunpack.c.h.b16 %v3303
        %v3397 = vunpack.c.l.b16 %v3304
        %v3398 = vunpack.c.h.b16 %v3304
        %v3399 = vunpack.c.l.b16 %v3305
        %v3400 = vunpack.c.h.b16 %v3305
        %v3401 = vunpack.c.l.b16 %v3306
        %v3402 = vunpack.c.h.b16 %v3306
        %v3403 = vpack.c.b16 %v3341, %v3339
        %v3404 = vpack.c.b16 %v3342, %v3340
        %v3405 = vpack.c.b16 %v3345, %v3343
        %v3406 = vpack.c.b16 %v3346, %v3344
        %v3407 = vpack.c.b16 %v3349, %v3347
        %v3408 = vpack.c.b16 %v3350, %v3348
        %v3409 = vpack.c.b16 %v3353, %v3351
        %v3410 = vpack.c.b16 %v3354, %v3352
        %v3411 = vpack.c.b16 %v3357, %v3355
        %v3412 = vpack.c.b16 %v3358, %v3356
        %v3413 = vpack.c.b16 %v3361, %v3359
        %v3414 = vpack.c.b16 %v3362, %v3360
        %v3415 = vpack.c.b16 %v3365, %v3363
        %v3416 = vpack.c.b16 %v3366, %v3364
        %v3417 = vpack.c.b16 %v3369, %v3367
        %v3418 = vpack.c.b16 %v3370, %v3368
        %v3419 = vpack.c.b16 %v3373, %v3371
        %v3420 = vpack.c.b16 %v3374, %v3372
        %v3421 = vpack.c.b16 %v3377, %v3375
        %v3422 = vpack.c.b16 %v3378, %v3376
        %v3423 = vpack.c.b16 %v3381, %v3379
        %v3424 = vpack.c.b16 %v3382, %v3380
        %v3425 = vpack.c.b16 %v3385, %v3383
        %v3426 = vpack.c.b16 %v3386, %v3384
        %v3427 = vpack.c.b16 %v3389, %v3387
        %v3428 = vpack.c.b16 %v3390, %v3388
        %v3429 = vpack.c.b16 %v3393, %v3391
        %v3430 = vpack.c.b16 %v3394, %v3392
        %v3431 = vpack.c.b16 %v3397, %v3395
        %v3432 = vpack.c.b16 %v3398, %v3396
        %v3433 = vpack.c.b16 %v3401, %v3399
        %v3434 = vpack.c.b16 %v3402, %v3400
        %3467 = vmatprep.subr.bf16.mxu0 %v3404
        %3468 = vmatpush1.bf16.msra.mxu0 %v3403
        %3469 = vmatprep.subr.bf16.mxu0 %v3406
        %3470 = vmatpush1.bf16.msra.mxu0 %v3405
        %3471 = vmatprep.subr.bf16.mxu0 %v3408
        %3472 = vmatpush1.bf16.msra.mxu0 %v3407
        %3473 = vmatprep.subr.bf16.mxu0 %v3410
        %3474 = vmatpush1.bf16.msra.mxu0 %v3409
        %3475 = vmatprep.subr.bf16.mxu0 %v3412
        %3476 = vmatpush1.bf16.msra.mxu0 %v3411
        %3477 = vmatprep.subr.bf16.mxu0 %v3414
        %3478 = vmatpush1.bf16.msra.mxu0 %v3413
        %3479 = vmatprep.subr.bf16.mxu0 %v3416
        %3480 = vmatpush1.bf16.msra.mxu0 %v3415
        %3481 = vmatprep.subr.bf16.mxu0 %v3418
        %3482 = vmatpush1.bf16.msra.mxu0 %v3417
        %3483 = vmatprep.subr.bf16.mxu0 %v3420
        %3484 = vmatpush1.bf16.msra.mxu0 %v3419
        %3485 = vmatprep.subr.bf16.mxu0 %v3422
        %3486 = vmatpush1.bf16.msra.mxu0 %v3421
        %3487 = vmatprep.subr.bf16.mxu0 %v3424
        %3488 = vmatpush1.bf16.msra.mxu0 %v3423
        %3489 = vmatprep.subr.bf16.mxu0 %v3426
        %3490 = vmatpush1.bf16.msra.mxu0 %v3425
        %3491 = vmatprep.subr.bf16.mxu0 %v3428
        %3492 = vmatpush1.bf16.msra.mxu0 %v3427
        %3493 = vmatprep.subr.bf16.mxu0 %v3430
        %3494 = vmatpush1.bf16.msra.mxu0 %v3429
        %3495 = vmatprep.subr.bf16.mxu0 %v3432
        %3496 = vmatpush1.bf16.msra.mxu0 %v3431
        %3497 = vmatprep.subr.bf16.mxu0 %v3434
        %3498 = vmatpush1.bf16.msra.mxu0 %v3433
        %3499 = vmatprep.mubr.bf16.mxu0 %v3243
        %3500 = vmatmul.mubr.bf16.gmra.mrb[0].mxu0 %v3242
        %v3501 = vpop.f32.mrb[0].mxu0
        %v3502 = vadd.f32 0.0, %v3501
        %v3503 = vpop.f32.mrb[0].mxu0
        %v3504 = vadd.f32 0.0, %v3503
        %v3505 = vpop.f32.mrb[0].mxu0
        %v3506 = vadd.f32 0.0, %v3505
        %v3507 = vpop.f32.mrb[0].mxu0
        %v3508 = vadd.f32 0.0, %v3507
        %3509 = vmatprep.mubr.bf16.mxu0 %v3245
        %3510 = vmatmul.mubr.bf16.gmra.mrb[0].mxu0 %v3244
        %v3511 = vpop.f32.mrb[0].mxu0
        %v3512 = vadd.f32 0.0, %v3511
        %v3513 = vpop.f32.mrb[0].mxu0
        %v3514 = vadd.f32 0.0, %v3513
        %v3515 = vpop.f32.mrb[0].mxu0
        %v3516 = vadd.f32 0.0, %v3515
        %v3517 = vpop.f32.mrb[0].mxu0
        %v3518 = vadd.f32 0.0, %v3517
        %3519 = vmatprep.mubr.bf16.mxu0 %v3247
        %3520 = vmatmul.mubr.bf16.gmra.mrb[0].mxu0 %v3246
        %v3521 = vpop.f32.mrb[0].mxu0
        %v3522 = vadd.f32 0.0, %v3521
        %v3523 = vpop.f32.mrb[0].mxu0
        %v3524 = vadd.f32 0.0, %v3523
        %v3525 = vpop.f32.mrb[0].mxu0
        %v3526 = vadd.f32 0.0, %v3525
        %v3527 = vpop.f32.mrb[0].mxu0
        %v3528 = vadd.f32 0.0, %v3527
        %3529 = vmatprep.mubr.bf16.mxu0 %v3249
        %3530 = vmatmul.mubr.bf16.gmra.mrb[0].mxu0 %v3248
        %v3531 = vpop.f32.mrb[0].mxu0
        %v3532 = vadd.f32 0.0, %v3531
        %v3533 = vpop.f32.mrb[0].mxu0
        %v3534 = vadd.f32 0.0, %v3533
        %v3535 = vpop.f32.mrb[0].mxu0
        %v3536 = vadd.f32 0.0, %v3535
        %v3537 = vpop.f32.mrb[0].mxu0
        %v3538 = vadd.f32 0.0, %v3537
        %3539 = vmatprep.mubr.bf16.mxu0 %v3251
        %3540 = vmatmul.mubr.bf16.gmra.mrb[0].mxu0 %v3250
        %v3541 = vpop.f32.mrb[0].mxu0
        %v3542 = vadd.f32 0.0, %v3541
        %v3543 = vpop.f32.mrb[0].mxu0
        %v3544 = vadd.f32 0.0, %v3543
        %v3545 = vpop.f32.mrb[0].mxu0
        %v3546 = vadd.f32 0.0, %v3545
        %v3547 = vpop.f32.mrb[0].mxu0
        %v3548 = vadd.f32 0.0, %v3547
        %3549 = vmatprep.mubr.bf16.mxu0 %v3253
        %3550 = vmatmul.mubr.bf16.gmra.mrb[0].mxu0 %v3252
        %v3551 = vpop.f32.mrb[0].mxu0
        %v3552 = vadd.f32 0.0, %v3551
        %v3553 = vpop.f32.mrb[0].mxu0
        %v3554 = vadd.f32 0.0, %v3553
        %v3555 = vpop.f32.mrb[0].mxu0
        %v3556 = vadd.f32 0.0, %v3555
        %v3557 = vpop.f32.mrb[0].mxu0
        %v3558 = vadd.f32 0.0, %v3557
        %3559 = vmatprep.mubr.bf16.mxu0 %v3255
        %3560 = vmatmul.mubr.bf16.gmra.mrb[0].mxu0 %v3254
        %v3561 = vpop.f32.mrb[0].mxu0
        %v3562 = vadd.f32 0.0, %v3561
        %v3563 = vpop.f32.mrb[0].mxu0
        %v3564 = vadd.f32 0.0, %v3563
        %v3565 = vpop.f32.mrb[0].mxu0
        %v3566 = vadd.f32 0.0, %v3565
        %v3567 = vpop.f32.mrb[0].mxu0
        %v3568 = vadd.f32 0.0, %v3567
        %3569 = vmatprep.mubr.bf16.mxu0 %v3257
        %3570 = vmatmul.mubr.bf16.gmra.mrb[0].mxu0 %v3256
        %v3571 = vpop.f32.mrb[0].mxu0
        %v3572 = vadd.f32 0.0, %v3571
        %v3573 = vpop.f32.mrb[0].mxu0
        %v3574 = vadd.f32 0.0, %v3573
        %v3575 = vpop.f32.mrb[0].mxu0
        %v3576 = vadd.f32 0.0, %v3575
        %v3577 = vpop.f32.mrb[0].mxu0
        %v3578 = vadd.f32 0.0, %v3577
        %3579 = vmatprep.mubr.bf16.mxu0 %v3259
        %3580 = vmatmul.mubr.bf16.gmra.mrb[0].mxu0 %v3258
        %v3581 = vpop.f32.mrb[0].mxu0
        %v3582 = vadd.f32 0.0, %v3581
        %v3583 = vpop.f32.mrb[0].mxu0
        %v3584 = vadd.f32 0.0, %v3583
        %v3585 = vpop.f32.mrb[0].mxu0
        %v3586 = vadd.f32 0.0, %v3585
        %v3587 = vpop.f32.mrb[0].mxu0
        %v3588 = vadd.f32 0.0, %v3587
        %3589 = vmatprep.mubr.bf16.mxu0 %v3261
        %3590 = vmatmul.mubr.bf16.gmra.mrb[0].mxu0 %v3260
        %v3591 = vpop.f32.mrb[0].mxu0
        %v3592 = vadd.f32 0.0, %v3591
        %v3593 = vpop.f32.mrb[0].mxu0
        %v3594 = vadd.f32 0.0, %v3593
        %v3595 = vpop.f32.mrb[0].mxu0
        %v3596 = vadd.f32 0.0, %v3595
        %v3597 = vpop.f32.mrb[0].mxu0
        %v3598 = vadd.f32 0.0, %v3597
        %3599 = vmatprep.mubr.bf16.mxu0 %v3263
        %3600 = vmatmul.mubr.bf16.gmra.mrb[0].mxu0 %v3262
        %v3601 = vpop.f32.mrb[0].mxu0
        %v3602 = vadd.f32 0.0, %v3601
        %v3603 = vpop.f32.mrb[0].mxu0
        %v3604 = vadd.f32 0.0, %v3603
        %v3605 = vpop.f32.mrb[0].mxu0
        %v3606 = vadd.f32 0.0, %v3605
        %v3607 = vpop.f32.mrb[0].mxu0
        %v3608 = vadd.f32 0.0, %v3607
        %3609 = vmatprep.mubr.bf16.mxu0 %v3265
        %3610 = vmatmul.mubr.bf16.gmra.mrb[0].mxu0 %v3264
        %v3611 = vpop.f32.mrb[0].mxu0
        %v3612 = vadd.f32 0.0, %v3611
        %v3613 = vpop.f32.mrb[0].mxu0
        %v3614 = vadd.f32 0.0, %v3613
        %v3615 = vpop.f32.mrb[0].mxu0
        %v3616 = vadd.f32 0.0, %v3615
        %v3617 = vpop.f32.mrb[0].mxu0
        %v3618 = vadd.f32 0.0, %v3617
        %3619 = vmatprep.mubr.bf16.mxu0 %v3267
        %3620 = vmatmul.mubr.bf16.gmra.mrb[0].mxu0 %v3266
        %v3621 = vpop.f32.mrb[0].mxu0
        %v3622 = vadd.f32 0.0, %v3621
        %v3623 = vpop.f32.mrb[0].mxu0
        %v3624 = vadd.f32 0.0, %v3623
        %v3625 = vpop.f32.mrb[0].mxu0
        %v3626 = vadd.f32 0.0, %v3625
        %v3627 = vpop.f32.mrb[0].mxu0
        %v3628 = vadd.f32 0.0, %v3627
        %3629 = vmatprep.mubr.bf16.mxu0 %v3269
        %3630 = vmatmul.mubr.bf16.gmra.mrb[0].mxu0 %v3268
        %v3631 = vpop.f32.mrb[0].mxu0
        %v3632 = vadd.f32 0.0, %v3631
        %v3633 = vpop.f32.mrb[0].mxu0
        %v3634 = vadd.f32 0.0, %v3633
        %v3635 = vpop.f32.mrb[0].mxu0
        %v3636 = vadd.f32 0.0, %v3635
        %v3637 = vpop.f32.mrb[0].mxu0
        %v3638 = vadd.f32 0.0, %v3637
        %3639 = vmatprep.mubr.bf16.mxu0 %v3271
        %3640 = vmatmul.mubr.bf16.gmra.mrb[0].mxu0 %v3270
        %v3641 = vpop.f32.mrb[0].mxu0
        %v3642 = vadd.f32 0.0, %v3641
        %v3643 = vpop.f32.mrb[0].mxu0
        %v3644 = vadd.f32 0.0, %v3643
        %v3645 = vpop.f32.mrb[0].mxu0
        %v3646 = vadd.f32 0.0, %v3645
        %v3647 = vpop.f32.mrb[0].mxu0
        %v3648 = vadd.f32 0.0, %v3647
        %3649 = vmatprep.mubr.bf16.mxu0 %v3273
        %3650 = vmatmul.mubr.bf16.gmra.mrb[0].mxu0 %v3272
        %v3651 = vpop.f32.mrb[0].mxu0
        %v3652 = vadd.f32 0.0, %v3651
        %v3653 = vpop.f32.mrb[0].mxu0
        %v3654 = vadd.f32 0.0, %v3653
        %v3655 = vpop.f32.mrb[0].mxu0
        %v3656 = vadd.f32 0.0, %v3655
        %v3657 = vpop.f32.mrb[0].mxu0
        %v3658 = vadd.f32 0.0, %v3657
        %3659 = vdwg.mxu0
        %v3660 = vadd.f32 %v2811, %v3502
        %v3661 = vadd.f32 %v2812, %v3504
        %v3662 = vadd.f32 %v2813, %v3506
        %v3663 = vadd.f32 %v2814, %v3508
        %v3664 = vadd.f32 %v2815, %v3512
        %v3665 = vadd.f32 %v2816, %v3514
        %v3666 = vadd.f32 %v2817, %v3516
        %v3667 = vadd.f32 %v2818, %v3518
        %v3668 = vadd.f32 %v2819, %v3522
        %v3669 = vadd.f32 %v2820, %v3524
        %v3670 = vadd.f32 %v2821, %v3526
        %v3671 = vadd.f32 %v2822, %v3528
        %v3672 = vadd.f32 %v2823, %v3532
        %v3673 = vadd.f32 %v2824, %v3534
        %v3674 = vadd.f32 %v2825, %v3536
        %v3675 = vadd.f32 %v2826, %v3538
        %v3676 = vadd.f32 %v2827, %v3542
        %v3677 = vadd.f32 %v2828, %v3544
        %v3678 = vadd.f32 %v2829, %v3546
        %v3679 = vadd.f32 %v2830, %v3548
        %v3680 = vadd.f32 %v2831, %v3552
        %v3681 = vadd.f32 %v2832, %v3554
        %v3682 = vadd.f32 %v2833, %v3556
        %v3683 = vadd.f32 %v2834, %v3558
        %v3684 = vadd.f32 %v2835, %v3562
        %v3685 = vadd.f32 %v2836, %v3564
        %v3686 = vadd.f32 %v2837, %v3566
        %v3687 = vadd.f32 %v2838, %v3568
        %v3688 = vadd.f32 %v2839, %v3572
        %v3689 = vadd.f32 %v2840, %v3574
        %v3690 = vadd.f32 %v2841, %v3576
        %v3691 = vadd.f32 %v2842, %v3578
        %v3692 = vadd.f32 %v2843, %v3582
        %v3693 = vadd.f32 %v2844, %v3584
        %v3694 = vadd.f32 %v2845, %v3586
        %v3695 = vadd.f32 %v2846, %v3588
        %v3696 = vadd.f32 %v2847, %v3592
        %v3697 = vadd.f32 %v2848, %v3594
        %v3698 = vadd.f32 %v2849, %v3596
        %v3699 = vadd.f32 %v2850, %v3598
        %v3700 = vadd.f32 %v2851, %v3602
        %v3701 = vadd.f32 %v2852, %v3604
        %v3702 = vadd.f32 %v2853, %v3606
        %v3703 = vadd.f32 %v2854, %v3608
        %v3704 = vadd.f32 %v2855, %v3612
        %v3705 = vadd.f32 %v2856, %v3614
        %v3706 = vadd.f32 %v2857, %v3616
        %v3707 = vadd.f32 %v2858, %v3618
        %v3708 = vadd.f32 %v2859, %v3622
        %v3709 = vadd.f32 %v2860, %v3624
        %v3710 = vadd.f32 %v2861, %v3626
        %v3711 = vadd.f32 %v2862, %v3628
        %v3712 = vadd.f32 %v2863, %v3632
        %v3713 = vadd.f32 %v2864, %v3634
        %v3714 = vadd.f32 %v2865, %v3636
        %v3715 = vadd.f32 %v2866, %v3638
        %v3716 = vadd.f32 %v2867, %v3642
        %v3717 = vadd.f32 %v2868, %v3644
        %v3718 = vadd.f32 %v2869, %v3646
        %v3719 = vadd.f32 %v2870, %v3648
        %v3720 = vadd.f32 %v2871, %v3652
        %v3721 = vadd.f32 %v2872, %v3654
        %v3722 = vadd.f32 %v2873, %v3656
        %v3723 = vadd.f32 %v2874, %v3658
        %s3724 = scalar_lea.vmem %s5, 1
        %v3725 = vld [vmem:[%s3724] ss:$4 sm:$0x3]
        %v3727 = vlaneseq
        %v3728 = vshrl.u32 %v3727, 7
        %v3729 = vsub.s32 0, %v3728
        %v3730 = vrot.slane %v3725, %v3729
        %v3731 = vlaneseq
        %v3732 = vshrl.u32 %v3731, 7
        %v3733 = vsub.s32 1, %v3732
        %v3734 = vrot.slane %v3725, %v3733
        %v3737 = vadd.f32 %v3660, %v3730
        %v3738 = vadd.f32 %v3661, %v3734
        %v3739 = vadd.f32 %v3662, %v3730
        %v3740 = vadd.f32 %v3663, %v3734
        %v3741 = vadd.f32 %v3664, %v3730
        %v3742 = vadd.f32 %v3665, %v3734
        %v3743 = vadd.f32 %v3666, %v3730
        %v3744 = vadd.f32 %v3667, %v3734
        %v3745 = vadd.f32 %v3668, %v3730
        %v3746 = vadd.f32 %v3669, %v3734
        %v3747 = vadd.f32 %v3670, %v3730
        %v3748 = vadd.f32 %v3671, %v3734
        %v3749 = vadd.f32 %v3672, %v3730
        %v3750 = vadd.f32 %v3673, %v3734
        %v3751 = vadd.f32 %v3674, %v3730
        %v3752 = vadd.f32 %v3675, %v3734
        %v3753 = vadd.f32 %v3676, %v3730
        %v3754 = vadd.f32 %v3677, %v3734
        %v3755 = vadd.f32 %v3678, %v3730
        %v3756 = vadd.f32 %v3679, %v3734
        %v3757 = vadd.f32 %v3680, %v3730
        %v3758 = vadd.f32 %v3681, %v3734
        %v3759 = vadd.f32 %v3682, %v3730
        %v3760 = vadd.f32 %v3683, %v3734
        %v3761 = vadd.f32 %v3684, %v3730
        %v3762 = vadd.f32 %v3685, %v3734
        %v3763 = vadd.f32 %v3686, %v3730
        %v3764 = vadd.f32 %v3687, %v3734
        %v3765 = vadd.f32 %v3688, %v3730
        %v3766 = vadd.f32 %v3689, %v3734
        %v3767 = vadd.f32 %v3690, %v3730
        %v3768 = vadd.f32 %v3691, %v3734
        %v3769 = vadd.f32 %v3692, %v3730
        %v3770 = vadd.f32 %v3693, %v3734
        %v3771 = vadd.f32 %v3694, %v3730
        %v3772 = vadd.f32 %v3695, %v3734
        %v3773 = vadd.f32 %v3696, %v3730
        %v3774 = vadd.f32 %v3697, %v3734
        %v3775 = vadd.f32 %v3698, %v3730
        %v3776 = vadd.f32 %v3699, %v3734
        %v3777 = vadd.f32 %v3700, %v3730
        %v3778 = vadd.f32 %v3701, %v3734
        %v3779 = vadd.f32 %v3702, %v3730
        %v3780 = vadd.f32 %v3703, %v3734
        %v3781 = vadd.f32 %v3704, %v3730
        %v3782 = vadd.f32 %v3705, %v3734
        %v3783 = vadd.f32 %v3706, %v3730
        %v3784 = vadd.f32 %v3707, %v3734
        %v3785 = vadd.f32 %v3708, %v3730
        %v3786 = vadd.f32 %v3709, %v3734
        %v3787 = vadd.f32 %v3710, %v3730
        %v3788 = vadd.f32 %v3711, %v3734
        %v3789 = vadd.f32 %v3712, %v3730
        %v3790 = vadd.f32 %v3713, %v3734
        %v3791 = vadd.f32 %v3714, %v3730
        %v3792 = vadd.f32 %v3715, %v3734
        %v3793 = vadd.f32 %v3716, %v3730
        %v3794 = vadd.f32 %v3717, %v3734
        %v3795 = vadd.f32 %v3718, %v3730
        %v3796 = vadd.f32 %v3719, %v3734
        %v3797 = vadd.f32 %v3720, %v3730
        %v3798 = vadd.f32 %v3721, %v3734
        %v3799 = vadd.f32 %v3722, %v3730
        %v3800 = vadd.f32 %v3723, %v3734
        %v3801 = vmax.f32 %v3737, 0.0
        %v3802 = vmax.f32 %v3738, 0.0
        %v3803 = vmax.f32 %v3739, 0.0
        %v3804 = vmax.f32 %v3740, 0.0
        %v3805 = vmax.f32 %v3741, 0.0
        %v3806 = vmax.f32 %v3742, 0.0
        %v3807 = vmax.f32 %v3743, 0.0
        %v3808 = vmax.f32 %v3744, 0.0
        %v3809 = vmax.f32 %v3745, 0.0
        %v3810 = vmax.f32 %v3746, 0.0
        %v3811 = vmax.f32 %v3747, 0.0
        %v3812 = vmax.f32 %v3748, 0.0
        %v3813 = vmax.f32 %v3749, 0.0
        %v3814 = vmax.f32 %v3750, 0.0
        %v3815 = vmax.f32 %v3751, 0.0
        %v3816 = vmax.f32 %v3752, 0.0
        %v3817 = vmax.f32 %v3753, 0.0
        %v3818 = vmax.f32 %v3754, 0.0
        %v3819 = vmax.f32 %v3755, 0.0
        %v3820 = vmax.f32 %v3756, 0.0
        %v3821 = vmax.f32 %v3757, 0.0
        %v3822 = vmax.f32 %v3758, 0.0
        %v3823 = vmax.f32 %v3759, 0.0
        %v3824 = vmax.f32 %v3760, 0.0
        %v3825 = vmax.f32 %v3761, 0.0
        %v3826 = vmax.f32 %v3762, 0.0
        %v3827 = vmax.f32 %v3763, 0.0
        %v3828 = vmax.f32 %v3764, 0.0
        %v3829 = vmax.f32 %v3765, 0.0
        %v3830 = vmax.f32 %v3766, 0.0
        %v3831 = vmax.f32 %v3767, 0.0
        %v3832 = vmax.f32 %v3768, 0.0
        %v3833 = vmax.f32 %v3769, 0.0
        %v3834 = vmax.f32 %v3770, 0.0
        %v3835 = vmax.f32 %v3771, 0.0
        %v3836 = vmax.f32 %v3772, 0.0
        %v3837 = vmax.f32 %v3773, 0.0
        %v3838 = vmax.f32 %v3774, 0.0
        %v3839 = vmax.f32 %v3775, 0.0
        %v3840 = vmax.f32 %v3776, 0.0
        %v3841 = vmax.f32 %v3777, 0.0
        %v3842 = vmax.f32 %v3778, 0.0
        %v3843 = vmax.f32 %v3779, 0.0
        %v3844 = vmax.f32 %v3780, 0.0
        %v3845 = vmax.f32 %v3781, 0.0
        %v3846 = vmax.f32 %v3782, 0.0
        %v3847 = vmax.f32 %v3783, 0.0
        %v3848 = vmax.f32 %v3784, 0.0
        %v3849 = vmax.f32 %v3785, 0.0
        %v3850 = vmax.f32 %v3786, 0.0
        %v3851 = vmax.f32 %v3787, 0.0
        %v3852 = vmax.f32 %v3788, 0.0
        %v3853 = vmax.f32 %v3789, 0.0
        %v3854 = vmax.f32 %v3790, 0.0
        %v3855 = vmax.f32 %v3791, 0.0
        %v3856 = vmax.f32 %v3792, 0.0
        %v3857 = vmax.f32 %v3793, 0.0
        %v3858 = vmax.f32 %v3794, 0.0
        %v3859 = vmax.f32 %v3795, 0.0
        %v3860 = vmax.f32 %v3796, 0.0
        %v3861 = vmax.f32 %v3797, 0.0
        %v3862 = vmax.f32 %v3798, 0.0
        %v3863 = vmax.f32 %v3799, 0.0
        %v3864 = vmax.f32 %v3800, 0.0
        %v3865 = vmax.f32 %v3801, %v3805
        %v3866 = vmax.f32 %v3803, %v3807
        %v3867 = vmax.f32 %v3865, %v3809
        %v3868 = vmax.f32 %v3866, %v3811
        %v3869 = vmax.f32 %v3867, %v3813
        %v3870 = vmax.f32 %v3868, %v3815
        %v3871 = vmax.f32 %v3869, %v3817
        %v3872 = vmax.f32 %v3870, %v3819
        %v3873 = vmax.f32 %v3871, %v3821
        %v3874 = vmax.f32 %v3872, %v3823
        %v3875 = vmax.f32 %v3873, %v3825
        %v3876 = vmax.f32 %v3874, %v3827
        %v3877 = vmax.f32 %v3875, %v3829
        %v3878 = vmax.f32 %v3876, %v3831
        %v3879 = vmax.f32 %v3877, %v3833
        %v3880 = vmax.f32 %v3878, %v3835
        %v3881 = vmax.f32 %v3879, %v3837
        %v3882 = vmax.f32 %v3880, %v3839
        %v3883 = vmax.f32 %v3881, %v3841
        %v3884 = vmax.f32 %v3882, %v3843
        %v3885 = vmax.f32 %v3883, %v3845
        %v3886 = vmax.f32 %v3884, %v3847
        %v3887 = vmax.f32 %v3885, %v3849
        %v3888 = vmax.f32 %v3886, %v3851
        %v3889 = vmax.f32 %v3887, %v3853
        %v3890 = vmax.f32 %v3888, %v3855
        %v3891 = vmax.f32 %v3889, %v3857
        %v3892 = vmax.f32 %v3890, %v3859
        %v3893 = vmax.f32 %v3891, %v3861
        %v3894 = vmax.f32 %v3892, %v3863
        %v3895 = vmax.f32 %v3893, %v3894
        %v3896 = vrot.slane %v3895, 4
        %v3897 = vmax.f32 %v3895, %v3896
        %v3898 = vrot.slane %v3897, 2
        %v3899 = vmax.f32 %v3897, %v3898
        %v3900 = vrot.slane %v3899, 1
        %v3901 = vmax.f32 %v3899, %v3900
        %v3902 = vmax.f32 %v3802, %v3806
        %v3903 = vmax.f32 %v3804, %v3808
        %v3904 = vmax.f32 %v3902, %v3810
        %v3905 = vmax.f32 %v3903, %v3812
        %v3906 = vmax.f32 %v3904, %v3814
        %v3907 = vmax.f32 %v3905, %v3816
        %v3908 = vmax.f32 %v3906, %v3818
        %v3909 = vmax.f32 %v3907, %v3820
        %v3910 = vmax.f32 %v3908, %v3822
        %v3911 = vmax.f32 %v3909, %v3824
        %v3912 = vmax.f32 %v3910, %v3826
        %v3913 = vmax.f32 %v3911, %v3828
        %v3914 = vmax.f32 %v3912, %v3830
        %v3915 = vmax.f32 %v3913, %v3832
        %v3916 = vmax.f32 %v3914, %v3834
        %v3917 = vmax.f32 %v3915, %v3836
        %v3918 = vmax.f32 %v3916, %v3838
        %v3919 = vmax.f32 %v3917, %v3840
        %v3920 = vmax.f32 %v3918, %v3842
        %v3921 = vmax.f32 %v3919, %v3844
        %v3922 = vmax.f32 %v3920, %v3846
        %v3923 = vmax.f32 %v3921, %v3848
        %v3924 = vmax.f32 %v3922, %v3850
        %v3925 = vmax.f32 %v3923, %v3852
        %v3926 = vmax.f32 %v3924, %v3854
        %v3927 = vmax.f32 %v3925, %v3856
        %v3928 = vmax.f32 %v3926, %v3858
        %v3929 = vmax.f32 %v3927, %v3860
        %v3930 = vmax.f32 %v3928, %v3862
        %v3931 = vmax.f32 %v3929, %v3864
        %v3932 = vmax.f32 %v3930, %v3931
        %v3933 = vrot.slane %v3932, 4
        %v3934 = vmax.f32 %v3932, %v3933
        %v3935 = vrot.slane %v3934, 2
        %v3936 = vmax.f32 %v3934, %v3935
        %v3937 = vrot.slane %v3936, 1
        %v3938 = vmax.f32 %v3936, %v3937
        %p3939 = scmp.eq.s32.totalorder %s30, 0
        // Predicated region
        $region61: #{tpu_custom_call.1} parent=43 // pred_check
          %p3940 = pneg %p3939
        $region62: #{tpu_custom_call.1} parent=43 // pred_check_branch
          %3942 = sbr.rel (%p3940) target = $region64
        $region63: #{tpu_custom_call.1} parent=43 // pred_region
          %v3943 = vlaneseq
          %vm3944 = vcmp.ge.s32.totalorder %v3943, 0
          %vm3945 = vcmp.lt.s32.totalorder %v3943, 256
          %vm3946 = vmand %vm3944, %vm3945
          %3947 = vst.msk [vmem:[#allocation2] sm:$0x3] %vm3946, -inf
        $region64: #{tpu_custom_call.1} parent=43 // pred_fallthru
          _
        %v3948 = vld [vmem:[#allocation2] sm:$0x3]
        %v3951 = vcombine.low %v3901, %v3938
        %v3953 = vunpack.c.l.s4 1966171168
        %v3954 = vunpack.c.0.s8 %v3953
        %v3955 = vlaneseq
        %v3956 = vshrl.u32 %v3955, 7
        %v3957 = vsub.s32 %v3954, %v3956
        %v3958 = vrot.slane %v3951, %v3957
        %v3960 = vunpack.c.l.s4 1966171168
        %v3961 = vunpack.c.0.s8 %v3960
        %v3962 = vlaneseq
        %v3963 = vshrl.u32 %v3962, 7
        %v3964 = vsub.s32 %v3961, %v3963
        %v3965 = vrot.slane %v3958, %v3964
        %v3967 = vmax.f32 %v3948, %v3965
        %v3968 = vlaneseq
        %vm3969 = vcmp.ge.s32.totalorder %v3968, 0
        %vm3970 = vcmp.lt.s32.totalorder %v3968, 256
        %vm3971 = vmand %vm3969, %vm3970
        %3972 = vst.msk [vmem:[#allocation2] sm:$0x3] %vm3971, %v3967
        // Predicated region
        $region65: #{tpu_custom_call.1} parent=43 // pred_check
          %p3973 = pneg %p3939
        $region66: #{tpu_custom_call.1} parent=43 // pred_check_branch
          %3975 = sbr.rel (%p3973) target = $region68
        $region67: #{tpu_custom_call.1} parent=43 // pred_region
          %v3976 = vld [vmem:[#allocation2] sm:$0x3]
          %v3978 = vlaneseq
          %v3979 = vshrl.u32 %v3978, 7
          %v3980 = vsub.s32 0, %v3979
          %v3981 = vrot.slane %v3976, %v3980
          %v3982 = vlaneseq
          %v3983 = vshrl.u32 %v3982, 7
          %v3984 = vsub.s32 1, %v3983
          %v3985 = vrot.slane %v3976, %v3984
          %v3988 = vpack.c.bf16 %v3981, %v3981
          %v3989 = vpack.c.bf16 %v3985, %v3985
          %v3990 = vld [vmem:[#allocation9] sm:$0xff]
          %v3991 = vld [vmem:[#allocation9 + $0x8] sm:$0xff]
          %v3992 = vld [vmem:[#allocation9 + $0x10] sm:$0xff]
          %v3993 = vld [vmem:[#allocation9 + $0x18] sm:$0xff]
          %v3994 = vld [vmem:[#allocation9 + $0x20] sm:$0xff]
          %v3995 = vld [vmem:[#allocation9 + $0x28] sm:$0xff]
          %v3996 = vld [vmem:[#allocation9 + $0x30] sm:$0xff]
          %v3997 = vld [vmem:[#allocation9 + $0x38] sm:$0xff]
          %v3998 = vld [vmem:[#allocation9 + $0x40] sm:$0xff]
          %v3999 = vld [vmem:[#allocation9 + $0x48] sm:$0xff]
          %v4000 = vld [vmem:[#allocation9 + $0x50] sm:$0xff]
          %v4001 = vld [vmem:[#allocation9 + $0x58] sm:$0xff]
          %v4002 = vld [vmem:[#allocation9 + $0x60] sm:$0xff]
          %v4003 = vld [vmem:[#allocation9 + $0x68] sm:$0xff]
          %v4004 = vld [vmem:[#allocation9 + $0x70] sm:$0xff]
          %v4005 = vld [vmem:[#allocation9 + $0x78] sm:$0xff]
          %v4006 = vld [vmem:[#allocation9 + $0x80] sm:$0xff]
          %v4007 = vld [vmem:[#allocation9 + $0x88] sm:$0xff]
          %v4008 = vld [vmem:[#allocation9 + $0x90] sm:$0xff]
          %v4009 = vld [vmem:[#allocation9 + $0x98] sm:$0xff]
          %v4010 = vld [vmem:[#allocation9 + $0xa0] sm:$0xff]
          %v4011 = vld [vmem:[#allocation9 + $0xa8] sm:$0xff]
          %v4012 = vld [vmem:[#allocation9 + $0xb0] sm:$0xff]
          %v4013 = vld [vmem:[#allocation9 + $0xb8] sm:$0xff]
          %v4014 = vld [vmem:[#allocation9 + $0xc0] sm:$0xff]
          %v4015 = vld [vmem:[#allocation9 + $0xc8] sm:$0xff]
          %v4016 = vld [vmem:[#allocation9 + $0xd0] sm:$0xff]
          %v4017 = vld [vmem:[#allocation9 + $0xd8] sm:$0xff]
          %v4018 = vld [vmem:[#allocation9 + $0xe0] sm:$0xff]
          %v4019 = vld [vmem:[#allocation9 + $0xe8] sm:$0xff]
          %v4020 = vld [vmem:[#allocation9 + $0xf0] sm:$0xff]
          %v4021 = vld [vmem:[#allocation9 + $0xf8] sm:$0xff]
          %s4022 = scalar_lea.vmem %s5, 2
          %v4023 = vld [vmem:[%s4022] ss:$4 sm:$0x3]
          %v4056 = vunpack.c.l.b16 %v3990
          %v4057 = vunpack.c.h.b16 %v3990
          %v4058 = vunpack.c.l.b16 %v3991
          %v4059 = vunpack.c.h.b16 %v3991
          %v4060 = vunpack.c.l.b16 %v3992
          %v4061 = vunpack.c.h.b16 %v3992
          %v4062 = vunpack.c.l.b16 %v3993
          %v4063 = vunpack.c.h.b16 %v3993
          %v4064 = vunpack.c.l.b16 %v3994
          %v4065 = vunpack.c.h.b16 %v3994
          %v4066 = vunpack.c.l.b16 %v3995
          %v4067 = vunpack.c.h.b16 %v3995
          %v4068 = vunpack.c.l.b16 %v3996
          %v4069 = vunpack.c.h.b16 %v3996
          %v4070 = vunpack.c.l.b16 %v3997
          %v4071 = vunpack.c.h.b16 %v3997
          %v4072 = vunpack.c.l.b16 %v3998
          %v4073 = vunpack.c.h.b16 %v3998
          %v4074 = vunpack.c.l.b16 %v3999
          %v4075 = vunpack.c.h.b16 %v3999
          %v4076 = vunpack.c.l.b16 %v4000
          %v4077 = vunpack.c.h.b16 %v4000
          %v4078 = vunpack.c.l.b16 %v4001
          %v4079 = vunpack.c.h.b16 %v4001
          %v4080 = vunpack.c.l.b16 %v4002
          %v4081 = vunpack.c.h.b16 %v4002
          %v4082 = vunpack.c.l.b16 %v4003
          %v4083 = vunpack.c.h.b16 %v4003
          %v4084 = vunpack.c.l.b16 %v4004
          %v4085 = vunpack.c.h.b16 %v4004
          %v4086 = vunpack.c.l.b16 %v4005
          %v4087 = vunpack.c.h.b16 %v4005
          %v4088 = vunpack.c.l.b16 %v4006
          %v4089 = vunpack.c.h.b16 %v4006
          %v4090 = vunpack.c.l.b16 %v4007
          %v4091 = vunpack.c.h.b16 %v4007
          %v4092 = vunpack.c.l.b16 %v4008
          %v4093 = vunpack.c.h.b16 %v4008
          %v4094 = vunpack.c.l.b16 %v4009
          %v4095 = vunpack.c.h.b16 %v4009
          %v4096 = vunpack.c.l.b16 %v4010
          %v4097 = vunpack.c.h.b16 %v4010
          %v4098 = vunpack.c.l.b16 %v4011
          %v4099 = vunpack.c.h.b16 %v4011
          %v4100 = vunpack.c.l.b16 %v4012
          %v4101 = vunpack.c.h.b16 %v4012
          %v4102 = vunpack.c.l.b16 %v4013
          %v4103 = vunpack.c.h.b16 %v4013
          %v4104 = vunpack.c.l.b16 %v4014
          %v4105 = vunpack.c.h.b16 %v4014
          %v4106 = vunpack.c.l.b16 %v4015
          %v4107 = vunpack.c.h.b16 %v4015
          %v4108 = vunpack.c.l.b16 %v4016
          %v4109 = vunpack.c.h.b16 %v4016
          %v4110 = vunpack.c.l.b16 %v4017
          %v4111 = vunpack.c.h.b16 %v4017
          %v4112 = vunpack.c.l.b16 %v4018
          %v4113 = vunpack.c.h.b16 %v4018
          %v4114 = vunpack.c.l.b16 %v4019
          %v4115 = vunpack.c.h.b16 %v4019
          %v4116 = vunpack.c.l.b16 %v4020
          %v4117 = vunpack.c.h.b16 %v4020
          %v4118 = vunpack.c.l.b16 %v4021
          %v4119 = vunpack.c.h.b16 %v4021
          %v4120 = vpack.c.b16 %v4058, %v4056
          %v4121 = vpack.c.b16 %v4059, %v4057
          %v4122 = vpack.c.b16 %v4062, %v4060
          %v4123 = vpack.c.b16 %v4063, %v4061
          %v4124 = vpack.c.b16 %v4066, %v4064
          %v4125 = vpack.c.b16 %v4067, %v4065
          %v4126 = vpack.c.b16 %v4070, %v4068
          %v4127 = vpack.c.b16 %v4071, %v4069
          %v4128 = vpack.c.b16 %v4074, %v4072
          %v4129 = vpack.c.b16 %v4075, %v4073
          %v4130 = vpack.c.b16 %v4078, %v4076
          %v4131 = vpack.c.b16 %v4079, %v4077
          %v4132 = vpack.c.b16 %v4082, %v4080
          %v4133 = vpack.c.b16 %v4083, %v4081
          %v4134 = vpack.c.b16 %v4086, %v4084
          %v4135 = vpack.c.b16 %v4087, %v4085
          %v4136 = vpack.c.b16 %v4090, %v4088
          %v4137 = vpack.c.b16 %v4091, %v4089
          %v4138 = vpack.c.b16 %v4094, %v4092
          %v4139 = vpack.c.b16 %v4095, %v4093
          %v4140 = vpack.c.b16 %v4098, %v4096
          %v4141 = vpack.c.b16 %v4099, %v4097
          %v4142 = vpack.c.b16 %v4102, %v4100
          %v4143 = vpack.c.b16 %v4103, %v4101
          %v4144 = vpack.c.b16 %v4106, %v4104
          %v4145 = vpack.c.b16 %v4107, %v4105
          %v4146 = vpack.c.b16 %v4110, %v4108
          %v4147 = vpack.c.b16 %v4111, %v4109
          %v4148 = vpack.c.b16 %v4114, %v4112
          %v4149 = vpack.c.b16 %v4115, %v4113
          %v4150 = vpack.c.b16 %v4118, %v4116
          %v4151 = vpack.c.b16 %v4119, %v4117
          %v4185 = vlaneseq
          %v4186 = vshrl.u32 %v4185, 7
          %v4187 = vsub.s32 0, %v4186
          %v4188 = vrot.slane %v4023, %v4187
          %v4189 = vlaneseq
          %v4190 = vshrl.u32 %v4189, 7
          %v4191 = vsub.s32 1, %v4190
          %v4192 = vrot.slane %v4023, %v4191
          %4195 = vmatprep.subr.bf16.mxu0 %v4121
          %4196 = vmatpush1.bf16.msra.mxu0 %v4120
          %4197 = vmatprep.subr.bf16.mxu0 %v4123
          %4198 = vmatpush1.bf16.msra.mxu0 %v4122
          %4199 = vmatprep.subr.bf16.mxu0 %v4125
          %4200 = vmatpush1.bf16.msra.mxu0 %v4124
          %4201 = vmatprep.subr.bf16.mxu0 %v4127
          %4202 = vmatpush1.bf16.msra.mxu0 %v4126
          %4203 = vmatprep.subr.bf16.mxu0 %v4129
          %4204 = vmatpush1.bf16.msra.mxu0 %v4128
          %4205 = vmatprep.subr.bf16.mxu0 %v4131
          %4206 = vmatpush1.bf16.msra.mxu0 %v4130
          %4207 = vmatprep.subr.bf16.mxu0 %v4133
          %4208 = vmatpush1.bf16.msra.mxu0 %v4132
          %4209 = vmatprep.subr.bf16.mxu0 %v4135
          %4210 = vmatpush1.bf16.msra.mxu0 %v4134
          %4211 = vmatprep.subr.bf16.mxu0 %v4137
          %4212 = vmatpush1.bf16.msra.mxu0 %v4136
          %4213 = vmatprep.subr.bf16.mxu0 %v4139
          %4214 = vmatpush1.bf16.msra.mxu0 %v4138
          %4215 = vmatprep.subr.bf16.mxu0 %v4141
          %4216 = vmatpush1.bf16.msra.mxu0 %v4140
          %4217 = vmatprep.subr.bf16.mxu0 %v4143
          %4218 = vmatpush1.bf16.msra.mxu0 %v4142
          %4219 = vmatprep.subr.bf16.mxu0 %v4145
          %4220 = vmatpush1.bf16.msra.mxu0 %v4144
          %4221 = vmatprep.subr.bf16.mxu0 %v4147
          %4222 = vmatpush1.bf16.msra.mxu0 %v4146
          %4223 = vmatprep.subr.bf16.mxu0 %v4149
          %4224 = vmatpush1.bf16.msra.mxu0 %v4148
          %4225 = vmatprep.subr.bf16.mxu0 %v4151
          %4226 = vmatpush1.bf16.msra.mxu0 %v4150
          %4227 = vmatprep.mubr.bf16.mxu0 %v3989
          %4228 = vmatmul.mubr.bf16.gmra.mrb[0].mxu0 %v3988
          %v4229 = vpop.f32.mrb[0].mxu0
          %v4230 = vadd.f32 %v4188, %v4229
          %v4231 = vpop.f32.mrb[0].mxu0
          %v4232 = vadd.f32 %v4192, %v4231
          %v4233 = vpop.f32.mrb[0].mxu0
          %v4234 = vpop.f32.mrb[0].mxu0
          %4235 = vdwg.mxu0
          %v4236 = vmax.f32 %v4230, 0.0
          %v4237 = vmax.f32 %v4232, 0.0
          %v4238 = vpack.c.bf16 %v4236, %v4236
          %v4239 = vpack.c.bf16 %v4237, %v4237
          %v4240 = vld [vmem:[%s4] sm:$0xf]
          %v4241 = vld [vmem:[%s4 + $0x4] sm:$0xf]
          %v4242 = vld [vmem:[%s4 + $0x8] sm:$0xf]
          %v4243 = vld [vmem:[%s4 + $0xc] sm:$0xf]
          %v4244 = vld [vmem:[%s4 + $0x10] sm:$0xf]
          %v4245 = vld [vmem:[%s4 + $0x14] sm:$0xf]
          %v4246 = vld [vmem:[%s4 + $0x18] sm:$0xf]
          %v4247 = vld [vmem:[%s4 + $0x1c] sm:$0xf]
          %v4248 = vld [vmem:[%s4 + $0x20] sm:$0xf]
          %v4249 = vld [vmem:[%s4 + $0x24] sm:$0xf]
          %v4250 = vld [vmem:[%s4 + $0x28] sm:$0xf]
          %v4251 = vld [vmem:[%s4 + $0x2c] sm:$0xf]
          %v4252 = vld [vmem:[%s4 + $0x30] sm:$0xf]
          %v4253 = vld [vmem:[%s4 + $0x34] sm:$0xf]
          %v4254 = vld [vmem:[%s4 + $0x38] sm:$0xf]
          %v4255 = vld [vmem:[%s4 + $0x3c] sm:$0xf]
          %v4256 = vld [vmem:[%s4 + $0x40] sm:$0xf]
          %v4257 = vld [vmem:[%s4 + $0x44] sm:$0xf]
          %v4258 = vld [vmem:[%s4 + $0x48] sm:$0xf]
          %v4259 = vld [vmem:[%s4 + $0x4c] sm:$0xf]
          %v4260 = vld [vmem:[%s4 + $0x50] sm:$0xf]
          %v4261 = vld [vmem:[%s4 + $0x54] sm:$0xf]
          %v4262 = vld [vmem:[%s4 + $0x58] sm:$0xf]
          %v4263 = vld [vmem:[%s4 + $0x5c] sm:$0xf]
          %v4264 = vld [vmem:[%s4 + $0x60] sm:$0xf]
          %v4265 = vld [vmem:[%s4 + $0x64] sm:$0xf]
          %v4266 = vld [vmem:[%s4 + $0x68] sm:$0xf]
          %v4267 = vld [vmem:[%s4 + $0x6c] sm:$0xf]
          %v4268 = vld [vmem:[%s4 + $0x70] sm:$0xf]
          %v4269 = vld [vmem:[%s4 + $0x74] sm:$0xf]
          %v4270 = vld [vmem:[%s4 + $0x78] sm:$0xf]
          %v4271 = vld [vmem:[%s4 + $0x7c] sm:$0xf]
          %v4272 = vld [vmem:[%s5 + $0x3] sm:$0x1]
          %v4305 = vunpack.c.l.b16 %v4240
          %v4306 = vunpack.c.l.b16 %v4241
          %v4307 = vunpack.c.l.b16 %v4242
          %v4308 = vunpack.c.l.b16 %v4243
          %v4309 = vunpack.c.l.b16 %v4244
          %v4310 = vunpack.c.l.b16 %v4245
          %v4311 = vunpack.c.l.b16 %v4246
          %v4312 = vunpack.c.l.b16 %v4247
          %v4313 = vunpack.c.l.b16 %v4248
          %v4314 = vunpack.c.l.b16 %v4249
          %v4315 = vunpack.c.l.b16 %v4250
          %v4316 = vunpack.c.l.b16 %v4251
          %v4317 = vunpack.c.l.b16 %v4252
          %v4318 = vunpack.c.l.b16 %v4253
          %v4319 = vunpack.c.l.b16 %v4254
          %v4320 = vunpack.c.l.b16 %v4255
          %v4321 = vunpack.c.l.b16 %v4256
          %v4322 = vunpack.c.l.b16 %v4257
          %v4323 = vunpack.c.l.b16 %v4258
          %v4324 = vunpack.c.l.b16 %v4259
          %v4325 = vunpack.c.l.b16 %v4260
          %v4326 = vunpack.c.l.b16 %v4261
          %v4327 = vunpack.c.l.b16 %v4262
          %v4328 = vunpack.c.l.b16 %v4263
          %v4329 = vunpack.c.l.b16 %v4264
          %v4330 = vunpack.c.l.b16 %v4265
          %v4331 = vunpack.c.l.b16 %v4266
          %v4332 = vunpack.c.l.b16 %v4267
          %v4333 = vunpack.c.l.b16 %v4268
          %v4334 = vunpack.c.l.b16 %v4269
          %v4335 = vunpack.c.l.b16 %v4270
          %v4336 = vunpack.c.l.b16 %v4271
          %v4337 = vpack.c.b16 %v4306, %v4305
          %v4338 = vpack.c.b16 %v4308, %v4307
          %v4339 = vpack.c.b16 %v4310, %v4309
          %v4340 = vpack.c.b16 %v4312, %v4311
          %v4341 = vpack.c.b16 %v4314, %v4313
          %v4342 = vpack.c.b16 %v4316, %v4315
          %v4343 = vpack.c.b16 %v4318, %v4317
          %v4344 = vpack.c.b16 %v4320, %v4319
          %v4345 = vpack.c.b16 %v4322, %v4321
          %v4346 = vpack.c.b16 %v4324, %v4323
          %v4347 = vpack.c.b16 %v4326, %v4325
          %v4348 = vpack.c.b16 %v4328, %v4327
          %v4349 = vpack.c.b16 %v4330, %v4329
          %v4350 = vpack.c.b16 %v4332, %v4331
          %v4351 = vpack.c.b16 %v4334, %v4333
          %v4352 = vpack.c.b16 %v4336, %v4335
          %4369 = vmatprep.subr.bf16.mxu0 0
          %4370 = vmatpush1.bf16.msra.mxu0 %v4337
          %4371 = vmatprep.subr.bf16.mxu0 0
          %4372 = vmatpush1.bf16.msra.mxu0 %v4338
          %4373 = vmatprep.subr.bf16.mxu0 0
          %4374 = vmatpush1.bf16.msra.mxu0 %v4339
          %4375 = vmatprep.subr.bf16.mxu0 0
          %4376 = vmatpush1.bf16.msra.mxu0 %v4340
          %4377 = vmatprep.subr.bf16.mxu0 0
          %4378 = vmatpush1.bf16.msra.mxu0 %v4341
          %4379 = vmatprep.subr.bf16.mxu0 0
          %4380 = vmatpush1.bf16.msra.mxu0 %v4342
          %4381 = vmatprep.subr.bf16.mxu0 0
          %4382 = vmatpush1.bf16.msra.mxu0 %v4343
          %4383 = vmatprep.subr.bf16.mxu0 0
          %4384 = vmatpush1.bf16.msra.mxu0 %v4344
          %4385 = vmatprep.subr.bf16.mxu0 0
          %4386 = vmatpush1.bf16.msra.mxu0 %v4345
          %4387 = vmatprep.subr.bf16.mxu0 0
          %4388 = vmatpush1.bf16.msra.mxu0 %v4346
          %4389 = vmatprep.subr.bf16.mxu0 0
          %4390 = vmatpush1.bf16.msra.mxu0 %v4347
          %4391 = vmatprep.subr.bf16.mxu0 0
          %4392 = vmatpush1.bf16.msra.mxu0 %v4348
          %4393 = vmatprep.subr.bf16.mxu0 0
          %4394 = vmatpush1.bf16.msra.mxu0 %v4349
          %4395 = vmatprep.subr.bf16.mxu0 0
          %4396 = vmatpush1.bf16.msra.mxu0 %v4350
          %4397 = vmatprep.subr.bf16.mxu0 0
          %4398 = vmatpush1.bf16.msra.mxu0 %v4351
          %4399 = vmatprep.subr.bf16.mxu0 0
          %4400 = vmatpush1.bf16.msra.mxu0 %v4352
          %4401 = vmatprep.mubr.bf16.mxu0 %v4239
          %4402 = vmatmul.mubr.bf16.gmra.mrb[0].mxu0 %v4238
          %v4403 = vpop.f32.mrb[0].mxu0
          %v4404 = vadd.f32 %v4272, %v4403
          %v4405 = vpop.f32.mrb[0].mxu0
          %v4406 = vpop.f32.mrb[0].mxu0
          %v4407 = vpop.f32.mrb[0].mxu0
          %4408 = vdwg.mxu0
          %vm4409 = vcmask 24576
          %4410 = vst.msk [vmem:[%s328] sm:$0x1] %vm4409, %v4404
        $region68: #{tpu_custom_call.1} parent=43 // pred_fallthru
          _
        %s4411 = sand.u32 %s178, 1
        %s4412 = scalar_lea.sflag [#allocation5], %s4411
        %s4413 = sand.u32 %s178, 1
        %s4414 = scalar_lea.vmem [#allocation11], %s4413
        // Predicated region
        $region69: #{tpu_custom_call.1} parent=43 // pred_check
          %p4415 = pneg %p188
        $region70: #{tpu_custom_call.1} parent=43 // pred_check_branch
          %4417 = sbr.rel (%p4415) target = $region72
        $region71: #{tpu_custom_call.1} parent=43 // pred_region
          %s4419 = ssub.s32 16, 16
          %4420 = vsyncadd %s4412, %s4419
          %s4421 = smul.addr %s29, 16
          %s4422 = scalar_lea.hbm %s6, %s4421
          %s4424 = sshll.u32 %s4414, 4
          %s4425 = int_to_ptr.vmem [resolvable:$true] %s4424
          %4427 = dma.vmem_to_hbm [thread:$0]  %s4425, 16, %s4422, %s4412
        $region72: #{tpu_custom_call.1} parent=43 // pred_fallthru
          _
      $region44: #{tpu_custom_call.1} parent=5 // pred_fallthru
        _
      %p4428 = scmp.le.s32.totalorder 2, %s20
      // Predicated region
      $region73: #{tpu_custom_call.1} parent=5 // pred_check
        %p4429 = pneg %p4428
      $region74: #{tpu_custom_call.1} parent=5 // pred_check_branch
        %4431 = sbr.rel (%p4429) target = $region76
      $region75: #{tpu_custom_call.1} parent=5 // pred_region
        %s4432 = ssub.s32 %s20, 2
        // Predicated region
        $region77: #{tpu_custom_call.1} parent=75 // pred_check
          %p4433 = pneg %p194
        $region78: #{tpu_custom_call.1} parent=75 // pred_check_branch
          %4435 = sbr.rel (%p4433) target = $region80
        $region79: #{tpu_custom_call.1} parent=75 // pred_region
          %s4436 = sand.u32 %s179, 1
          %s4437 = scalar_lea.sflag [#allocation5], %s4436
          %s4438 = sand.u32 %s179, 1
          %s4439 = scalar_lea.vmem [#allocation11], %s4438
          %4440 = dma.done %s4437, 16
        $region80: #{tpu_custom_call.1} parent=75 // pred_fallthru
          _
      $region76: #{tpu_custom_call.1} parent=5 // pred_fallthru
        _
    $region6: #{tpu_custom_call.1} parent=1 // loop_footer
      %s24 = sadd.s32 1, %s20
    $region7: #{tpu_custom_call.1} parent=1 // loop_footer_branch
      %19 = sbr.rel target = $region3
    $region8: #{tpu_custom_call.1} parent=1 // loop_exit
      _
    %4441 = vsyncpa [#allocation4], 1
    %s4442 = scalar_lea.sflag [#allocation4], 1
    %4443 = vsyncpa %s4442, 1
    %4444 = vsyncpa [#allocation7], 1
    %4445 = vsyncpa [#allocation10], 1
    %4446 = vsyncpa [#allocation5], 1
    %s4447 = scalar_lea.sflag [#allocation5], 1
    %4448 = vsyncpa %s4447, 1

</llo_original>
